<compile_context>
chip_gen: v7x
topology: tpu7x:2x2x1
jax: 0.10.0
libtpu: 0.0.40
codegen_flags: <defaults>
</compile_context>

<pallas_src>
import functools

import jax
import jax.numpy as jnp
from jax import lax
from jax.experimental import pallas as pl
from jax.experimental.pallas import tpu as pltpu

EPS = 1e-5
LANE = 128


def _round_up(x, m):
    return (x + m - 1) // m * m


# ---------------------------------------------------------------------------
# Pass 1: y1 = conv1_3x3(x) on the H x W interior, ys = shortcut conv1x1(x),
#         plus per-image BN partial sums for both.  All matmul operands bf16.
# ---------------------------------------------------------------------------
def _stage1_kernel(x_ref, w1_ref, ws_ref, y1_ref, ys_ref, st_ref, *, H, W, cin, cout):
    xf = x_ref[0]                                                    # (H+2, Wp, cin) bf16
    # Hoisted dx shift: pack the 3 W-shifted slabs into the contraction dim (K = 3*cin).
    xcat = jnp.concatenate([xf[:, dx:dx + W, :] for dx in range(3)], axis=-1)  # (H+2, W, 3cin)

    acc = jnp.zeros((H * W, cout), jnp.float32)
    for dy in range(3):                                              # 3 MXU pushes, K = 3*cin
        xs = xcat[dy:dy + H].reshape(H * W, 3 * cin)                 # leading-axis slice, bf16
        acc = acc + jnp.dot(xs, w1_ref[dy], preferred_element_type=jnp.float32)
    y1_ref[0] = acc.astype(jnp.bfloat16).reshape(H, W, cout)

    # Fused 1x1 shortcut: the (dy=1, dx=1) slab of xcat is exactly the interior of x.
    xc = xcat[1:1 + H, :, cin:2 * cin].reshape(H * W, cin)           # bf16, lane-aligned slice
    ys = jnp.dot(xc, ws_ref[...], preferred_element_type=jnp.float32)
    ys_ref[0] = ys.astype(jnp.bfloat16).reshape(H, W, cout)

    st_ref[0] = jnp.concatenate(
        [jnp.sum(acc, axis=0, keepdims=True),
         jnp.sum(acc * acc, axis=0, keepdims=True),
         jnp.sum(ys, axis=0, keepdims=True),
         jnp.sum(ys * ys, axis=0, keepdims=True)], axis=0)


# ---------------------------------------------------------------------------
# Pass 2: h = relu(bn1(y1)) (f32 affine, single bf16 downcast), y2 = conv2_3x3(h)
#         with an in-register zero halo, plus BN2 partial sums.
# ---------------------------------------------------------------------------
def _stage2_kernel(y1_ref, sc1_ref, sh1_ref, w2_ref, y2_ref, st_ref, *, H, W, cout):
    y1 = y1_ref[0].reshape(H * W, cout)                              # bf16
    h = jnp.maximum(y1.astype(jnp.float32) * sc1_ref[...] + sh1_ref[...], 0.0)
    h3 = h.astype(jnp.bfloat16).reshape(H, W, cout)                  # single downcast

    # Build the 3 dx-shifted slabs (with zero halo) packed into the contraction dim.
    zc = jnp.zeros((H, 1, cout), jnp.bfloat16)
    h_l = jnp.concatenate([zc, h3[:, :W - 1, :]], axis=1)            # h_pad[., j+0, .]
    h_r = jnp.concatenate([h3[:, 1:, :], zc], axis=1)                # h_pad[., j+2, .]
    core = jnp.concatenate([h_l, h3, h_r], axis=-1)                  # (H, W, 3*cout)
    zrow = jnp.zeros((1, W, 3 * cout), jnp.bfloat16)
    hcat = jnp.concatenate([zrow, core, zrow], axis=0)               # (H+2, W, 3*cout)

    acc = jnp.zeros((H * W, cout), jnp.float32)
    for dy in range(3):
        hs = hcat[dy:dy + H].reshape(H * W, 3 * cout)                # bf16, leading-axis slice
        acc = acc + jnp.dot(hs, w2_ref[dy], preferred_element_type=jnp.float32)
    y2_ref[0] = acc.astype(jnp.bfloat16).reshape(H, W, cout)

    st_ref[0] = jnp.concatenate(
        [jnp.sum(acc, axis=0, keepdims=True),
         jnp.sum(acc * acc, axis=0, keepdims=True)], axis=0)


# ---------------------------------------------------------------------------
# Pass 3: out = relu(bn2(y2) + bn_s(ys))  (purely elementwise, lane-dense)
# ---------------------------------------------------------------------------
def _stage3_kernel(y2_ref, ys_ref, sc2_ref, sh2_ref, scs_ref, shs_ref, out_ref):
    bn2 = y2_ref[0].astype(jnp.float32) * sc2_ref[...] + sh2_ref[...]
    bns = ys_ref[0].astype(jnp.float32) * scs_ref[...] + shs_ref[...]
    out_ref[0] = jnp.maximum(bn2 + bns, 0.0)


# ---------------------------------------------------------------------------
# Wrapper
# ---------------------------------------------------------------------------
def _affine_from_sums(s, q, gamma, beta, count):
    mean = s / count
    var = jnp.maximum(q / count - mean * mean, 0.0)   # clamp guards E[y^2]-mean^2 cancellation
    scale = gamma * lax.rsqrt(var + EPS)
    return scale, beta - mean * scale


@jax.jit
def first_res_block(x_nchw, params):
    N, Cin, H, W = x_nchw.shape
    Cout = params["w1"].shape[0]
    P = N * H * W
    cin_p, cout_p = _round_up(Cin, LANE), _round_up(Cout, LANE)
    Wp = _round_up(W + 2, 8)                           # sublane-friendly padded input width

    x = jnp.transpose(x_nchw, (0, 2, 3, 1))            # NHWC
    # 1-pixel zero halo for conv1 + lane padding; stored bf16 (MXU operand dtype).
    x_pad = jnp.pad(x, ((0, 0), (1, 1), (1, Wp - W - 1), (0, cin_p - Cin))).astype(jnp.bfloat16)

    def pack3(w, ip, op):                              # (O,I,3,3) -> (3, 3*ip, op) bf16
        O, I = w.shape[:2]
        wt = jnp.transpose(w.astype(jnp.float32), (2, 3, 1, 0))          # (dy, dx, I, O)
        wt = jnp.pad(wt, ((0, 0), (0, 0), (0, ip - I), (0, op - O)))
        return wt.reshape(3, 3 * ip, op).astype(jnp.bfloat16)            # rows = dx*ip + c

    w1 = pack3(params["w1"], cin_p, cout_p)
    w2 = pack3(params["w2"], cout_p, cout_p)
    ws = jnp.pad(params["ws"][:, :, 0, 0].T.astype(jnp.float32),
                 ((0, cin_p - Cin), (0, cout_p - Cout))).astype(jnp.bfloat16)

    def pvec(v):
        return jnp.pad(v.astype(jnp.float32), (0, cout_p - Cout)).reshape(1, cout_p)

    g1, b1 = pvec(params["g1"]), pvec(params["b1"])
    g2, b2 = pvec(params["g2"]), pvec(params["b2"])
    gs, bs = pvec(params["gs"]), pvec(params["bs"])

    # 32 MiB scoped VMEM is safe on all of v5e/v6e/v7x for whole-image blocks at these sizes;
    # v5e/v6e can raise this (and use larger tiles) once the H-tile path exists for v7x.
    cparams = pltpu.CompilerParams(dimension_semantics=("parallel",),
                                   vmem_limit_bytes=32 * 1024 * 1024)
    img_spec = pl.BlockSpec((1, H, W, cout_p), lambda n: (n, 0, 0, 0))
    vec_spec = pl.BlockSpec((1, cout_p), lambda n: (0, 0))

    # ---- pass 1: conv1 (interior only) + fused 1x1 shortcut + BN partial sums -------------
    y1v, ysv, st1 = pl.pallas_call(
        functools.partial(_stage1_kernel, H=H, W=W, cin=cin_p, cout=cout_p),
        grid=(N,),
        in_specs=[
            pl.BlockSpec((1, H + 2, Wp, cin_p), lambda n: (n, 0, 0, 0)),
            pl.BlockSpec((3, 3 * cin_p, cout_p), lambda n: (0, 0, 0)),
            pl.BlockSpec((cin_p, cout_p), lambda n: (0, 0)),
        ],
        out_specs=(
            img_spec,
            img_spec,
            pl.BlockSpec((1, 4, cout_p), lambda n: (n, 0, 0)),
        ),
        out_shape=(
            jax.ShapeDtypeStruct((N, H, W, cout_p), jnp.bfloat16),
            jax.ShapeDtypeStruct((N, H, W, cout_p), jnp.bfloat16),
            jax.ShapeDtypeStruct((N, 4, cout_p), jnp.float32),
        ),
        compiler_params=cparams,
    )(x_pad, w1, ws)

    t1 = jnp.sum(st1, axis=0)                                       # (4, cout_p) — tiny glue
    sc1, sh1 = _affine_from_sums(t1[0:1], t1[1:2], g1, b1, P)
    scs, shs = _affine_from_sums(t1[2:3], t1[3:4], gs, bs, P)

    # ---- pass 2: apply BN1 + ReLU and conv2 in one fused, pipelined pass -------------------
    y2v, st2 = pl.pallas_call(
        functools.partial(_stage2_kernel, H=H, W=W, cout=cout_p),
        grid=(N,),
        in_specs=[
            img_spec, vec_spec, vec_spec,
            pl.BlockSpec((3, 3 * cout_p, cout_p), lambda n: (0, 0, 0)),
        ],
        out_specs=(
            img_spec,
            pl.BlockSpec((1, 2, cout_p), lambda n: (n, 0, 0)),
        ),
        out_shape=(
            jax.ShapeDtypeStruct((N, H, W, cout_p), jnp.bfloat16),
            jax.ShapeDtypeStruct((N, 2, cout_p), jnp.float32),
        ),
        compiler_params=cparams,
    )(y1v, sc1, sh1, w2)

    t2 = jnp.sum(st2, axis=0)
    sc2, sh2 = _affine_from_sums(t2[0:1], t2[1:2], g2, b2, P)

    # ---- pass 3: out = relu(bn2(y2) + bn_s(ys)) --------------------------------------------
    out = pl.pallas_call(
        _stage3_kernel,
        grid=(N,),
        in_specs=[img_spec, img_spec, vec_spec, vec_spec, vec_spec, vec_spec],
        out_specs=img_spec,
        out_shape=jax.ShapeDtypeStruct((N, H, W, cout_p), jnp.float32),
        compiler_params=cparams,
    )(y2v, ysv, sc2, sh2, scs, shs)

    return jnp.transpose(out[..., :Cout], (0, 3, 1, 2))             # back to NCHW


# ---------------------------------------------------------------------------
# Pure-JAX reference (exact module semantics, f32)
# ---------------------------------------------------------------------------
def _ref_forward(x, params):
    def conv(x, w, pad):
        return jax.lax.conv_general_dilated(
            x, w, (1, 1), pad, dimension_numbers=("NCHW", "OIHW", "NCHW"))

    def bn(y, g, b):
        m = jnp.mean(y, axis=(0, 2, 3), keepdims=True)
        v = jnp.mean((y - m) ** 2, axis=(0, 2, 3), keepdims=True)
        return (y - m) * jax.lax.rsqrt(v + EPS) * g.reshape(1, -1, 1, 1) + b.reshape(1, -1, 1, 1)

    out = jax.nn.relu(bn(conv(x, params["w1"], [(1, 1), (1, 1)]), params["g1"], params["b1"]))
    out = bn(conv(out, params["w2"], [(1, 1), (1, 1)]), params["g2"], params["b2"])
    sc = bn(conv(x, params["ws"], [(0, 0), (0, 0)]), params["gs"], params["bs"])
    return jax.nn.relu(out + sc)


# ---------------------------------------------------------------------------
if __name__ == "__main__":
    key = jax.random.PRNGKey(0)
    N, in_planes, planes, H, W = 2, 4, 8, 16, 16

    keys = jax.random.split(key, 10)
    x = jax.random.normal(keys[0], (N, in_planes, H, W), jnp.float32)
    params = {
        "w1": 0.1 * jax.random.normal(keys[1], (planes, in_planes, 3, 3), jnp.float32),
        "w2": 0.1 * jax.random.normal(keys[2], (planes, planes, 3, 3), jnp.float32),
        "ws": 0.1 * jax.random.normal(keys[3], (planes, in_planes, 1, 1), jnp.float32),
        "g1": jax.random.uniform(keys[4], (planes,), jnp.float32, 0.5, 1.5),
        "b1": 0.1 * jax.random.normal(keys[5], (planes,), jnp.float32),
        "g2": jax.random.uniform(keys[6], (planes,), jnp.float32, 0.5, 1.5),
        "b2": 0.1 * jax.random.normal(keys[7], (planes,), jnp.float32),
        "gs": jax.random.uniform(keys[8], (planes,), jnp.float32, 0.5, 1.5),
        "bs": 0.1 * jax.random.normal(keys[9], (planes,), jnp.float32),
    }

    out = jax.block_until_ready(first_res_block(x, params))
    ref = jax.block_until_ready(_ref_forward(x, params))

    assert out.shape == (N, planes, H, W), out.shape
    max_err = float(jnp.max(jnp.abs(out - ref)))
    # bf16 MXU operands + bf16 inter-pass intermediates -> looser tolerance than pure-f32
    assert jnp.allclose(out, ref, rtol=5e-2, atol=5e-2), max_err
    print("KERNEL_OK")
</pallas_src>

<mosaic_0001>
module attributes {stable_mosaic.version = 11 : i64} {
  func.func @_stage1_kernel(%arg0: i32, %arg1: memref<1x18x24x128xbf16, #tpu.memory_space<vmem>>, %arg2: memref<3x384x128xbf16, #tpu.memory_space<vmem>>, %arg3: memref<128x128xbf16, #tpu.memory_space<vmem>>, %arg4: memref<1x16x16x128xbf16, #tpu.memory_space<vmem>>, %arg5: memref<1x16x16x128xbf16, #tpu.memory_space<vmem>>, %arg6: memref<1x4x128xf32, #tpu.memory_space<vmem>>) attributes {dimension_semantics = [#tpu.dimension_semantics<parallel>], iteration_bounds = array<i64: 2>, scalar_prefetch = 0 : i64, scratch_operands = 0 : i64, tpu.core_type = #tpu.core_type<tc>, window_params = [{transform_indices = @transform_0, window_bounds = array<i64: 1, 18, 24, 128>}, {pipeline_mode = #tpu.pipeline_mode<synchronous>, transform_indices = @transform_1, window_bounds = array<i64: 3, 384, 128>}, {pipeline_mode = #tpu.pipeline_mode<synchronous>, transform_indices = @transform_2, window_bounds = array<i64: 128, 128>}, {transform_indices = @transform_3, window_bounds = array<i64: 1, 16, 16, 128>}, {transform_indices = @transform_4, window_bounds = array<i64: 1, 16, 16, 128>}, {transform_indices = @transform_5, window_bounds = array<i64: 1, 4, 128>}]} {
    %c0 = arith.constant 0 : index
    %c0_0 = arith.constant 0 : index
    %c0_1 = arith.constant 0 : index
    %c0_2 = arith.constant 0 : index
    %0 = vector.load %arg1[%c0, %c0_0, %c0_1, %c0_2] : memref<1x18x24x128xbf16, #tpu.memory_space<vmem>>, vector<1x18x24x128xbf16>
    %1 = vector.shape_cast %0 : vector<1x18x24x128xbf16> to vector<18x24x128xbf16>
    %2 = vector.extract_strided_slice %1 {offsets = [0, 0, 0], sizes = [18, 16, 128], strides = [1, 1, 1]} : vector<18x24x128xbf16> to vector<18x16x128xbf16>
    %3 = vector.extract_strided_slice %1 {offsets = [0, 1, 0], sizes = [18, 16, 128], strides = [1, 1, 1]} : vector<18x24x128xbf16> to vector<18x16x128xbf16>
    %4 = vector.extract_strided_slice %1 {offsets = [0, 2, 0], sizes = [18, 16, 128], strides = [1, 1, 1]} : vector<18x24x128xbf16> to vector<18x16x128xbf16>
    %5 = tpu.concatenate %2, %3, %4 in 2 : vector<18x16x128xbf16>, vector<18x16x128xbf16>, vector<18x16x128xbf16> -> vector<18x16x384xbf16>
    %cst = arith.constant 0.000000e+00 : f32
    %6 = vector.broadcast %cst : f32 to vector<256x128xf32>
    %7 = vector.extract_strided_slice %5 {offsets = [0, 0, 0], sizes = [16, 16, 384], strides = [1, 1, 1]} : vector<18x16x384xbf16> to vector<16x16x384xbf16>
    %8 = vector.shape_cast %7 : vector<16x16x384xbf16> to vector<256x384xbf16>
    %c0_3 = arith.constant 0 : index
    %c0_4 = arith.constant 0 : index
    %c0_5 = arith.constant 0 : index
    %9 = vector.load %arg2[%c0_3, %c0_4, %c0_5] : memref<3x384x128xbf16, #tpu.memory_space<vmem>>, vector<1x384x128xbf16>
    %10 = vector.shape_cast %9 : vector<1x384x128xbf16> to vector<384x128xbf16>
    %cst_6 = arith.constant dense<0.000000e+00> : vector<256x128xf32>
    %11 = tpu.matmul %8, %10, %cst_6 {dimension_numbers = #tpu.dot_dimension_numbers<[1], [0], [0], [1], [0, 0, 1, 1], [], []>} : vector<256x384xbf16>, vector<384x128xbf16>, vector<256x128xf32> -> vector<256x128xf32>
    %12 = arith.addf %6, %11 : vector<256x128xf32>
    %13 = vector.extract_strided_slice %5 {offsets = [1, 0, 0], sizes = [16, 16, 384], strides = [1, 1, 1]} : vector<18x16x384xbf16> to vector<16x16x384xbf16>
    %14 = vector.shape_cast %13 : vector<16x16x384xbf16> to vector<256x384xbf16>
    %c1 = arith.constant 1 : index
    %c0_7 = arith.constant 0 : index
    %c0_8 = arith.constant 0 : index
    %15 = vector.load %arg2[%c1, %c0_7, %c0_8] : memref<3x384x128xbf16, #tpu.memory_space<vmem>>, vector<1x384x128xbf16>
    %16 = vector.shape_cast %15 : vector<1x384x128xbf16> to vector<384x128xbf16>
    %cst_9 = arith.constant dense<0.000000e+00> : vector<256x128xf32>
    %17 = tpu.matmul %14, %16, %cst_9 {dimension_numbers = #tpu.dot_dimension_numbers<[1], [0], [0], [1], [0, 0, 1, 1], [], []>} : vector<256x384xbf16>, vector<384x128xbf16>, vector<256x128xf32> -> vector<256x128xf32>
    %18 = arith.addf %12, %17 : vector<256x128xf32>
    %19 = vector.extract_strided_slice %5 {offsets = [2, 0, 0], sizes = [16, 16, 384], strides = [1, 1, 1]} : vector<18x16x384xbf16> to vector<16x16x384xbf16>
    %20 = vector.shape_cast %19 : vector<16x16x384xbf16> to vector<256x384xbf16>
    %c2 = arith.constant 2 : index
    %c0_10 = arith.constant 0 : index
    %c0_11 = arith.constant 0 : index
    %21 = vector.load %arg2[%c2, %c0_10, %c0_11] : memref<3x384x128xbf16, #tpu.memory_space<vmem>>, vector<1x384x128xbf16>
    %22 = vector.shape_cast %21 : vector<1x384x128xbf16> to vector<384x128xbf16>
    %cst_12 = arith.constant dense<0.000000e+00> : vector<256x128xf32>
    %23 = tpu.matmul %20, %22, %cst_12 {dimension_numbers = #tpu.dot_dimension_numbers<[1], [0], [0], [1], [0, 0, 1, 1], [], []>} : vector<256x384xbf16>, vector<384x128xbf16>, vector<256x128xf32> -> vector<256x128xf32>
    %24 = arith.addf %18, %23 : vector<256x128xf32>
    %25 = arith.truncf %24 : vector<256x128xf32> to vector<256x128xbf16>
    %26 = vector.shape_cast %25 : vector<256x128xbf16> to vector<16x16x128xbf16>
    %c0_13 = arith.constant 0 : index
    %c0_14 = arith.constant 0 : index
    %c0_15 = arith.constant 0 : index
    %c0_16 = arith.constant 0 : index
    %27 = vector.load %arg4[%c0_13, %c0_14, %c0_15, %c0_16] : memref<1x16x16x128xbf16, #tpu.memory_space<vmem>>, vector<1x16x16x128xbf16>
    %28 = vector.shape_cast %27 : vector<1x16x16x128xbf16> to vector<16x16x128xbf16>
    %29 = vector.shape_cast %26 : vector<16x16x128xbf16> to vector<1x16x16x128xbf16>
    tpu.vector_store %arg4[%c0_13, %c0_14, %c0_15, %c0_16], %29 {strides = array<i32>} : memref<1x16x16x128xbf16, #tpu.memory_space<vmem>>, vector<1x16x16x128xbf16>,
    %30 = vector.extract_strided_slice %5 {offsets = [1, 0, 128], sizes = [16, 16, 128], strides = [1, 1, 1]} : vector<18x16x384xbf16> to vector<16x16x128xbf16>
    %31 = vector.shape_cast %30 : vector<16x16x128xbf16> to vector<256x128xbf16>
    %c0_17 = arith.constant 0 : index
    %c0_18 = arith.constant 0 : index
    %32 = vector.load %arg3[%c0_17, %c0_18] : memref<128x128xbf16, #tpu.memory_space<vmem>>, vector<128x128xbf16>
    %cst_19 = arith.constant dense<0.000000e+00> : vector<256x128xf32>
    %33 = tpu.matmul %31, %32, %cst_19 {dimension_numbers = #tpu.dot_dimension_numbers<[1], [0], [0], [1], [0, 0, 1, 1], [], []>} : vector<256x128xbf16>, vector<128x128xbf16>, vector<256x128xf32> -> vector<256x128xf32>
    %34 = arith.truncf %33 : vector<256x128xf32> to vector<256x128xbf16>
    %35 = vector.shape_cast %34 : vector<256x128xbf16> to vector<16x16x128xbf16>
    %c0_20 = arith.constant 0 : index
    %c0_21 = arith.constant 0 : index
    %c0_22 = arith.constant 0 : index
    %c0_23 = arith.constant 0 : index
    %36 = vector.load %arg5[%c0_20, %c0_21, %c0_22, %c0_23] : memref<1x16x16x128xbf16, #tpu.memory_space<vmem>>, vector<1x16x16x128xbf16>
    %37 = vector.shape_cast %36 : vector<1x16x16x128xbf16> to vector<16x16x128xbf16>
    %38 = vector.shape_cast %35 : vector<16x16x128xbf16> to vector<1x16x16x128xbf16>
    tpu.vector_store %arg5[%c0_20, %c0_21, %c0_22, %c0_23], %38 {strides = array<i32>} : memref<1x16x16x128xbf16, #tpu.memory_space<vmem>>, vector<1x16x16x128xbf16>,
    %cst_24 = arith.constant dense<0.000000e+00> : vector<128xf32>
    %39 = vector.multi_reduction <add>, %24, %cst_24 [0] : vector<256x128xf32> to vector<128xf32>
    %40 = vector.shape_cast %39 : vector<128xf32> to vector<1x128xf32>
    %41 = arith.mulf %24, %24 : vector<256x128xf32>
    %cst_25 = arith.constant dense<0.000000e+00> : vector<128xf32>
    %42 = vector.multi_reduction <add>, %41, %cst_25 [0] : vector<256x128xf32> to vector<128xf32>
    %43 = vector.shape_cast %42 : vector<128xf32> to vector<1x128xf32>
    %cst_26 = arith.constant dense<0.000000e+00> : vector<128xf32>
    %44 = vector.multi_reduction <add>, %33, %cst_26 [0] : vector<256x128xf32> to vector<128xf32>
    %45 = vector.shape_cast %44 : vector<128xf32> to vector<1x128xf32>
    %46 = arith.mulf %33, %33 : vector<256x128xf32>
    %cst_27 = arith.constant dense<0.000000e+00> : vector<128xf32>
    %47 = vector.multi_reduction <add>, %46, %cst_27 [0] : vector<256x128xf32> to vector<128xf32>
    %48 = vector.shape_cast %47 : vector<128xf32> to vector<1x128xf32>
    %49 = tpu.concatenate %40, %43, %45, %48 in 0 : vector<1x128xf32>, vector<1x128xf32>, vector<1x128xf32>, vector<1x128xf32> -> vector<4x128xf32>
    %c0_28 = arith.constant 0 : index
    %c0_29 = arith.constant 0 : index
    %c0_30 = arith.constant 0 : index
    %50 = vector.load %arg6[%c0_28, %c0_29, %c0_30] : memref<1x4x128xf32, #tpu.memory_space<vmem>>, vector<1x4x128xf32>
    %51 = vector.shape_cast %50 : vector<1x4x128xf32> to vector<4x128xf32>
    %52 = vector.shape_cast %49 : vector<4x128xf32> to vector<1x4x128xf32>
    tpu.vector_store %arg6[%c0_28, %c0_29, %c0_30], %52 {strides = array<i32>} : memref<1x4x128xf32, #tpu.memory_space<vmem>>, vector<1x4x128xf32>,
    return
  }
  func.func @transform_0(%arg0: i32) -> (i32, i32, i32, i32) {
    %c0_i32 = arith.constant 0 : i32
    %c0_i32_0 = arith.constant 0 : i32
    %c0_i32_1 = arith.constant 0 : i32
    %c0_i32_2 = arith.constant 0 : i32
    return %arg0, %c0_i32, %c0_i32_0, %c0_i32_1 : i32, i32, i32, i32
  }
  func.func @transform_1(%arg0: i32) -> (i32, i32, i32) {
    %c0_i32 = arith.constant 0 : i32
    %c0_i32_0 = arith.constant 0 : i32
    %c0_i32_1 = arith.constant 0 : i32
    %c0_i32_2 = arith.constant 0 : i32
    return %c0_i32, %c0_i32_0, %c0_i32_1 : i32, i32, i32
  }
  func.func @transform_2(%arg0: i32) -> (i32, i32) {
    %c0_i32 = arith.constant 0 : i32
    %c0_i32_0 = arith.constant 0 : i32
    %c0_i32_1 = arith.constant 0 : i32
    return %c0_i32, %c0_i32_0 : i32, i32
  }
  func.func @transform_3(%arg0: i32) -> (i32, i32, i32, i32) {
    %c0_i32 = arith.constant 0 : i32
    %c0_i32_0 = arith.constant 0 : i32
    %c0_i32_1 = arith.constant 0 : i32
    %c0_i32_2 = arith.constant 0 : i32
    return %arg0, %c0_i32, %c0_i32_0, %c0_i32_1 : i32, i32, i32, i32
  }
  func.func @transform_4(%arg0: i32) -> (i32, i32, i32, i32) {
    %c0_i32 = arith.constant 0 : i32
    %c0_i32_0 = arith.constant 0 : i32
    %c0_i32_1 = arith.constant 0 : i32
    %c0_i32_2 = arith.constant 0 : i32
    return %arg0, %c0_i32, %c0_i32_0, %c0_i32_1 : i32, i32, i32, i32
  }
  func.func @transform_5(%arg0: i32) -> (i32, i32, i32) {
    %c0_i32 = arith.constant 0 : i32
    %c0_i32_0 = arith.constant 0 : i32
    %c0_i32_1 = arith.constant 0 : i32
    return %arg0, %c0_i32, %c0_i32_0 : i32, i32, i32
  }
}

module attributes {stable_mosaic.version = 11 : i64} {
  func.func @_stage3_kernel(%arg0: i32, %arg1: memref<1x16x16x128xbf16, #tpu.memory_space<vmem>>, %arg2: memref<1x16x16x128xbf16, #tpu.memory_space<vmem>>, %arg3: memref<1x128xf32, #tpu.memory_space<vmem>>, %arg4: memref<1x128xf32, #tpu.memory_space<vmem>>, %arg5: memref<1x128xf32, #tpu.memory_space<vmem>>, %arg6: memref<1x128xf32, #tpu.memory_space<vmem>>, %arg7: memref<1x16x16x128xf32, #tpu.memory_space<vmem>>) attributes {dimension_semantics = [#tpu.dimension_semantics<parallel>], iteration_bounds = array<i64: 2>, scalar_prefetch = 0 : i64, scratch_operands = 0 : i64, tpu.core_type = #tpu.core_type<tc>, window_params = [{transform_indices = @transform_0, window_bounds = array<i64: 1, 16, 16, 128>}, {transform_indices = @transform_1, window_bounds = array<i64: 1, 16, 16, 128>}, {pipeline_mode = #tpu.pipeline_mode<synchronous>, transform_indices = @transform_2, window_bounds = array<i64: 1, 128>}, {pipeline_mode = #tpu.pipeline_mode<synchronous>, transform_indices = @transform_3, window_bounds = array<i64: 1, 128>}, {pipeline_mode = #tpu.pipeline_mode<synchronous>, transform_indices = @transform_4, window_bounds = array<i64: 1, 128>}, {pipeline_mode = #tpu.pipeline_mode<synchronous>, transform_indices = @transform_5, window_bounds = array<i64: 1, 128>}, {transform_indices = @transform_6, window_bounds = array<i64: 1, 16, 16, 128>}]} {
    %c0 = arith.constant 0 : index
    %c0_0 = arith.constant 0 : index
    %c0_1 = arith.constant 0 : index
    %c0_2 = arith.constant 0 : index
    %0 = vector.load %arg1[%c0, %c0_0, %c0_1, %c0_2] : memref<1x16x16x128xbf16, #tpu.memory_space<vmem>>, vector<1x16x16x128xbf16>
    %1 = vector.shape_cast %0 : vector<1x16x16x128xbf16> to vector<16x16x128xbf16>
    %2 = arith.extf %1 : vector<16x16x128xbf16> to vector<16x16x128xf32>
    %c0_3 = arith.constant 0 : index
    %c0_4 = arith.constant 0 : index
    %3 = vector.load %arg3[%c0_3, %c0_4] : memref<1x128xf32, #tpu.memory_space<vmem>>, vector<1x128xf32>
    %4 = vector.shape_cast %3 : vector<1x128xf32> to vector<1x1x128xf32>
    %5 = vector.broadcast %4 : vector<1x1x128xf32> to vector<16x16x128xf32>
    %6 = arith.mulf %2, %5 : vector<16x16x128xf32>
    %c0_5 = arith.constant 0 : index
    %c0_6 = arith.constant 0 : index
    %7 = vector.load %arg4[%c0_5, %c0_6] : memref<1x128xf32, #tpu.memory_space<vmem>>, vector<1x128xf32>
    %8 = vector.shape_cast %7 : vector<1x128xf32> to vector<1x1x128xf32>
    %9 = vector.broadcast %8 : vector<1x1x128xf32> to vector<16x16x128xf32>
    %10 = arith.addf %6, %9 : vector<16x16x128xf32>
    %c0_7 = arith.constant 0 : index
    %c0_8 = arith.constant 0 : index
    %c0_9 = arith.constant 0 : index
    %c0_10 = arith.constant 0 : index
    %11 = vector.load %arg2[%c0_7, %c0_8, %c0_9, %c0_10] : memref<1x16x16x128xbf16, #tpu.memory_space<vmem>>, vector<1x16x16x128xbf16>
    %12 = vector.shape_cast %11 : vector<1x16x16x128xbf16> to vector<16x16x128xbf16>
    %13 = arith.extf %12 : vector<16x16x128xbf16> to vector<16x16x128xf32>
    %c0_11 = arith.constant 0 : index
    %c0_12 = arith.constant 0 : index
    %14 = vector.load %arg5[%c0_11, %c0_12] : memref<1x128xf32, #tpu.memory_space<vmem>>, vector<1x128xf32>
    %15 = vector.shape_cast %14 : vector<1x128xf32> to vector<1x1x128xf32>
    %16 = vector.broadcast %15 : vector<1x1x128xf32> to vector<16x16x128xf32>
    %17 = arith.mulf %13, %16 : vector<16x16x128xf32>
    %c0_13 = arith.constant 0 : index
    %c0_14 = arith.constant 0 : index
    %18 = vector.load %arg6[%c0_13, %c0_14] : memref<1x128xf32, #tpu.memory_space<vmem>>, vector<1x128xf32>
    %19 = vector.shape_cast %18 : vector<1x128xf32> to vector<1x1x128xf32>
    %20 = vector.broadcast %19 : vector<1x1x128xf32> to vector<16x16x128xf32>
    %21 = arith.addf %17, %20 : vector<16x16x128xf32>
    %22 = arith.addf %10, %21 : vector<16x16x128xf32>
    %cst = arith.constant 0.000000e+00 : f32
    %23 = vector.broadcast %cst : f32 to vector<16x16x128xf32>
    %24 = arith.maximumf %22, %23 : vector<16x16x128xf32>
    %c0_15 = arith.constant 0 : index
    %c0_16 = arith.constant 0 : index
    %c0_17 = arith.constant 0 : index
    %c0_18 = arith.constant 0 : index
    %25 = vector.load %arg7[%c0_15, %c0_16, %c0_17, %c0_18] : memref<1x16x16x128xf32, #tpu.memory_space<vmem>>, vector<1x16x16x128xf32>
    %26 = vector.shape_cast %25 : vector<1x16x16x128xf32> to vector<16x16x128xf32>
    %27 = vector.shape_cast %24 : vector<16x16x128xf32> to vector<1x16x16x128xf32>
    tpu.vector_store %arg7[%c0_15, %c0_16, %c0_17, %c0_18], %27 {strides = array<i32>} : memref<1x16x16x128xf32, #tpu.memory_space<vmem>>, vector<1x16x16x128xf32>,
    return
  }
  func.func @transform_0(%arg0: i32) -> (i32, i32, i32, i32) {
    %c0_i32 = arith.constant 0 : i32
    %c0_i32_0 = arith.constant 0 : i32
    %c0_i32_1 = arith.constant 0 : i32
    %c0_i32_2 = arith.constant 0 : i32
    return %arg0, %c0_i32, %c0_i32_0, %c0_i32_1 : i32, i32, i32, i32
  }
  func.func @transform_1(%arg0: i32) -> (i32, i32, i32, i32) {
    %c0_i32 = arith.constant 0 : i32
    %c0_i32_0 = arith.constant 0 : i32
    %c0_i32_1 = arith.constant 0 : i32
    %c0_i32_2 = arith.constant 0 : i32
    return %arg0, %c0_i32, %c0_i32_0, %c0_i32_1 : i32, i32, i32, i32
  }
  func.func @transform_2(%arg0: i32) -> (i32, i32) {
    %c0_i32 = arith.constant 0 : i32
    %c0_i32_0 = arith.constant 0 : i32
    %c0_i32_1 = arith.constant 0 : i32
    return %c0_i32, %c0_i32_0 : i32, i32
  }
  func.func @transform_3(%arg0: i32) -> (i32, i32) {
    %c0_i32 = arith.constant 0 : i32
    %c0_i32_0 = arith.constant 0 : i32
    %c0_i32_1 = arith.constant 0 : i32
    return %c0_i32, %c0_i32_0 : i32, i32
  }
  func.func @transform_4(%arg0: i32) -> (i32, i32) {
    %c0_i32 = arith.constant 0 : i32
    %c0_i32_0 = arith.constant 0 : i32
    %c0_i32_1 = arith.constant 0 : i32
    return %c0_i32, %c0_i32_0 : i32, i32
  }
  func.func @transform_5(%arg0: i32) -> (i32, i32) {
    %c0_i32 = arith.constant 0 : i32
    %c0_i32_0 = arith.constant 0 : i32
    %c0_i32_1 = arith.constant 0 : i32
    return %c0_i32, %c0_i32_0 : i32, i32
  }
  func.func @transform_6(%arg0: i32) -> (i32, i32, i32, i32) {
    %c0_i32 = arith.constant 0 : i32
    %c0_i32_0 = arith.constant 0 : i32
    %c0_i32_1 = arith.constant 0 : i32
    %c0_i32_2 = arith.constant 0 : i32
    return %arg0, %c0_i32, %c0_i32_0, %c0_i32_1 : i32, i32, i32, i32
  }
}

module attributes {stable_mosaic.version = 11 : i64} {
  func.func @_stage2_kernel(%arg0: i32, %arg1: memref<1x16x16x128xbf16, #tpu.memory_space<vmem>>, %arg2: memref<1x128xf32, #tpu.memory_space<vmem>>, %arg3: memref<1x128xf32, #tpu.memory_space<vmem>>, %arg4: memref<3x384x128xbf16, #tpu.memory_space<vmem>>, %arg5: memref<1x16x16x128xbf16, #tpu.memory_space<vmem>>, %arg6: memref<1x2x128xf32, #tpu.memory_space<vmem>>) attributes {dimension_semantics = [#tpu.dimension_semantics<parallel>], iteration_bounds = array<i64: 2>, scalar_prefetch = 0 : i64, scratch_operands = 0 : i64, tpu.core_type = #tpu.core_type<tc>, window_params = [{transform_indices = @transform_0, window_bounds = array<i64: 1, 16, 16, 128>}, {pipeline_mode = #tpu.pipeline_mode<synchronous>, transform_indices = @transform_1, window_bounds = array<i64: 1, 128>}, {pipeline_mode = #tpu.pipeline_mode<synchronous>, transform_indices = @transform_2, window_bounds = array<i64: 1, 128>}, {pipeline_mode = #tpu.pipeline_mode<synchronous>, transform_indices = @transform_3, window_bounds = array<i64: 3, 384, 128>}, {transform_indices = @transform_4, window_bounds = array<i64: 1, 16, 16, 128>}, {transform_indices = @transform_5, window_bounds = array<i64: 1, 2, 128>}]} {
    %c0 = arith.constant 0 : index
    %c0_0 = arith.constant 0 : index
    %c0_1 = arith.constant 0 : index
    %c0_2 = arith.constant 0 : index
    %0 = vector.load %arg1[%c0, %c0_0, %c0_1, %c0_2] : memref<1x16x16x128xbf16, #tpu.memory_space<vmem>>, vector<1x16x16x128xbf16>
    %1 = vector.shape_cast %0 : vector<1x16x16x128xbf16> to vector<16x16x128xbf16>
    %2 = vector.shape_cast %1 : vector<16x16x128xbf16> to vector<256x128xbf16>
    %3 = arith.extf %2 : vector<256x128xbf16> to vector<256x128xf32>
    %c0_3 = arith.constant 0 : index
    %c0_4 = arith.constant 0 : index
    %4 = vector.load %arg2[%c0_3, %c0_4] : memref<1x128xf32, #tpu.memory_space<vmem>>, vector<1x128xf32>
    %5 = vector.broadcast %4 : vector<1x128xf32> to vector<256x128xf32>
    %6 = arith.mulf %3, %5 : vector<256x128xf32>
    %c0_5 = arith.constant 0 : index
    %c0_6 = arith.constant 0 : index
    %7 = vector.load %arg3[%c0_5, %c0_6] : memref<1x128xf32, #tpu.memory_space<vmem>>, vector<1x128xf32>
    %8 = vector.broadcast %7 : vector<1x128xf32> to vector<256x128xf32>
    %9 = arith.addf %6, %8 : vector<256x128xf32>
    %cst = arith.constant 0.000000e+00 : f32
    %10 = vector.broadcast %cst : f32 to vector<256x128xf32>
    %11 = arith.maximumf %9, %10 : vector<256x128xf32>
    %12 = arith.truncf %11 : vector<256x128xf32> to vector<256x128xbf16>
    %13 = vector.shape_cast %12 : vector<256x128xbf16> to vector<16x16x128xbf16>
    %cst_7 = arith.constant 0.000000e+00 : bf16
    %14 = vector.broadcast %cst_7 : bf16 to vector<16x1x128xbf16>
    %15 = vector.extract_strided_slice %13 {offsets = [0, 0, 0], sizes = [16, 15, 128], strides = [1, 1, 1]} : vector<16x16x128xbf16> to vector<16x15x128xbf16>
    %16 = tpu.concatenate %14, %15 in 1 : vector<16x1x128xbf16>, vector<16x15x128xbf16> -> vector<16x16x128xbf16>
    %17 = vector.extract_strided_slice %13 {offsets = [0, 1, 0], sizes = [16, 15, 128], strides = [1, 1, 1]} : vector<16x16x128xbf16> to vector<16x15x128xbf16>
    %18 = tpu.concatenate %17, %14 in 1 : vector<16x15x128xbf16>, vector<16x1x128xbf16> -> vector<16x16x128xbf16>
    %19 = tpu.concatenate %16, %13, %18 in 2 : vector<16x16x128xbf16>, vector<16x16x128xbf16>, vector<16x16x128xbf16> -> vector<16x16x384xbf16>
    %cst_8 = arith.constant 0.000000e+00 : bf16
    %20 = vector.broadcast %cst_8 : bf16 to vector<1x16x384xbf16>
    %21 = tpu.concatenate %20, %19, %20 in 0 : vector<1x16x384xbf16>, vector<16x16x384xbf16>, vector<1x16x384xbf16> -> vector<18x16x384xbf16>
    %cst_9 = arith.constant 0.000000e+00 : f32
    %22 = vector.broadcast %cst_9 : f32 to vector<256x128xf32>
    %23 = vector.extract_strided_slice %21 {offsets = [0, 0, 0], sizes = [16, 16, 384], strides = [1, 1, 1]} : vector<18x16x384xbf16> to vector<16x16x384xbf16>
    %24 = vector.shape_cast %23 : vector<16x16x384xbf16> to vector<256x384xbf16>
    %c0_10 = arith.constant 0 : index
    %c0_11 = arith.constant 0 : index
    %c0_12 = arith.constant 0 : index
    %25 = vector.load %arg4[%c0_10, %c0_11, %c0_12] : memref<3x384x128xbf16, #tpu.memory_space<vmem>>, vector<1x384x128xbf16>
    %26 = vector.shape_cast %25 : vector<1x384x128xbf16> to vector<384x128xbf16>
    %cst_13 = arith.constant dense<0.000000e+00> : vector<256x128xf32>
    %27 = tpu.matmul %24, %26, %cst_13 {dimension_numbers = #tpu.dot_dimension_numbers<[1], [0], [0], [1], [0, 0, 1, 1], [], []>} : vector<256x384xbf16>, vector<384x128xbf16>, vector<256x128xf32> -> vector<256x128xf32>
    %28 = arith.addf %22, %27 : vector<256x128xf32>
    %29 = vector.extract_strided_slice %21 {offsets = [1, 0, 0], sizes = [16, 16, 384], strides = [1, 1, 1]} : vector<18x16x384xbf16> to vector<16x16x384xbf16>
    %30 = vector.shape_cast %29 : vector<16x16x384xbf16> to vector<256x384xbf16>
    %c1 = arith.constant 1 : index
    %c0_14 = arith.constant 0 : index
    %c0_15 = arith.constant 0 : index
    %31 = vector.load %arg4[%c1, %c0_14, %c0_15] : memref<3x384x128xbf16, #tpu.memory_space<vmem>>, vector<1x384x128xbf16>
    %32 = vector.shape_cast %31 : vector<1x384x128xbf16> to vector<384x128xbf16>
    %cst_16 = arith.constant dense<0.000000e+00> : vector<256x128xf32>
    %33 = tpu.matmul %30, %32, %cst_16 {dimension_numbers = #tpu.dot_dimension_numbers<[1], [0], [0], [1], [0, 0, 1, 1], [], []>} : vector<256x384xbf16>, vector<384x128xbf16>, vector<256x128xf32> -> vector<256x128xf32>
    %34 = arith.addf %28, %33 : vector<256x128xf32>
    %35 = vector.extract_strided_slice %21 {offsets = [2, 0, 0], sizes = [16, 16, 384], strides = [1, 1, 1]} : vector<18x16x384xbf16> to vector<16x16x384xbf16>
    %36 = vector.shape_cast %35 : vector<16x16x384xbf16> to vector<256x384xbf16>
    %c2 = arith.constant 2 : index
    %c0_17 = arith.constant 0 : index
    %c0_18 = arith.constant 0 : index
    %37 = vector.load %arg4[%c2, %c0_17, %c0_18] : memref<3x384x128xbf16, #tpu.memory_space<vmem>>, vector<1x384x128xbf16>
    %38 = vector.shape_cast %37 : vector<1x384x128xbf16> to vector<384x128xbf16>
    %cst_19 = arith.constant dense<0.000000e+00> : vector<256x128xf32>
    %39 = tpu.matmul %36, %38, %cst_19 {dimension_numbers = #tpu.dot_dimension_numbers<[1], [0], [0], [1], [0, 0, 1, 1], [], []>} : vector<256x384xbf16>, vector<384x128xbf16>, vector<256x128xf32> -> vector<256x128xf32>
    %40 = arith.addf %34, %39 : vector<256x128xf32>
    %41 = arith.truncf %40 : vector<256x128xf32> to vector<256x128xbf16>
    %42 = vector.shape_cast %41 : vector<256x128xbf16> to vector<16x16x128xbf16>
    %c0_20 = arith.constant 0 : index
    %c0_21 = arith.constant 0 : index
    %c0_22 = arith.constant 0 : index
    %c0_23 = arith.constant 0 : index
    %43 = vector.load %arg5[%c0_20, %c0_21, %c0_22, %c0_23] : memref<1x16x16x128xbf16, #tpu.memory_space<vmem>>, vector<1x16x16x128xbf16>
    %44 = vector.shape_cast %43 : vector<1x16x16x128xbf16> to vector<16x16x128xbf16>
    %45 = vector.shape_cast %42 : vector<16x16x128xbf16> to vector<1x16x16x128xbf16>
    tpu.vector_store %arg5[%c0_20, %c0_21, %c0_22, %c0_23], %45 {strides = array<i32>} : memref<1x16x16x128xbf16, #tpu.memory_space<vmem>>, vector<1x16x16x128xbf16>,
    %cst_24 = arith.constant dense<0.000000e+00> : vector<128xf32>
    %46 = vector.multi_reduction <add>, %40, %cst_24 [0] : vector<256x128xf32> to vector<128xf32>
    %47 = vector.shape_cast %46 : vector<128xf32> to vector<1x128xf32>
    %48 = arith.mulf %40, %40 : vector<256x128xf32>
    %cst_25 = arith.constant dense<0.000000e+00> : vector<128xf32>
    %49 = vector.multi_reduction <add>, %48, %cst_25 [0] : vector<256x128xf32> to vector<128xf32>
    %50 = vector.shape_cast %49 : vector<128xf32> to vector<1x128xf32>
    %51 = tpu.concatenate %47, %50 in 0 : vector<1x128xf32>, vector<1x128xf32> -> vector<2x128xf32>
    %c0_26 = arith.constant 0 : index
    %c0_27 = arith.constant 0 : index
    %c0_28 = arith.constant 0 : index
    %52 = vector.load %arg6[%c0_26, %c0_27, %c0_28] : memref<1x2x128xf32, #tpu.memory_space<vmem>>, vector<1x2x128xf32>
    %53 = vector.shape_cast %52 : vector<1x2x128xf32> to vector<2x128xf32>
    %54 = vector.shape_cast %51 : vector<2x128xf32> to vector<1x2x128xf32>
    tpu.vector_store %arg6[%c0_26, %c0_27, %c0_28], %54 {strides = array<i32>} : memref<1x2x128xf32, #tpu.memory_space<vmem>>, vector<1x2x128xf32>,
    return
  }
  func.func @transform_0(%arg0: i32) -> (i32, i32, i32, i32) {
    %c0_i32 = arith.constant 0 : i32
    %c0_i32_0 = arith.constant 0 : i32
    %c0_i32_1 = arith.constant 0 : i32
    %c0_i32_2 = arith.constant 0 : i32
    return %arg0, %c0_i32, %c0_i32_0, %c0_i32_1 : i32, i32, i32, i32
  }
  func.func @transform_1(%arg0: i32) -> (i32, i32) {
    %c0_i32 = arith.constant 0 : i32
    %c0_i32_0 = arith.constant 0 : i32
    %c0_i32_1 = arith.constant 0 : i32
    return %c0_i32, %c0_i32_0 : i32, i32
  }
  func.func @transform_2(%arg0: i32) -> (i32, i32) {
    %c0_i32 = arith.constant 0 : i32
    %c0_i32_0 = arith.constant 0 : i32
    %c0_i32_1 = arith.constant 0 : i32
    return %c0_i32, %c0_i32_0 : i32, i32
  }
  func.func @transform_3(%arg0: i32) -> (i32, i32, i32) {
    %c0_i32 = arith.constant 0 : i32
    %c0_i32_0 = arith.constant 0 : i32
    %c0_i32_1 = arith.constant 0 : i32
    %c0_i32_2 = arith.constant 0 : i32
    return %c0_i32, %c0_i32_0, %c0_i32_1 : i32, i32, i32
  }
  func.func @transform_4(%arg0: i32) -> (i32, i32, i32, i32) {
    %c0_i32 = arith.constant 0 : i32
    %c0_i32_0 = arith.constant 0 : i32
    %c0_i32_1 = arith.constant 0 : i32
    %c0_i32_2 = arith.constant 0 : i32
    return %arg0, %c0_i32, %c0_i32_0, %c0_i32_1 : i32, i32, i32, i32
  }
  func.func @transform_5(%arg0: i32) -> (i32, i32, i32) {
    %c0_i32 = arith.constant 0 : i32
    %c0_i32_0 = arith.constant 0 : i32
    %c0_i32_1 = arith.constant 0 : i32
    return %arg0, %c0_i32, %c0_i32_0 : i32, i32, i32
  }
}

</mosaic_0001>

<llo_original>
// kernel: first_res_block.5
$region0: #{first_res_block.5}
  #allocation0 [shape = 'u32[]', space=smem, size = 0x4, offset = 0x4, fixed_abs, tag = 'smem constant byte address 0x4 - core index']
  #allocation1 [shape = 'u32[144,128]{1,0:T(1,128)}', space=vmem, size = 0x12000, scoped, tag = 'internal scratch']
  %s0 = inlined_call_operand.vmem [shape: bf16[2,16,16,128], index: 0, kind: input, shape index: {}]
  %s1 = inlined_call_operand.vmem [shape: bf16[2,16,16,128], index: 1, kind: input, shape index: {}]
  %s2 = inlined_call_operand.vmem [shape: f32[1,128], index: 2, kind: input, shape index: {}]
  %s3 = inlined_call_operand.vmem [shape: f32[1,128], index: 3, kind: input, shape index: {}]
  %s4 = inlined_call_operand.vmem [shape: f32[1,128], index: 4, kind: input, shape index: {}]
  %s5 = inlined_call_operand.vmem [shape: f32[1,128], index: 5, kind: input, shape index: {}]
  %s6 = inlined_call_operand.vmem [shape: f32[2,16,16,128], index: 6, kind: output, shape index: {}]
  %s7 = sld [smem:[#allocation0]]
  $region57: #{first_res_block.5} parent=0
    _
  %s9 = ssub.s32 1, %s7
  %s10 = scalar_select 0, %s9, %s7
  loop: start=0, step=1, limit=4
  $region2: #{first_res_block.5} parent=0 // loop_pre_header
    _
  $region3: #{first_res_block.5} parent=0 // loop_header
    %s12 = sphi 0, %s16
    %p13 = scmp.ge.s32.totalorder %s12, 4
    %s22 = sphi 0, %s24
    %s25 = sphi 0, %s22
    %s26 = sphi 0, %s25
    %s42 = sphi 0, %s26
    %s48 = sphi 0, %s50
    %s51 = sphi 0, %s48
    %s52 = sphi 0, %s51
    %s68 = sphi 0, %s52
    %s72 = sphi 0, %s72
    %s74 = sphi 0, %s72
    %s75 = sphi 0, %s74
    %s89 = sphi 0, %s75
    %s93 = sphi 0, %s93
    %s95 = sphi 0, %s93
    %s96 = sphi 0, %s95
    %s110 = sphi 0, %s96
    %s114 = sphi 0, %s114
    %s116 = sphi 0, %s114
    %s117 = sphi 0, %s116
    %s131 = sphi 0, %s117
    %s135 = sphi 0, %s135
    %s137 = sphi 0, %s135
    %s138 = sphi 0, %s137
    %s152 = sphi 0, %s138
    %s158 = sphi 0, %s160
    %s161 = sphi 0, %s158
    %s162 = sphi 0, %s161
    %s178 = sphi 0, %s162
  $region4: #{first_res_block.5} parent=0 // loop_header_branch
    %15 = sbr.rel (%p13) target = $region8
  $region5: #{first_res_block.5} parent=0 // loop_body
    %s17 = ssub.s32 %s12, 1
    %s18 = ssub.s32 %s12, 2
    %s19 = sadd.s32 %s12, 1
    %s20 = ssub.s32 %s12, %s19
    %p21 = scmp.eq.s32.totalorder %s20, 0
    %s23 = sadd.s32 %s22, 1
    %s24 = scalar_select %p21, %s22, %s23
    %p27 = pneg %p21
    %p28 = scmp.eq.s32.totalorder %s12, 1
    %p29 = por %p27, %p28
    %p30 = scmp.ne.s32.totalorder %s22, %s25
    %p31 = scmp.eq.s32.totalorder %s12, 0
    %p32 = por %p30, %p31
    %p33 = scmp.ne.s32.totalorder %s22, %s25
    %p34 = scmp.eq.s32.totalorder %s17, 1
    %p35 = por %p33, %p34
    %p36 = scmp.ne.s32.totalorder %s25, %s26
    %p37 = scmp.eq.s32.totalorder %s17, 0
    %p38 = por %p36, %p37
    %p39 = scmp.ne.s32.totalorder %s25, %s26
    %p40 = scmp.eq.s32.totalorder %s18, 1
    %p41 = por %p39, %p40
    %p43 = scmp.ne.s32.totalorder %s26, %s42
    %p44 = scmp.eq.s32.totalorder %s18, 0
    %p45 = por %p43, %p44
    %s46 = ssub.s32 %s12, %s19
    %p47 = scmp.eq.s32.totalorder %s46, 0
    %s49 = sadd.s32 %s48, 1
    %s50 = scalar_select %p47, %s48, %s49
    %p53 = pneg %p47
    %p54 = scmp.eq.s32.totalorder %s12, 1
    %p55 = por %p53, %p54
    %p56 = scmp.ne.s32.totalorder %s48, %s51
    %p57 = scmp.eq.s32.totalorder %s12, 0
    %p58 = por %p56, %p57
    %p59 = scmp.ne.s32.totalorder %s48, %s51
    %p60 = scmp.eq.s32.totalorder %s17, 1
    %p61 = por %p59, %p60
    %p62 = scmp.ne.s32.totalorder %s51, %s52
    %p63 = scmp.eq.s32.totalorder %s17, 0
    %p64 = por %p62, %p63
    %p65 = scmp.ne.s32.totalorder %s51, %s52
    %p66 = scmp.eq.s32.totalorder %s18, 1
    %p67 = por %p65, %p66
    %p69 = scmp.ne.s32.totalorder %s52, %s68
    %p70 = scmp.eq.s32.totalorder %s18, 0
    %p71 = por %p69, %p70
    %s73 = sadd.s32 %s72, 1
    %p76 = scmp.eq.s32.totalorder %s12, 1
    %p77 = scmp.ne.s32.totalorder %s72, %s74
    %p78 = scmp.eq.s32.totalorder %s12, 0
    %p79 = por %p77, %p78
    %p80 = scmp.ne.s32.totalorder %s72, %s74
    %p81 = scmp.eq.s32.totalorder %s17, 1
    %p82 = por %p80, %p81
    %p83 = scmp.ne.s32.totalorder %s74, %s75
    %p84 = scmp.eq.s32.totalorder %s17, 0
    %p85 = por %p83, %p84
    %p86 = scmp.ne.s32.totalorder %s74, %s75
    %p87 = scmp.eq.s32.totalorder %s18, 1
    %p88 = por %p86, %p87
    %p90 = scmp.ne.s32.totalorder %s75, %s89
    %p91 = scmp.eq.s32.totalorder %s18, 0
    %p92 = por %p90, %p91
    %s94 = sadd.s32 %s93, 1
    %p97 = scmp.eq.s32.totalorder %s12, 1
    %p98 = scmp.ne.s32.totalorder %s93, %s95
    %p99 = scmp.eq.s32.totalorder %s12, 0
    %p100 = por %p98, %p99
    %p101 = scmp.ne.s32.totalorder %s93, %s95
    %p102 = scmp.eq.s32.totalorder %s17, 1
    %p103 = por %p101, %p102
    %p104 = scmp.ne.s32.totalorder %s95, %s96
    %p105 = scmp.eq.s32.totalorder %s17, 0
    %p106 = por %p104, %p105
    %p107 = scmp.ne.s32.totalorder %s95, %s96
    %p108 = scmp.eq.s32.totalorder %s18, 1
    %p109 = por %p107, %p108
    %p111 = scmp.ne.s32.totalorder %s96, %s110
    %p112 = scmp.eq.s32.totalorder %s18, 0
    %p113 = por %p111, %p112
    %s115 = sadd.s32 %s114, 1
    %p118 = scmp.eq.s32.totalorder %s12, 1
    %p119 = scmp.ne.s32.totalorder %s114, %s116
    %p120 = scmp.eq.s32.totalorder %s12, 0
    %p121 = por %p119, %p120
    %p122 = scmp.ne.s32.totalorder %s114, %s116
    %p123 = scmp.eq.s32.totalorder %s17, 1
    %p124 = por %p122, %p123
    %p125 = scmp.ne.s32.totalorder %s116, %s117
    %p126 = scmp.eq.s32.totalorder %s17, 0
    %p127 = por %p125, %p126
    %p128 = scmp.ne.s32.totalorder %s116, %s117
    %p129 = scmp.eq.s32.totalorder %s18, 1
    %p130 = por %p128, %p129
    %p132 = scmp.ne.s32.totalorder %s117, %s131
    %p133 = scmp.eq.s32.totalorder %s18, 0
    %p134 = por %p132, %p133
    %s136 = sadd.s32 %s135, 1
    %p139 = scmp.eq.s32.totalorder %s12, 1
    %p140 = scmp.ne.s32.totalorder %s135, %s137
    %p141 = scmp.eq.s32.totalorder %s12, 0
    %p142 = por %p140, %p141
    %p143 = scmp.ne.s32.totalorder %s135, %s137
    %p144 = scmp.eq.s32.totalorder %s17, 1
    %p145 = por %p143, %p144
    %p146 = scmp.ne.s32.totalorder %s137, %s138
    %p147 = scmp.eq.s32.totalorder %s17, 0
    %p148 = por %p146, %p147
    %p149 = scmp.ne.s32.totalorder %s137, %s138
    %p150 = scmp.eq.s32.totalorder %s18, 1
    %p151 = por %p149, %p150
    %p153 = scmp.ne.s32.totalorder %s138, %s152
    %p154 = scmp.eq.s32.totalorder %s18, 0
    %p155 = por %p153, %p154
    %s156 = ssub.s32 %s12, %s19
    %p157 = scmp.eq.s32.totalorder %s156, 0
    %s159 = sadd.s32 %s158, 1
    %s160 = scalar_select %p157, %s158, %s159
    %p163 = pneg %p157
    %p164 = scmp.eq.s32.totalorder %s12, 1
    %p165 = por %p163, %p164
    %p166 = scmp.ne.s32.totalorder %s158, %s161
    %p167 = scmp.eq.s32.totalorder %s12, 0
    %p168 = por %p166, %p167
    %p169 = scmp.ne.s32.totalorder %s158, %s161
    %p170 = scmp.eq.s32.totalorder %s17, 1
    %p171 = por %p169, %p170
    %p172 = scmp.ne.s32.totalorder %s161, %s162
    %p173 = scmp.eq.s32.totalorder %s17, 0
    %p174 = por %p172, %p173
    %p175 = scmp.ne.s32.totalorder %s161, %s162
    %p176 = scmp.eq.s32.totalorder %s18, 1
    %p177 = por %p175, %p176
    %p179 = scmp.ne.s32.totalorder %s162, %s178
    %p180 = scmp.eq.s32.totalorder %s18, 0
    %p181 = por %p179, %p180
    %p182 = scmp.le.s32.totalorder 1, %s12
    %p183 = scmp.lt.s32.totalorder %s12, 3
    %p184 = pnand %p182, %p183
    %p185 = pneg %p184
    // Predicated region
    $region9: #{first_res_block.5} parent=5 // pred_check
      _
    $region10: #{first_res_block.5} parent=5 // pred_check_branch
      %187 = sbr.rel (%p184) target = $region12
    $region11: #{first_res_block.5} parent=5 // pred_region
      %s188 = ssub.s32 %s12, 1
      // Predicated region
      $region13: #{first_res_block.5} parent=11 // pred_check
        %p189 = pneg %p85
      $region14: #{first_res_block.5} parent=11 // pred_check_branch
        %191 = sbr.rel (%p189) target = $region16
      $region15: #{first_res_block.5} parent=11 // pred_region
        _
      $region16: #{first_res_block.5} parent=11 // pred_fallthru
        _
      // Predicated region
      $region17: #{first_res_block.5} parent=11 // pred_check
        %p192 = pneg %p106
      $region18: #{first_res_block.5} parent=11 // pred_check_branch
        %194 = sbr.rel (%p192) target = $region20
      $region19: #{first_res_block.5} parent=11 // pred_region
        _
      $region20: #{first_res_block.5} parent=11 // pred_fallthru
        _
      // Predicated region
      $region21: #{first_res_block.5} parent=11 // pred_check
        %p195 = pneg %p127
      $region22: #{first_res_block.5} parent=11 // pred_check_branch
        %197 = sbr.rel (%p195) target = $region24
      $region23: #{first_res_block.5} parent=11 // pred_region
        _
      $region24: #{first_res_block.5} parent=11 // pred_fallthru
        _
      // Predicated region
      $region25: #{first_res_block.5} parent=11 // pred_check
        %p198 = pneg %p148
      $region26: #{first_res_block.5} parent=11 // pred_check_branch
        %200 = sbr.rel (%p198) target = $region28
      $region27: #{first_res_block.5} parent=11 // pred_region
        _
      $region28: #{first_res_block.5} parent=11 // pred_fallthru
        _
    $region12: #{first_res_block.5} parent=5 // pred_fallthru
      _
    %p201 = scmp.lt.s32.totalorder %s12, 2
    // Predicated region
    $region29: #{first_res_block.5} parent=5 // pred_check
      %p202 = pneg %p201
    $region30: #{first_res_block.5} parent=5 // pred_check_branch
      %204 = sbr.rel (%p202) target = $region32
    $region31: #{first_res_block.5} parent=5 // pred_region
      // Predicated region
      $region33: #{first_res_block.5} parent=31 // pred_check
        %p205 = pneg %p32
      $region34: #{first_res_block.5} parent=31 // pred_check_branch
        %207 = sbr.rel (%p205) target = $region36
      $region35: #{first_res_block.5} parent=31 // pred_region
        %p208 = scmp.lt.s32.totalorder %s12, 1
        %s209 = scalar_select %p208, %s12, 1
        %s210 = smul.addr %s209, 32
        %s211 = smul.addr %s210, 4
        %s212 = scalar_lea.vmem %s0, %s211
      $region36: #{first_res_block.5} parent=31 // pred_fallthru
        _
      // Predicated region
      $region37: #{first_res_block.5} parent=31 // pred_check
        %p213 = pneg %p58
      $region38: #{first_res_block.5} parent=31 // pred_check_branch
        %215 = sbr.rel (%p213) target = $region40
      $region39: #{first_res_block.5} parent=31 // pred_region
        %p216 = scmp.lt.s32.totalorder %s12, 1
        %s217 = scalar_select %p216, %s12, 1
        %s218 = smul.addr %s217, 32
        %s219 = smul.addr %s218, 4
        %s220 = scalar_lea.vmem %s1, %s219
      $region40: #{first_res_block.5} parent=31 // pred_fallthru
        _
    $region32: #{first_res_block.5} parent=5 // pred_fallthru
      _
    %p221 = scmp.le.s32.totalorder 1, %s12
    %p222 = scmp.lt.s32.totalorder %s12, 3
    %p223 = pnand %p221, %p222
    %p224 = pneg %p223
    // Predicated region
    $region41: #{first_res_block.5} parent=5 // pred_check
      _
    $region42: #{first_res_block.5} parent=5 // pred_check_branch
      %226 = sbr.rel (%p223) target = $region44
    $region43: #{first_res_block.5} parent=5 // pred_region
      %s227 = ssub.s32 %s12, 1
      %p228 = scmp.lt.s32.totalorder %s17, 1
      %s229 = scalar_select %p228, %s17, 1
      %s230 = smul.addr %s229, 32
      %s231 = smul.addr %s230, 4
      %s232 = scalar_lea.vmem %s0, %s231
      %p233 = pneg %p38
      %p234 = pneg %p35
      %p235 = scmp.lt.s32.totalorder %s17, 1
      %s236 = scalar_select %p235, %s17, 1
      %s237 = smul.addr %s236, 32
      %s238 = smul.addr %s237, 4
      %s239 = scalar_lea.vmem %s1, %s238
      %p240 = pneg %p64
      %p241 = pneg %p61
      %p242 = pneg %p85
      %p243 = pneg %p82
      %p244 = pneg %p106
      %p245 = pneg %p103
      %p246 = pneg %p127
      %p247 = pneg %p124
      %p248 = pneg %p148
      %p249 = pneg %p145
      %p250 = pneg %p174
      %p251 = pneg %p171
      %p252 = scmp.lt.s32.totalorder %s17, 1
      %s253 = scalar_select %p252, %s17, 1
      %s254 = smul.addr %s253, 32
      %s255 = smul.addr %s254, 8
      %s256 = scalar_lea.vmem %s6, %s255
      %p257 = scmp.lt.s32.totalorder %s17, 1
      %s258 = scalar_select %p257, %s17, 1
      %s259 = smul.addr %s258, 32
      %s260 = smul.addr %s259, 4
      %s261 = scalar_lea.vmem %s0, %s260
      %p262 = scmp.lt.s32.totalorder %s17, 1
      %s263 = scalar_select %p262, %s17, 1
      %s264 = smul.addr %s263, 32
      %s265 = smul.addr %s264, 4
      %s266 = scalar_lea.vmem %s1, %s265
      %p267 = scmp.lt.s32.totalorder %s17, 1
      %s268 = scalar_select %p267, %s17, 1
      %s269 = smul.addr %s268, 32
      %s270 = smul.addr %s269, 8
      %s271 = scalar_lea.vmem %s6, %s270
      %v272 = vld [vmem:[%s261] sm:$0xf]
      %v273 = vld [vmem:[%s261 + $0x4] sm:$0xf]
      %v274 = vld [vmem:[%s261 + $0x8] sm:$0xf]
      %v275 = vld [vmem:[%s261 + $0xc] sm:$0xf]
      %v276 = vld [vmem:[%s261 + $0x10] sm:$0xf]
      %v277 = vld [vmem:[%s261 + $0x14] sm:$0xf]
      %v278 = vld [vmem:[%s261 + $0x18] sm:$0xf]
      %v279 = vld [vmem:[%s261 + $0x1c] sm:$0xf]
      %v280 = vld [vmem:[%s261 + $0x20] sm:$0xf]
      %v281 = vld [vmem:[%s261 + $0x24] sm:$0xf]
      %v282 = vld [vmem:[%s261 + $0x28] sm:$0xf]
      %v283 = vld [vmem:[%s261 + $0x2c] sm:$0xf]
      %v284 = vld [vmem:[%s261 + $0x30] sm:$0xf]
      %v285 = vld [vmem:[%s261 + $0x34] sm:$0xf]
      %v286 = vld [vmem:[%s261 + $0x38] sm:$0xf]
      %v287 = vld [vmem:[%s261 + $0x3c] sm:$0xf]
      %v288 = vld [vmem:[%s261 + $0x40] sm:$0xf]
      %v289 = vld [vmem:[%s261 + $0x44] sm:$0xf]
      %v290 = vld [vmem:[%s261 + $0x48] sm:$0xf]
      %v291 = vld [vmem:[%s261 + $0x4c] sm:$0xf]
      %v292 = vld [vmem:[%s261 + $0x50] sm:$0xf]
      %v293 = vld [vmem:[%s261 + $0x54] sm:$0xf]
      %v294 = vld [vmem:[%s261 + $0x58] sm:$0xf]
      %v295 = vld [vmem:[%s261 + $0x5c] sm:$0xf]
      %v296 = vld [vmem:[%s261 + $0x60] sm:$0xf]
      %v297 = vld [vmem:[%s261 + $0x64] sm:$0xf]
      %v298 = vld [vmem:[%s261 + $0x68] sm:$0xf]
      %v299 = vld [vmem:[%s261 + $0x6c] sm:$0xf]
      %v300 = vld [vmem:[%s261 + $0x70] sm:$0xf]
      %v301 = vld [vmem:[%s261 + $0x74] sm:$0xf]
      %v302 = vld [vmem:[%s261 + $0x78] sm:$0xf]
      %v303 = vld [vmem:[%s261 + $0x7c] sm:$0xf]
      %v304 = vunpack.c.l.bf16 %v272
      %v305 = vunpack.c.l.bf16 %v273
      %v306 = vunpack.c.l.bf16 %v274
      %v307 = vunpack.c.l.bf16 %v275
      %v308 = vunpack.c.l.bf16 %v276
      %v309 = vunpack.c.l.bf16 %v277
      %v310 = vunpack.c.l.bf16 %v278
      %v311 = vunpack.c.l.bf16 %v279
      %v312 = vunpack.c.l.bf16 %v280
      %v313 = vunpack.c.l.bf16 %v281
      %v314 = vunpack.c.l.bf16 %v282
      %v315 = vunpack.c.l.bf16 %v283
      %v316 = vunpack.c.l.bf16 %v284
      %v317 = vunpack.c.l.bf16 %v285
      %v318 = vunpack.c.l.bf16 %v286
      %v319 = vunpack.c.l.bf16 %v287
      %v320 = vunpack.c.l.bf16 %v288
      %v321 = vunpack.c.l.bf16 %v289
      %v322 = vunpack.c.l.bf16 %v290
      %v323 = vunpack.c.l.bf16 %v291
      %v324 = vunpack.c.l.bf16 %v292
      %v325 = vunpack.c.l.bf16 %v293
      %v326 = vunpack.c.l.bf16 %v294
      %v327 = vunpack.c.l.bf16 %v295
      %v328 = vunpack.c.l.bf16 %v296
      %v329 = vunpack.c.l.bf16 %v297
      %v330 = vunpack.c.l.bf16 %v298
      %v331 = vunpack.c.l.bf16 %v299
      %v332 = vunpack.c.l.bf16 %v300
      %v333 = vunpack.c.l.bf16 %v301
      %v334 = vunpack.c.l.bf16 %v302
      %v335 = vunpack.c.l.bf16 %v303
      %v336 = vld [vmem:[%s2] sm:$0x1]
      %v338 = vlaneseq
      %v339 = vshrl.u32 %v338, 7
      %v340 = vsub.s32 0, %v339
      %v341 = vrot.slane %v336, %v340
      %v343 = vmul.f32 %v304, %v341
      %v344 = vmul.f32 %v305, %v341
      %v345 = vmul.f32 %v306, %v341
      %v346 = vmul.f32 %v307, %v341
      %v347 = vmul.f32 %v308, %v341
      %v348 = vmul.f32 %v309, %v341
      %v349 = vmul.f32 %v310, %v341
      %v350 = vmul.f32 %v311, %v341
      %v351 = vmul.f32 %v312, %v341
      %v352 = vmul.f32 %v313, %v341
      %v353 = vmul.f32 %v314, %v341
      %v354 = vmul.f32 %v315, %v341
      %v355 = vmul.f32 %v316, %v341
      %v356 = vmul.f32 %v317, %v341
      %v357 = vmul.f32 %v318, %v341
      %v358 = vmul.f32 %v319, %v341
      %v359 = vmul.f32 %v320, %v341
      %v360 = vmul.f32 %v321, %v341
      %v361 = vmul.f32 %v322, %v341
      %v362 = vmul.f32 %v323, %v341
      %v363 = vmul.f32 %v324, %v341
      %v364 = vmul.f32 %v325, %v341
      %v365 = vmul.f32 %v326, %v341
      %v366 = vmul.f32 %v327, %v341
      %v367 = vmul.f32 %v328, %v341
      %v368 = vmul.f32 %v329, %v341
      %v369 = vmul.f32 %v330, %v341
      %v370 = vmul.f32 %v331, %v341
      %v371 = vmul.f32 %v332, %v341
      %v372 = vmul.f32 %v333, %v341
      %v373 = vmul.f32 %v334, %v341
      %v374 = vmul.f32 %v335, %v341
      %v375 = vld [vmem:[%s3] sm:$0x1]
      %v377 = vlaneseq
      %v378 = vshrl.u32 %v377, 7
      %v379 = vsub.s32 0, %v378
      %v380 = vrot.slane %v375, %v379
      %v382 = vadd.f32 %v343, %v380
      %v383 = vadd.f32 %v344, %v380
      %v384 = vadd.f32 %v345, %v380
      %v385 = vadd.f32 %v346, %v380
      %v386 = vadd.f32 %v347, %v380
      %v387 = vadd.f32 %v348, %v380
      %v388 = vadd.f32 %v349, %v380
      %v389 = vadd.f32 %v350, %v380
      %v390 = vadd.f32 %v351, %v380
      %v391 = vadd.f32 %v352, %v380
      %v392 = vadd.f32 %v353, %v380
      %v393 = vadd.f32 %v354, %v380
      %v394 = vadd.f32 %v355, %v380
      %v395 = vadd.f32 %v356, %v380
      %v396 = vadd.f32 %v357, %v380
      %v397 = vadd.f32 %v358, %v380
      %v398 = vadd.f32 %v359, %v380
      %v399 = vadd.f32 %v360, %v380
      %v400 = vadd.f32 %v361, %v380
      %v401 = vadd.f32 %v362, %v380
      %v402 = vadd.f32 %v363, %v380
      %v403 = vadd.f32 %v364, %v380
      %v404 = vadd.f32 %v365, %v380
      %v405 = vadd.f32 %v366, %v380
      %v406 = vadd.f32 %v367, %v380
      %v407 = vadd.f32 %v368, %v380
      %v408 = vadd.f32 %v369, %v380
      %v409 = vadd.f32 %v370, %v380
      %v410 = vadd.f32 %v371, %v380
      %v411 = vadd.f32 %v372, %v380
      %v412 = vadd.f32 %v373, %v380
      %v413 = vadd.f32 %v374, %v380
      %v414 = vld [vmem:[%s266] sm:$0xf]
      %v415 = vld [vmem:[%s266 + $0x4] sm:$0xf]
      %v416 = vld [vmem:[%s266 + $0x8] sm:$0xf]
      %v417 = vld [vmem:[%s266 + $0xc] sm:$0xf]
      %v418 = vld [vmem:[%s266 + $0x10] sm:$0xf]
      %v419 = vld [vmem:[%s266 + $0x14] sm:$0xf]
      %v420 = vld [vmem:[%s266 + $0x18] sm:$0xf]
      %v421 = vld [vmem:[%s266 + $0x1c] sm:$0xf]
      %v422 = vld [vmem:[%s266 + $0x20] sm:$0xf]
      %v423 = vld [vmem:[%s266 + $0x24] sm:$0xf]
      %v424 = vld [vmem:[%s266 + $0x28] sm:$0xf]
      %v425 = vld [vmem:[%s266 + $0x2c] sm:$0xf]
      %v426 = vld [vmem:[%s266 + $0x30] sm:$0xf]
      %v427 = vld [vmem:[%s266 + $0x34] sm:$0xf]
      %v428 = vld [vmem:[%s266 + $0x38] sm:$0xf]
      %v429 = vld [vmem:[%s266 + $0x3c] sm:$0xf]
      %v430 = vld [vmem:[%s266 + $0x40] sm:$0xf]
      %v431 = vld [vmem:[%s266 + $0x44] sm:$0xf]
      %v432 = vld [vmem:[%s266 + $0x48] sm:$0xf]
      %v433 = vld [vmem:[%s266 + $0x4c] sm:$0xf]
      %v434 = vld [vmem:[%s266 + $0x50] sm:$0xf]
      %v435 = vld [vmem:[%s266 + $0x54] sm:$0xf]
      %v436 = vld [vmem:[%s266 + $0x58] sm:$0xf]
      %v437 = vld [vmem:[%s266 + $0x5c] sm:$0xf]
      %v438 = vld [vmem:[%s266 + $0x60] sm:$0xf]
      %v439 = vld [vmem:[%s266 + $0x64] sm:$0xf]
      %v440 = vld [vmem:[%s266 + $0x68] sm:$0xf]
      %v441 = vld [vmem:[%s266 + $0x6c] sm:$0xf]
      %v442 = vld [vmem:[%s266 + $0x70] sm:$0xf]
      %v443 = vld [vmem:[%s266 + $0x74] sm:$0xf]
      %v444 = vld [vmem:[%s266 + $0x78] sm:$0xf]
      %v445 = vld [vmem:[%s266 + $0x7c] sm:$0xf]
      %v446 = vunpack.c.l.bf16 %v414
      %v447 = vunpack.c.l.bf16 %v415
      %v448 = vunpack.c.l.bf16 %v416
      %v449 = vunpack.c.l.bf16 %v417
      %v450 = vunpack.c.l.bf16 %v418
      %v451 = vunpack.c.l.bf16 %v419
      %v452 = vunpack.c.l.bf16 %v420
      %v453 = vunpack.c.l.bf16 %v421
      %v454 = vunpack.c.l.bf16 %v422
      %v455 = vunpack.c.l.bf16 %v423
      %v456 = vunpack.c.l.bf16 %v424
      %v457 = vunpack.c.l.bf16 %v425
      %v458 = vunpack.c.l.bf16 %v426
      %v459 = vunpack.c.l.bf16 %v427
      %v460 = vunpack.c.l.bf16 %v428
      %v461 = vunpack.c.l.bf16 %v429
      %v462 = vunpack.c.l.bf16 %v430
      %v463 = vunpack.c.l.bf16 %v431
      %v464 = vunpack.c.l.bf16 %v432
      %v465 = vunpack.c.l.bf16 %v433
      %v466 = vunpack.c.l.bf16 %v434
      %v467 = vunpack.c.l.bf16 %v435
      %v468 = vunpack.c.l.bf16 %v436
      %v469 = vunpack.c.l.bf16 %v437
      %v470 = vunpack.c.l.bf16 %v438
      %v471 = vunpack.c.l.bf16 %v439
      %v472 = vunpack.c.l.bf16 %v440
      %v473 = vunpack.c.l.bf16 %v441
      %v474 = vunpack.c.l.bf16 %v442
      %v475 = vunpack.c.l.bf16 %v443
      %v476 = vunpack.c.l.bf16 %v444
      %v477 = vunpack.c.l.bf16 %v445
      %v478 = vld [vmem:[%s4] sm:$0x1]
      %v480 = vlaneseq
      %v481 = vshrl.u32 %v480, 7
      %v482 = vsub.s32 0, %v481
      %v483 = vrot.slane %v478, %v482
      %v485 = vmul.f32 %v446, %v483
      %v486 = vmul.f32 %v447, %v483
      %v487 = vmul.f32 %v448, %v483
      %v488 = vmul.f32 %v449, %v483
      %v489 = vmul.f32 %v450, %v483
      %v490 = vmul.f32 %v451, %v483
      %v491 = vmul.f32 %v452, %v483
      %v492 = vmul.f32 %v453, %v483
      %v493 = vmul.f32 %v454, %v483
      %v494 = vmul.f32 %v455, %v483
      %v495 = vmul.f32 %v456, %v483
      %v496 = vmul.f32 %v457, %v483
      %v497 = vmul.f32 %v458, %v483
      %v498 = vmul.f32 %v459, %v483
      %v499 = vmul.f32 %v460, %v483
      %v500 = vmul.f32 %v461, %v483
      %v501 = vmul.f32 %v462, %v483
      %v502 = vmul.f32 %v463, %v483
      %v503 = vmul.f32 %v464, %v483
      %v504 = vmul.f32 %v465, %v483
      %v505 = vmul.f32 %v466, %v483
      %v506 = vmul.f32 %v467, %v483
      %v507 = vmul.f32 %v468, %v483
      %v508 = vmul.f32 %v469, %v483
      %v509 = vmul.f32 %v470, %v483
      %v510 = vmul.f32 %v471, %v483
      %v511 = vmul.f32 %v472, %v483
      %v512 = vmul.f32 %v473, %v483
      %v513 = vmul.f32 %v474, %v483
      %v514 = vmul.f32 %v475, %v483
      %v515 = vmul.f32 %v476, %v483
      %v516 = vmul.f32 %v477, %v483
      %v517 = vld [vmem:[%s5] sm:$0x1]
      %v519 = vlaneseq
      %v520 = vshrl.u32 %v519, 7
      %v521 = vsub.s32 0, %v520
      %v522 = vrot.slane %v517, %v521
      %v524 = vadd.f32 %v485, %v522
      %v525 = vadd.f32 %v486, %v522
      %v526 = vadd.f32 %v487, %v522
      %v527 = vadd.f32 %v488, %v522
      %v528 = vadd.f32 %v489, %v522
      %v529 = vadd.f32 %v490, %v522
      %v530 = vadd.f32 %v491, %v522
      %v531 = vadd.f32 %v492, %v522
      %v532 = vadd.f32 %v493, %v522
      %v533 = vadd.f32 %v494, %v522
      %v534 = vadd.f32 %v495, %v522
      %v535 = vadd.f32 %v496, %v522
      %v536 = vadd.f32 %v497, %v522
      %v537 = vadd.f32 %v498, %v522
      %v538 = vadd.f32 %v499, %v522
      %v539 = vadd.f32 %v500, %v522
      %v540 = vadd.f32 %v501, %v522
      %v541 = vadd.f32 %v502, %v522
      %v542 = vadd.f32 %v503, %v522
      %v543 = vadd.f32 %v504, %v522
      %v544 = vadd.f32 %v505, %v522
      %v545 = vadd.f32 %v506, %v522
      %v546 = vadd.f32 %v507, %v522
      %v547 = vadd.f32 %v508, %v522
      %v548 = vadd.f32 %v509, %v522
      %v549 = vadd.f32 %v510, %v522
      %v550 = vadd.f32 %v511, %v522
      %v551 = vadd.f32 %v512, %v522
      %v552 = vadd.f32 %v513, %v522
      %v553 = vadd.f32 %v514, %v522
      %v554 = vadd.f32 %v515, %v522
      %v555 = vadd.f32 %v516, %v522
      %v556 = vadd.f32 %v382, %v524
      %v557 = vadd.f32 %v383, %v525
      %v558 = vadd.f32 %v384, %v526
      %v559 = vadd.f32 %v385, %v527
      %v560 = vadd.f32 %v386, %v528
      %v561 = vadd.f32 %v387, %v529
      %v562 = vadd.f32 %v388, %v530
      %v563 = vadd.f32 %v389, %v531
      %v564 = vadd.f32 %v390, %v532
      %v565 = vadd.f32 %v391, %v533
      %v566 = vadd.f32 %v392, %v534
      %v567 = vadd.f32 %v393, %v535
      %v568 = vadd.f32 %v394, %v536
      %v569 = vadd.f32 %v395, %v537
      %v570 = vadd.f32 %v396, %v538
      %v571 = vadd.f32 %v397, %v539
      %v572 = vadd.f32 %v398, %v540
      %v573 = vadd.f32 %v399, %v541
      %v574 = vadd.f32 %v400, %v542
      %v575 = vadd.f32 %v401, %v543
      %v576 = vadd.f32 %v402, %v544
      %v577 = vadd.f32 %v403, %v545
      %v578 = vadd.f32 %v404, %v546
      %v579 = vadd.f32 %v405, %v547
      %v580 = vadd.f32 %v406, %v548
      %v581 = vadd.f32 %v407, %v549
      %v582 = vadd.f32 %v408, %v550
      %v583 = vadd.f32 %v409, %v551
      %v584 = vadd.f32 %v410, %v552
      %v585 = vadd.f32 %v411, %v553
      %v586 = vadd.f32 %v412, %v554
      %v587 = vadd.f32 %v413, %v555
      %v588 = vmax.f32 %v556, 0.0
      %v589 = vmax.f32 %v557, 0.0
      %v590 = vmax.f32 %v558, 0.0
      %v591 = vmax.f32 %v559, 0.0
      %v592 = vmax.f32 %v560, 0.0
      %v593 = vmax.f32 %v561, 0.0
      %v594 = vmax.f32 %v562, 0.0
      %v595 = vmax.f32 %v563, 0.0
      %v596 = vmax.f32 %v564, 0.0
      %v597 = vmax.f32 %v565, 0.0
      %v598 = vmax.f32 %v566, 0.0
      %v599 = vmax.f32 %v567, 0.0
      %v600 = vmax.f32 %v568, 0.0
      %v601 = vmax.f32 %v569, 0.0
      %v602 = vmax.f32 %v570, 0.0
      %v603 = vmax.f32 %v571, 0.0
      %v604 = vmax.f32 %v572, 0.0
      %v605 = vmax.f32 %v573, 0.0
      %v606 = vmax.f32 %v574, 0.0
      %v607 = vmax.f32 %v575, 0.0
      %v608 = vmax.f32 %v576, 0.0
      %v609 = vmax.f32 %v577, 0.0
      %v610 = vmax.f32 %v578, 0.0
      %v611 = vmax.f32 %v579, 0.0
      %v612 = vmax.f32 %v580, 0.0
      %v613 = vmax.f32 %v581, 0.0
      %v614 = vmax.f32 %v582, 0.0
      %v615 = vmax.f32 %v583, 0.0
      %v616 = vmax.f32 %v584, 0.0
      %v617 = vmax.f32 %v585, 0.0
      %v618 = vmax.f32 %v586, 0.0
      %v619 = vmax.f32 %v587, 0.0
      %620 = vst [vmem:[%s271] sm:$0xff] %v588
      %621 = vst [vmem:[%s271 + $0x8] sm:$0xff] %v589
      %622 = vst [vmem:[%s271 + $0x10] sm:$0xff] %v590
      %623 = vst [vmem:[%s271 + $0x18] sm:$0xff] %v591
      %624 = vst [vmem:[%s271 + $0x20] sm:$0xff] %v592
      %625 = vst [vmem:[%s271 + $0x28] sm:$0xff] %v593
      %626 = vst [vmem:[%s271 + $0x30] sm:$0xff] %v594
      %627 = vst [vmem:[%s271 + $0x38] sm:$0xff] %v595
      %628 = vst [vmem:[%s271 + $0x40] sm:$0xff] %v596
      %629 = vst [vmem:[%s271 + $0x48] sm:$0xff] %v597
      %630 = vst [vmem:[%s271 + $0x50] sm:$0xff] %v598
      %631 = vst [vmem:[%s271 + $0x58] sm:$0xff] %v599
      %632 = vst [vmem:[%s271 + $0x60] sm:$0xff] %v600
      %633 = vst [vmem:[%s271 + $0x68] sm:$0xff] %v601
      %634 = vst [vmem:[%s271 + $0x70] sm:$0xff] %v602
      %635 = vst [vmem:[%s271 + $0x78] sm:$0xff] %v603
      %636 = vst [vmem:[%s271 + $0x80] sm:$0xff] %v604
      %637 = vst [vmem:[%s271 + $0x88] sm:$0xff] %v605
      %638 = vst [vmem:[%s271 + $0x90] sm:$0xff] %v606
      %639 = vst [vmem:[%s271 + $0x98] sm:$0xff] %v607
      %640 = vst [vmem:[%s271 + $0xa0] sm:$0xff] %v608
      %641 = vst [vmem:[%s271 + $0xa8] sm:$0xff] %v609
      %642 = vst [vmem:[%s271 + $0xb0] sm:$0xff] %v610
      %643 = vst [vmem:[%s271 + $0xb8] sm:$0xff] %v611
      %644 = vst [vmem:[%s271 + $0xc0] sm:$0xff] %v612
      %645 = vst [vmem:[%s271 + $0xc8] sm:$0xff] %v613
      %646 = vst [vmem:[%s271 + $0xd0] sm:$0xff] %v614
      %647 = vst [vmem:[%s271 + $0xd8] sm:$0xff] %v615
      %648 = vst [vmem:[%s271 + $0xe0] sm:$0xff] %v616
      %649 = vst [vmem:[%s271 + $0xe8] sm:$0xff] %v617
      %650 = vst [vmem:[%s271 + $0xf0] sm:$0xff] %v618
      %651 = vst [vmem:[%s271 + $0xf8] sm:$0xff] %v619
      %p652 = scmp.lt.s32.totalorder %s17, 1
      %s653 = scalar_select %p652, %s17, 1
      %s654 = smul.addr %s653, 32
      %s655 = smul.addr %s654, 8
      %s656 = scalar_lea.vmem %s6, %s655
      // Predicated region
      $region45: #{first_res_block.5} parent=43 // pred_check
        %p657 = pneg %p171
      $region46: #{first_res_block.5} parent=43 // pred_check_branch
        %659 = sbr.rel (%p657) target = $region48
      $region47: #{first_res_block.5} parent=43 // pred_region
        _
      $region48: #{first_res_block.5} parent=43 // pred_fallthru
        _
    $region44: #{first_res_block.5} parent=5 // pred_fallthru
      _
    %p660 = scmp.le.s32.totalorder 2, %s12
    // Predicated region
    $region49: #{first_res_block.5} parent=5 // pred_check
      %p661 = pneg %p660
    $region50: #{first_res_block.5} parent=5 // pred_check_branch
      %663 = sbr.rel (%p661) target = $region52
    $region51: #{first_res_block.5} parent=5 // pred_region
      %s664 = ssub.s32 %s12, 2
      // Predicated region
      $region53: #{first_res_block.5} parent=51 // pred_check
        %p665 = pneg %p177
      $region54: #{first_res_block.5} parent=51 // pred_check_branch
        %667 = sbr.rel (%p665) target = $region56
      $region55: #{first_res_block.5} parent=51 // pred_region
        %p668 = scmp.lt.s32.totalorder %s18, 1
        %s669 = scalar_select %p668, %s18, 1
        %s670 = smul.addr %s669, 32
        %s671 = smul.addr %s670, 8
        %s672 = scalar_lea.vmem %s6, %s671
      $region56: #{first_res_block.5} parent=51 // pred_fallthru
        _
    $region52: #{first_res_block.5} parent=5 // pred_fallthru
      _
  $region6: #{first_res_block.5} parent=0 // loop_footer
    %s16 = sadd.s32 1, %s12
  $region7: #{first_res_block.5} parent=0 // loop_footer_branch
    %11 = sbr.rel target = $region3
  $region8: #{first_res_block.5} parent=0 // loop_exit
    _

// kernel: first_res_block.3
$region0: #{first_res_block.3}
  #allocation0 [shape = 'u32[]', space=smem, size = 0x4, offset = 0x4, fixed_abs, tag = 'smem constant byte address 0x4 - core index']
  #allocation1 [shape = 'u32[144,128]{1,0:T(1,128)}', space=vmem, size = 0x12000, scoped, tag = 'internal scratch']
  %s0 = inlined_call_operand.vmem [shape: bf16[2,18,24,128], index: 0, kind: input, shape index: {}]
  %s1 = inlined_call_operand.vmem [shape: bf16[3,384,128], index: 1, kind: input, shape index: {}]
  %s2 = inlined_call_operand.vmem [shape: bf16[128,128], index: 2, kind: input, shape index: {}]
  %s3 = inlined_call_operand.vmem [shape: bf16[2,16,16,128], index: 3, kind: output, shape index: {0}]
  %s4 = inlined_call_operand.vmem [shape: bf16[2,16,16,128], index: 4, kind: output, shape index: {1}]
  %s5 = inlined_call_operand.vmem [shape: f32[2,4,128], index: 5, kind: output, shape index: {2}]
  %6 = xla_tuple %s3, %s4, %s5
  %s7 = sld [smem:[#allocation0]]
  $region61: #{first_res_block.3} parent=0
    _
  %s9 = ssub.s32 1, %s7
  %s10 = scalar_select 0, %s9, %s7
  loop: start=0, step=1, limit=4
  $region2: #{first_res_block.3} parent=0 // loop_pre_header
    _
  $region3: #{first_res_block.3} parent=0 // loop_header
    %s12 = sphi 0, %s16
    %p13 = scmp.ge.s32.totalorder %s12, 4
    %s22 = sphi 0, %s24
    %s25 = sphi 0, %s22
    %s26 = sphi 0, %s25
    %s42 = sphi 0, %s26
    %s46 = sphi 0, %s46
    %s48 = sphi 0, %s46
    %s49 = sphi 0, %s48
    %s63 = sphi 0, %s49
    %s67 = sphi 0, %s67
    %s69 = sphi 0, %s67
    %s70 = sphi 0, %s69
    %s84 = sphi 0, %s70
    %s90 = sphi 0, %s92
    %s93 = sphi 0, %s90
    %s94 = sphi 0, %s93
    %s110 = sphi 0, %s94
    %s116 = sphi 0, %s118
    %s119 = sphi 0, %s116
    %s120 = sphi 0, %s119
    %s136 = sphi 0, %s120
    %s142 = sphi 0, %s144
    %s145 = sphi 0, %s142
    %s146 = sphi 0, %s145
    %s162 = sphi 0, %s146
  $region4: #{first_res_block.3} parent=0 // loop_header_branch
    %15 = sbr.rel (%p13) target = $region8
  $region5: #{first_res_block.3} parent=0 // loop_body
    %s17 = ssub.s32 %s12, 1
    %s18 = ssub.s32 %s12, 2
    %s19 = sadd.s32 %s12, 1
    %s20 = ssub.s32 %s12, %s19
    %p21 = scmp.eq.s32.totalorder %s20, 0
    %s23 = sadd.s32 %s22, 1
    %s24 = scalar_select %p21, %s22, %s23
    %p27 = pneg %p21
    %p28 = scmp.eq.s32.totalorder %s12, 1
    %p29 = por %p27, %p28
    %p30 = scmp.ne.s32.totalorder %s22, %s25
    %p31 = scmp.eq.s32.totalorder %s12, 0
    %p32 = por %p30, %p31
    %p33 = scmp.ne.s32.totalorder %s22, %s25
    %p34 = scmp.eq.s32.totalorder %s17, 1
    %p35 = por %p33, %p34
    %p36 = scmp.ne.s32.totalorder %s25, %s26
    %p37 = scmp.eq.s32.totalorder %s17, 0
    %p38 = por %p36, %p37
    %p39 = scmp.ne.s32.totalorder %s25, %s26
    %p40 = scmp.eq.s32.totalorder %s18, 1
    %p41 = por %p39, %p40
    %p43 = scmp.ne.s32.totalorder %s26, %s42
    %p44 = scmp.eq.s32.totalorder %s18, 0
    %p45 = por %p43, %p44
    %s47 = sadd.s32 %s46, 1
    %p50 = scmp.eq.s32.totalorder %s12, 1
    %p51 = scmp.ne.s32.totalorder %s46, %s48
    %p52 = scmp.eq.s32.totalorder %s12, 0
    %p53 = por %p51, %p52
    %p54 = scmp.ne.s32.totalorder %s46, %s48
    %p55 = scmp.eq.s32.totalorder %s17, 1
    %p56 = por %p54, %p55
    %p57 = scmp.ne.s32.totalorder %s48, %s49
    %p58 = scmp.eq.s32.totalorder %s17, 0
    %p59 = por %p57, %p58
    %p60 = scmp.ne.s32.totalorder %s48, %s49
    %p61 = scmp.eq.s32.totalorder %s18, 1
    %p62 = por %p60, %p61
    %p64 = scmp.ne.s32.totalorder %s49, %s63
    %p65 = scmp.eq.s32.totalorder %s18, 0
    %p66 = por %p64, %p65
    %s68 = sadd.s32 %s67, 1
    %p71 = scmp.eq.s32.totalorder %s12, 1
    %p72 = scmp.ne.s32.totalorder %s67, %s69
    %p73 = scmp.eq.s32.totalorder %s12, 0
    %p74 = por %p72, %p73
    %p75 = scmp.ne.s32.totalorder %s67, %s69
    %p76 = scmp.eq.s32.totalorder %s17, 1
    %p77 = por %p75, %p76
    %p78 = scmp.ne.s32.totalorder %s69, %s70
    %p79 = scmp.eq.s32.totalorder %s17, 0
    %p80 = por %p78, %p79
    %p81 = scmp.ne.s32.totalorder %s69, %s70
    %p82 = scmp.eq.s32.totalorder %s18, 1
    %p83 = por %p81, %p82
    %p85 = scmp.ne.s32.totalorder %s70, %s84
    %p86 = scmp.eq.s32.totalorder %s18, 0
    %p87 = por %p85, %p86
    %s88 = ssub.s32 %s12, %s19
    %p89 = scmp.eq.s32.totalorder %s88, 0
    %s91 = sadd.s32 %s90, 1
    %s92 = scalar_select %p89, %s90, %s91
    %p95 = pneg %p89
    %p96 = scmp.eq.s32.totalorder %s12, 1
    %p97 = por %p95, %p96
    %p98 = scmp.ne.s32.totalorder %s90, %s93
    %p99 = scmp.eq.s32.totalorder %s12, 0
    %p100 = por %p98, %p99
    %p101 = scmp.ne.s32.totalorder %s90, %s93
    %p102 = scmp.eq.s32.totalorder %s17, 1
    %p103 = por %p101, %p102
    %p104 = scmp.ne.s32.totalorder %s93, %s94
    %p105 = scmp.eq.s32.totalorder %s17, 0
    %p106 = por %p104, %p105
    %p107 = scmp.ne.s32.totalorder %s93, %s94
    %p108 = scmp.eq.s32.totalorder %s18, 1
    %p109 = por %p107, %p108
    %p111 = scmp.ne.s32.totalorder %s94, %s110
    %p112 = scmp.eq.s32.totalorder %s18, 0
    %p113 = por %p111, %p112
    %s114 = ssub.s32 %s12, %s19
    %p115 = scmp.eq.s32.totalorder %s114, 0
    %s117 = sadd.s32 %s116, 1
    %s118 = scalar_select %p115, %s116, %s117
    %p121 = pneg %p115
    %p122 = scmp.eq.s32.totalorder %s12, 1
    %p123 = por %p121, %p122
    %p124 = scmp.ne.s32.totalorder %s116, %s119
    %p125 = scmp.eq.s32.totalorder %s12, 0
    %p126 = por %p124, %p125
    %p127 = scmp.ne.s32.totalorder %s116, %s119
    %p128 = scmp.eq.s32.totalorder %s17, 1
    %p129 = por %p127, %p128
    %p130 = scmp.ne.s32.totalorder %s119, %s120
    %p131 = scmp.eq.s32.totalorder %s17, 0
    %p132 = por %p130, %p131
    %p133 = scmp.ne.s32.totalorder %s119, %s120
    %p134 = scmp.eq.s32.totalorder %s18, 1
    %p135 = por %p133, %p134
    %p137 = scmp.ne.s32.totalorder %s120, %s136
    %p138 = scmp.eq.s32.totalorder %s18, 0
    %p139 = por %p137, %p138
    %s140 = ssub.s32 %s12, %s19
    %p141 = scmp.eq.s32.totalorder %s140, 0
    %s143 = sadd.s32 %s142, 1
    %s144 = scalar_select %p141, %s142, %s143
    %p147 = pneg %p141
    %p148 = scmp.eq.s32.totalorder %s12, 1
    %p149 = por %p147, %p148
    %p150 = scmp.ne.s32.totalorder %s142, %s145
    %p151 = scmp.eq.s32.totalorder %s12, 0
    %p152 = por %p150, %p151
    %p153 = scmp.ne.s32.totalorder %s142, %s145
    %p154 = scmp.eq.s32.totalorder %s17, 1
    %p155 = por %p153, %p154
    %p156 = scmp.ne.s32.totalorder %s145, %s146
    %p157 = scmp.eq.s32.totalorder %s17, 0
    %p158 = por %p156, %p157
    %p159 = scmp.ne.s32.totalorder %s145, %s146
    %p160 = scmp.eq.s32.totalorder %s18, 1
    %p161 = por %p159, %p160
    %p163 = scmp.ne.s32.totalorder %s146, %s162
    %p164 = scmp.eq.s32.totalorder %s18, 0
    %p165 = por %p163, %p164
    %p166 = scmp.le.s32.totalorder 1, %s12
    %p167 = scmp.lt.s32.totalorder %s12, 3
    %p168 = pnand %p166, %p167
    %p169 = pneg %p168
    // Predicated region
    $region9: #{first_res_block.3} parent=5 // pred_check
      _
    $region10: #{first_res_block.3} parent=5 // pred_check_branch
      %171 = sbr.rel (%p168) target = $region12
    $region11: #{first_res_block.3} parent=5 // pred_region
      %s172 = ssub.s32 %s12, 1
      // Predicated region
      $region13: #{first_res_block.3} parent=11 // pred_check
        %p173 = pneg %p59
      $region14: #{first_res_block.3} parent=11 // pred_check_branch
        %175 = sbr.rel (%p173) target = $region16
      $region15: #{first_res_block.3} parent=11 // pred_region
        _
      $region16: #{first_res_block.3} parent=11 // pred_fallthru
        _
      // Predicated region
      $region17: #{first_res_block.3} parent=11 // pred_check
        %p176 = pneg %p80
      $region18: #{first_res_block.3} parent=11 // pred_check_branch
        %178 = sbr.rel (%p176) target = $region20
      $region19: #{first_res_block.3} parent=11 // pred_region
        _
      $region20: #{first_res_block.3} parent=11 // pred_fallthru
        _
    $region12: #{first_res_block.3} parent=5 // pred_fallthru
      _
    %p179 = scmp.lt.s32.totalorder %s12, 2
    // Predicated region
    $region21: #{first_res_block.3} parent=5 // pred_check
      %p180 = pneg %p179
    $region22: #{first_res_block.3} parent=5 // pred_check_branch
      %182 = sbr.rel (%p180) target = $region24
    $region23: #{first_res_block.3} parent=5 // pred_region
      // Predicated region
      $region25: #{first_res_block.3} parent=23 // pred_check
        %p183 = pneg %p32
      $region26: #{first_res_block.3} parent=23 // pred_check_branch
        %185 = sbr.rel (%p183) target = $region28
      $region27: #{first_res_block.3} parent=23 // pred_region
        %p186 = scmp.lt.s32.totalorder %s12, 1
        %s187 = scalar_select %p186, %s12, 1
        %s188 = smul.addr %s187, 54
        %s189 = smul.addr %s188, 4
        %s190 = scalar_lea.vmem %s0, %s189
      $region28: #{first_res_block.3} parent=23 // pred_fallthru
        _
    $region24: #{first_res_block.3} parent=5 // pred_fallthru
      _
    %p191 = scmp.le.s32.totalorder 1, %s12
    %p192 = scmp.lt.s32.totalorder %s12, 3
    %p193 = pnand %p191, %p192
    %p194 = pneg %p193
    // Predicated region
    $region29: #{first_res_block.3} parent=5 // pred_check
      _
    $region30: #{first_res_block.3} parent=5 // pred_check_branch
      %196 = sbr.rel (%p193) target = $region32
    $region31: #{first_res_block.3} parent=5 // pred_region
      %s197 = ssub.s32 %s12, 1
      %p198 = scmp.lt.s32.totalorder %s17, 1
      %s199 = scalar_select %p198, %s17, 1
      %s200 = smul.addr %s199, 54
      %s201 = smul.addr %s200, 4
      %s202 = scalar_lea.vmem %s0, %s201
      %p203 = pneg %p38
      %p204 = pneg %p35
      %p205 = pneg %p59
      %p206 = pneg %p56
      %p207 = pneg %p80
      %p208 = pneg %p77
      %p209 = pneg %p106
      %p210 = pneg %p103
      %p211 = scmp.lt.s32.totalorder %s17, 1
      %s212 = scalar_select %p211, %s17, 1
      %s213 = smul.addr %s212, 32
      %s214 = smul.addr %s213, 4
      %s215 = scalar_lea.vmem %s3, %s214
      %p216 = pneg %p132
      %p217 = pneg %p129
      %p218 = scmp.lt.s32.totalorder %s17, 1
      %s219 = scalar_select %p218, %s17, 1
      %s220 = smul.addr %s219, 32
      %s221 = smul.addr %s220, 4
      %s222 = scalar_lea.vmem %s4, %s221
      %p223 = pneg %p158
      %p224 = pneg %p155
      %p225 = scmp.lt.s32.totalorder %s17, 1
      %s226 = scalar_select %p225, %s17, 1
      %s227 = smul.addr %s226, 4
      %s228 = scalar_lea.vmem %s5, %s227
      %p229 = scmp.lt.s32.totalorder %s17, 1
      %s230 = scalar_select %p229, %s17, 1
      %s231 = smul.addr %s230, 54
      %s232 = smul.addr %s231, 4
      %s233 = scalar_lea.vmem %s0, %s232
      %p234 = scmp.lt.s32.totalorder %s17, 1
      %s235 = scalar_select %p234, %s17, 1
      %s236 = smul.addr %s235, 32
      %s237 = smul.addr %s236, 4
      %s238 = scalar_lea.vmem %s3, %s237
      %p239 = scmp.lt.s32.totalorder %s17, 1
      %s240 = scalar_select %p239, %s17, 1
      %s241 = smul.addr %s240, 32
      %s242 = smul.addr %s241, 4
      %s243 = scalar_lea.vmem %s4, %s242
      %p244 = scmp.lt.s32.totalorder %s17, 1
      %s245 = scalar_select %p244, %s17, 1
      %s246 = smul.addr %s245, 4
      %s247 = scalar_lea.vmem %s5, %s246
      %v249 = vld [vmem:[%s233] sm:$0xf]
      %v250 = vld [vmem:[%s233 + $0x4] sm:$0xf]
      %v251 = vld [vmem:[%s233 + $0x8] sm:$0xf]
      %v252 = vld [vmem:[%s233 + $0xc] sm:$0xf]
      %v253 = vld [vmem:[%s233 + $0x10] sm:$0xf]
      %v254 = vld [vmem:[%s233 + $0x14] sm:$0xf]
      %v255 = vld [vmem:[%s233 + $0x18] sm:$0xf]
      %v256 = vld [vmem:[%s233 + $0x1c] sm:$0xf]
      %v257 = vld [vmem:[%s233 + $0x20] sm:$0xf]
      %v258 = vld [vmem:[%s233 + $0x24] sm:$0xf]
      %v259 = vld [vmem:[%s233 + $0x28] sm:$0xf]
      %v260 = vld [vmem:[%s233 + $0x2c] sm:$0xf]
      %v261 = vld [vmem:[%s233 + $0x30] sm:$0xf]
      %v262 = vld [vmem:[%s233 + $0x34] sm:$0xf]
      %v263 = vld [vmem:[%s233 + $0x38] sm:$0xf]
      %v264 = vld [vmem:[%s233 + $0x3c] sm:$0xf]
      %v265 = vld [vmem:[%s233 + $0x40] sm:$0xf]
      %v266 = vld [vmem:[%s233 + $0x44] sm:$0xf]
      %v267 = vld [vmem:[%s233 + $0x48] sm:$0xf]
      %v268 = vld [vmem:[%s233 + $0x4c] sm:$0xf]
      %v269 = vld [vmem:[%s233 + $0x50] sm:$0xf]
      %v270 = vld [vmem:[%s233 + $0x54] sm:$0xf]
      %v271 = vld [vmem:[%s233 + $0x58] sm:$0xf]
      %v272 = vld [vmem:[%s233 + $0x5c] sm:$0xf]
      %v273 = vld [vmem:[%s233 + $0x60] sm:$0xf]
      %v274 = vld [vmem:[%s233 + $0x64] sm:$0xf]
      %v275 = vld [vmem:[%s233 + $0x68] sm:$0xf]
      %v276 = vld [vmem:[%s233 + $0x6c] sm:$0xf]
      %v277 = vld [vmem:[%s233 + $0x70] sm:$0xf]
      %v278 = vld [vmem:[%s233 + $0x74] sm:$0xf]
      %v279 = vld [vmem:[%s233 + $0x78] sm:$0xf]
      %v280 = vld [vmem:[%s233 + $0x7c] sm:$0xf]
      %v281 = vld [vmem:[%s233 + $0x80] sm:$0xf]
      %v282 = vld [vmem:[%s233 + $0x84] sm:$0xf]
      %v283 = vld [vmem:[%s233 + $0x88] sm:$0xf]
      %v284 = vld [vmem:[%s233 + $0x8c] sm:$0xf]
      %v285 = vld [vmem:[%s233 + $0x90] sm:$0xf]
      %v286 = vld [vmem:[%s233 + $0x94] sm:$0xf]
      %v287 = vld [vmem:[%s233 + $0x98] sm:$0xf]
      %v288 = vld [vmem:[%s233 + $0x9c] sm:$0xf]
      %v289 = vld [vmem:[%s233 + $0xa0] sm:$0xf]
      %v290 = vld [vmem:[%s233 + $0xa4] sm:$0xf]
      %v291 = vld [vmem:[%s233 + $0xa8] sm:$0xf]
      %v292 = vld [vmem:[%s233 + $0xac] sm:$0xf]
      %v293 = vld [vmem:[%s233 + $0xb0] sm:$0xf]
      %v294 = vld [vmem:[%s233 + $0xb4] sm:$0xf]
      %v295 = vld [vmem:[%s233 + $0xb8] sm:$0xf]
      %v296 = vld [vmem:[%s233 + $0xbc] sm:$0xf]
      %v297 = vld [vmem:[%s233 + $0xc0] sm:$0xf]
      %v298 = vld [vmem:[%s233 + $0xc4] sm:$0xf]
      %v299 = vld [vmem:[%s233 + $0xc8] sm:$0xf]
      %v300 = vld [vmem:[%s233 + $0xcc] sm:$0xf]
      %v301 = vld [vmem:[%s233 + $0xd0] sm:$0xf]
      %v302 = vld [vmem:[%s233 + $0xd4] sm:$0xf]
      %v339 = vunpack.c.l.b16 %v249
      %v340 = vunpack.c.l.b16 %v250
      %v341 = vunpack.c.l.b16 %v252
      %v342 = vunpack.c.l.b16 %v253
      %v343 = vunpack.c.l.b16 %v255
      %v344 = vunpack.c.l.b16 %v256
      %v345 = vunpack.c.l.b16 %v258
      %v346 = vunpack.c.l.b16 %v259
      %v347 = vunpack.c.l.b16 %v261
      %v348 = vunpack.c.l.b16 %v262
      %v349 = vunpack.c.l.b16 %v264
      %v350 = vunpack.c.l.b16 %v265
      %v351 = vunpack.c.l.b16 %v267
      %v352 = vunpack.c.l.b16 %v268
      %v353 = vunpack.c.l.b16 %v270
      %v354 = vunpack.c.l.b16 %v271
      %v355 = vunpack.c.l.b16 %v273
      %v356 = vunpack.c.l.b16 %v274
      %v357 = vunpack.c.l.b16 %v276
      %v358 = vunpack.c.l.b16 %v277
      %v359 = vunpack.c.l.b16 %v279
      %v360 = vunpack.c.l.b16 %v280
      %v361 = vunpack.c.l.b16 %v282
      %v362 = vunpack.c.l.b16 %v283
      %v363 = vunpack.c.l.b16 %v285
      %v364 = vunpack.c.l.b16 %v286
      %v365 = vunpack.c.l.b16 %v288
      %v366 = vunpack.c.l.b16 %v289
      %v367 = vunpack.c.l.b16 %v291
      %v368 = vunpack.c.l.b16 %v292
      %v369 = vunpack.c.l.b16 %v294
      %v370 = vunpack.c.l.b16 %v295
      %v371 = vunpack.c.l.b16 %v297
      %v372 = vunpack.c.l.b16 %v298
      %v373 = vunpack.c.l.b16 %v300
      %v374 = vunpack.c.l.b16 %v301
      %v375 = vpack.c.b16 %v340, %v339
      %v376 = vpack.c.b16 %v342, %v341
      %v377 = vpack.c.b16 %v344, %v343
      %v378 = vpack.c.b16 %v346, %v345
      %v379 = vpack.c.b16 %v348, %v347
      %v380 = vpack.c.b16 %v350, %v349
      %v381 = vpack.c.b16 %v352, %v351
      %v382 = vpack.c.b16 %v354, %v353
      %v383 = vpack.c.b16 %v356, %v355
      %v384 = vpack.c.b16 %v358, %v357
      %v385 = vpack.c.b16 %v360, %v359
      %v386 = vpack.c.b16 %v362, %v361
      %v387 = vpack.c.b16 %v364, %v363
      %v388 = vpack.c.b16 %v366, %v365
      %v389 = vpack.c.b16 %v368, %v367
      %v390 = vpack.c.b16 %v370, %v369
      %v391 = vpack.c.b16 %v372, %v371
      %v392 = vpack.c.b16 %v374, %v373
      %v429 = vunpack.c.l.b16 %v251
      %v430 = vunpack.c.l.b16 %v254
      %v431 = vunpack.c.l.b16 %v257
      %v432 = vunpack.c.l.b16 %v260
      %v433 = vunpack.c.l.b16 %v263
      %v434 = vunpack.c.l.b16 %v266
      %v435 = vunpack.c.l.b16 %v269
      %v436 = vunpack.c.l.b16 %v272
      %v437 = vunpack.c.l.b16 %v275
      %v438 = vunpack.c.l.b16 %v278
      %v439 = vunpack.c.l.b16 %v281
      %v440 = vunpack.c.l.b16 %v284
      %v441 = vunpack.c.l.b16 %v287
      %v442 = vunpack.c.l.b16 %v290
      %v443 = vunpack.c.l.b16 %v293
      %v444 = vunpack.c.l.b16 %v296
      %v445 = vunpack.c.l.b16 %v299
      %v446 = vunpack.c.l.b16 %v302
      %v447 = vpack.c.b16 %v429, %v429
      %v448 = vpack.c.b16 %v430, %v430
      %v449 = vpack.c.b16 %v431, %v431
      %v450 = vpack.c.b16 %v432, %v432
      %v451 = vpack.c.b16 %v433, %v433
      %v452 = vpack.c.b16 %v434, %v434
      %v453 = vpack.c.b16 %v435, %v435
      %v454 = vpack.c.b16 %v436, %v436
      %v455 = vpack.c.b16 %v437, %v437
      %v456 = vpack.c.b16 %v438, %v438
      %v457 = vpack.c.b16 %v439, %v439
      %v458 = vpack.c.b16 %v440, %v440
      %v459 = vpack.c.b16 %v441, %v441
      %v460 = vpack.c.b16 %v442, %v442
      %v461 = vpack.c.b16 %v443, %v443
      %v462 = vpack.c.b16 %v444, %v444
      %v463 = vpack.c.b16 %v445, %v445
      %v464 = vpack.c.b16 %v446, %v446
      %vm465 = vsmask.f32 7424
      %v467 = vshrl.u32 %v375, 16
      %v469 = vshll.u32 %v375, 16
      %v471 = vrot.slane %v469, 1
      %v472 = vor.u32 %v467, %v471
      %v474 = vshll.u32 %v447, 16
      %v476 = vrot.slane %v474, 1
      %v477 = vsel %vm465, %v472, %v476
      %v479 = vshrl.u32 %v376, 16
      %v481 = vshll.u32 %v376, 16
      %v483 = vrot.slane %v481, 1
      %v484 = vor.u32 %v479, %v483
      %v486 = vshll.u32 %v448, 16
      %v488 = vrot.slane %v486, 1
      %v489 = vsel %vm465, %v484, %v488
      %v491 = vshrl.u32 %v377, 16
      %v493 = vshll.u32 %v377, 16
      %v495 = vrot.slane %v493, 1
      %v496 = vor.u32 %v491, %v495
      %v498 = vshll.u32 %v449, 16
      %v500 = vrot.slane %v498, 1
      %v501 = vsel %vm465, %v496, %v500
      %v503 = vshrl.u32 %v378, 16
      %v505 = vshll.u32 %v378, 16
      %v507 = vrot.slane %v505, 1
      %v508 = vor.u32 %v503, %v507
      %v510 = vshll.u32 %v450, 16
      %v512 = vrot.slane %v510, 1
      %v513 = vsel %vm465, %v508, %v512
      %v515 = vshrl.u32 %v379, 16
      %v517 = vshll.u32 %v379, 16
      %v519 = vrot.slane %v517, 1
      %v520 = vor.u32 %v515, %v519
      %v522 = vshll.u32 %v451, 16
      %v524 = vrot.slane %v522, 1
      %v525 = vsel %vm465, %v520, %v524
      %v527 = vshrl.u32 %v380, 16
      %v529 = vshll.u32 %v380, 16
      %v531 = vrot.slane %v529, 1
      %v532 = vor.u32 %v527, %v531
      %v534 = vshll.u32 %v452, 16
      %v536 = vrot.slane %v534, 1
      %v537 = vsel %vm465, %v532, %v536
      %v539 = vshrl.u32 %v381, 16
      %v541 = vshll.u32 %v381, 16
      %v543 = vrot.slane %v541, 1
      %v544 = vor.u32 %v539, %v543
      %v546 = vshll.u32 %v453, 16
      %v548 = vrot.slane %v546, 1
      %v549 = vsel %vm465, %v544, %v548
      %v551 = vshrl.u32 %v382, 16
      %v553 = vshll.u32 %v382, 16
      %v555 = vrot.slane %v553, 1
      %v556 = vor.u32 %v551, %v555
      %v558 = vshll.u32 %v454, 16
      %v560 = vrot.slane %v558, 1
      %v561 = vsel %vm465, %v556, %v560
      %v563 = vshrl.u32 %v383, 16
      %v565 = vshll.u32 %v383, 16
      %v567 = vrot.slane %v565, 1
      %v568 = vor.u32 %v563, %v567
      %v570 = vshll.u32 %v455, 16
      %v572 = vrot.slane %v570, 1
      %v573 = vsel %vm465, %v568, %v572
      %v575 = vshrl.u32 %v384, 16
      %v577 = vshll.u32 %v384, 16
      %v579 = vrot.slane %v577, 1
      %v580 = vor.u32 %v575, %v579
      %v582 = vshll.u32 %v456, 16
      %v584 = vrot.slane %v582, 1
      %v585 = vsel %vm465, %v580, %v584
      %v587 = vshrl.u32 %v385, 16
      %v589 = vshll.u32 %v385, 16
      %v591 = vrot.slane %v589, 1
      %v592 = vor.u32 %v587, %v591
      %v594 = vshll.u32 %v457, 16
      %v596 = vrot.slane %v594, 1
      %v597 = vsel %vm465, %v592, %v596
      %v599 = vshrl.u32 %v386, 16
      %v601 = vshll.u32 %v386, 16
      %v603 = vrot.slane %v601, 1
      %v604 = vor.u32 %v599, %v603
      %v606 = vshll.u32 %v458, 16
      %v608 = vrot.slane %v606, 1
      %v609 = vsel %vm465, %v604, %v608
      %v611 = vshrl.u32 %v387, 16
      %v613 = vshll.u32 %v387, 16
      %v615 = vrot.slane %v613, 1
      %v616 = vor.u32 %v611, %v615
      %v618 = vshll.u32 %v459, 16
      %v620 = vrot.slane %v618, 1
      %v621 = vsel %vm465, %v616, %v620
      %v623 = vshrl.u32 %v388, 16
      %v625 = vshll.u32 %v388, 16
      %v627 = vrot.slane %v625, 1
      %v628 = vor.u32 %v623, %v627
      %v630 = vshll.u32 %v460, 16
      %v632 = vrot.slane %v630, 1
      %v633 = vsel %vm465, %v628, %v632
      %v635 = vshrl.u32 %v389, 16
      %v637 = vshll.u32 %v389, 16
      %v639 = vrot.slane %v637, 1
      %v640 = vor.u32 %v635, %v639
      %v642 = vshll.u32 %v461, 16
      %v644 = vrot.slane %v642, 1
      %v645 = vsel %vm465, %v640, %v644
      %v647 = vshrl.u32 %v390, 16
      %v649 = vshll.u32 %v390, 16
      %v651 = vrot.slane %v649, 1
      %v652 = vor.u32 %v647, %v651
      %v654 = vshll.u32 %v462, 16
      %v656 = vrot.slane %v654, 1
      %v657 = vsel %vm465, %v652, %v656
      %v659 = vshrl.u32 %v391, 16
      %v661 = vshll.u32 %v391, 16
      %v663 = vrot.slane %v661, 1
      %v664 = vor.u32 %v659, %v663
      %v666 = vshll.u32 %v463, 16
      %v668 = vrot.slane %v666, 1
      %v669 = vsel %vm465, %v664, %v668
      %v671 = vshrl.u32 %v392, 16
      %v673 = vshll.u32 %v392, 16
      %v675 = vrot.slane %v673, 1
      %v676 = vor.u32 %v671, %v675
      %v678 = vshll.u32 %v464, 16
      %v680 = vrot.slane %v678, 1
      %v681 = vsel %vm465, %v676, %v680
      %vm700 = vcmask 1046528
      %v701 = vrot.slane %v375, 1
      %v702 = vrot.slane %v447, 1
      %v703 = vsel %vm700, %v701, %v702
      %v704 = vrot.slane %v376, 1
      %v705 = vrot.slane %v448, 1
      %v706 = vsel %vm700, %v704, %v705
      %v707 = vrot.slane %v377, 1
      %v708 = vrot.slane %v449, 1
      %v709 = vsel %vm700, %v707, %v708
      %v710 = vrot.slane %v378, 1
      %v711 = vrot.slane %v450, 1
      %v712 = vsel %vm700, %v710, %v711
      %v713 = vrot.slane %v379, 1
      %v714 = vrot.slane %v451, 1
      %v715 = vsel %vm700, %v713, %v714
      %v716 = vrot.slane %v380, 1
      %v717 = vrot.slane %v452, 1
      %v718 = vsel %vm700, %v716, %v717
      %v719 = vrot.slane %v381, 1
      %v720 = vrot.slane %v453, 1
      %v721 = vsel %vm700, %v719, %v720
      %v722 = vrot.slane %v382, 1
      %v723 = vrot.slane %v454, 1
      %v724 = vsel %vm700, %v722, %v723
      %v725 = vrot.slane %v383, 1
      %v726 = vrot.slane %v455, 1
      %v727 = vsel %vm700, %v725, %v726
      %v728 = vrot.slane %v384, 1
      %v729 = vrot.slane %v456, 1
      %v730 = vsel %vm700, %v728, %v729
      %v731 = vrot.slane %v385, 1
      %v732 = vrot.slane %v457, 1
      %v733 = vsel %vm700, %v731, %v732
      %v734 = vrot.slane %v386, 1
      %v735 = vrot.slane %v458, 1
      %v736 = vsel %vm700, %v734, %v735
      %v737 = vrot.slane %v387, 1
      %v738 = vrot.slane %v459, 1
      %v739 = vsel %vm700, %v737, %v738
      %v740 = vrot.slane %v388, 1
      %v741 = vrot.slane %v460, 1
      %v742 = vsel %vm700, %v740, %v741
      %v743 = vrot.slane %v389, 1
      %v744 = vrot.slane %v461, 1
      %v745 = vsel %vm700, %v743, %v744
      %v746 = vrot.slane %v390, 1
      %v747 = vrot.slane %v462, 1
      %v748 = vsel %vm700, %v746, %v747
      %v749 = vrot.slane %v391, 1
      %v750 = vrot.slane %v463, 1
      %v751 = vsel %vm700, %v749, %v750
      %v752 = vrot.slane %v392, 1
      %v753 = vrot.slane %v464, 1
      %v754 = vsel %vm700, %v752, %v753
      %v773 = vld [vmem:[%s1] sm:$0xf]
      %v774 = vld [vmem:[%s1 + $0x4] sm:$0xf]
      %v775 = vld [vmem:[%s1 + $0x8] sm:$0xf]
      %v776 = vld [vmem:[%s1 + $0xc] sm:$0xf]
      %v777 = vld [vmem:[%s1 + $0x10] sm:$0xf]
      %v778 = vld [vmem:[%s1 + $0x14] sm:$0xf]
      %v779 = vld [vmem:[%s1 + $0x18] sm:$0xf]
      %v780 = vld [vmem:[%s1 + $0x1c] sm:$0xf]
      %v781 = vld [vmem:[%s1 + $0x20] sm:$0xf]
      %v782 = vld [vmem:[%s1 + $0x24] sm:$0xf]
      %v783 = vld [vmem:[%s1 + $0x28] sm:$0xf]
      %v784 = vld [vmem:[%s1 + $0x2c] sm:$0xf]
      %v785 = vld [vmem:[%s1 + $0x30] sm:$0xf]
      %v786 = vld [vmem:[%s1 + $0x34] sm:$0xf]
      %v787 = vld [vmem:[%s1 + $0x38] sm:$0xf]
      %v788 = vld [vmem:[%s1 + $0x3c] sm:$0xf]
      %v789 = vld [vmem:[%s1 + $0x40] sm:$0xf]
      %v790 = vld [vmem:[%s1 + $0x44] sm:$0xf]
      %v791 = vld [vmem:[%s1 + $0x48] sm:$0xf]
      %v792 = vld [vmem:[%s1 + $0x4c] sm:$0xf]
      %v793 = vld [vmem:[%s1 + $0x50] sm:$0xf]
      %v794 = vld [vmem:[%s1 + $0x54] sm:$0xf]
      %v795 = vld [vmem:[%s1 + $0x58] sm:$0xf]
      %v796 = vld [vmem:[%s1 + $0x5c] sm:$0xf]
      %v797 = vld [vmem:[%s1 + $0x60] sm:$0xf]
      %v798 = vld [vmem:[%s1 + $0x64] sm:$0xf]
      %v799 = vld [vmem:[%s1 + $0x68] sm:$0xf]
      %v800 = vld [vmem:[%s1 + $0x6c] sm:$0xf]
      %v801 = vld [vmem:[%s1 + $0x70] sm:$0xf]
      %v802 = vld [vmem:[%s1 + $0x74] sm:$0xf]
      %v803 = vld [vmem:[%s1 + $0x78] sm:$0xf]
      %v804 = vld [vmem:[%s1 + $0x7c] sm:$0xf]
      %v805 = vld [vmem:[%s1 + $0x80] sm:$0xf]
      %v806 = vld [vmem:[%s1 + $0x84] sm:$0xf]
      %v807 = vld [vmem:[%s1 + $0x88] sm:$0xf]
      %v808 = vld [vmem:[%s1 + $0x8c] sm:$0xf]
      %v809 = vld [vmem:[%s1 + $0x90] sm:$0xf]
      %v810 = vld [vmem:[%s1 + $0x94] sm:$0xf]
      %v811 = vld [vmem:[%s1 + $0x98] sm:$0xf]
      %v812 = vld [vmem:[%s1 + $0x9c] sm:$0xf]
      %v813 = vld [vmem:[%s1 + $0xa0] sm:$0xf]
      %v814 = vld [vmem:[%s1 + $0xa4] sm:$0xf]
      %v815 = vld [vmem:[%s1 + $0xa8] sm:$0xf]
      %v816 = vld [vmem:[%s1 + $0xac] sm:$0xf]
      %v817 = vld [vmem:[%s1 + $0xb0] sm:$0xf]
      %v818 = vld [vmem:[%s1 + $0xb4] sm:$0xf]
      %v819 = vld [vmem:[%s1 + $0xb8] sm:$0xf]
      %v820 = vld [vmem:[%s1 + $0xbc] sm:$0xf]
      %s821 = scalar_lea.vmem %s1, 192
      %v822 = vld [vmem:[%s821] sm:$0xf]
      %v823 = vld [vmem:[%s821 + $0x4] sm:$0xf]
      %v824 = vld [vmem:[%s821 + $0x8] sm:$0xf]
      %v825 = vld [vmem:[%s821 + $0xc] sm:$0xf]
      %v826 = vld [vmem:[%s821 + $0x10] sm:$0xf]
      %v827 = vld [vmem:[%s821 + $0x14] sm:$0xf]
      %v828 = vld [vmem:[%s821 + $0x18] sm:$0xf]
      %v829 = vld [vmem:[%s821 + $0x1c] sm:$0xf]
      %v830 = vld [vmem:[%s821 + $0x20] sm:$0xf]
      %v831 = vld [vmem:[%s821 + $0x24] sm:$0xf]
      %v832 = vld [vmem:[%s821 + $0x28] sm:$0xf]
      %v833 = vld [vmem:[%s821 + $0x2c] sm:$0xf]
      %v834 = vld [vmem:[%s821 + $0x30] sm:$0xf]
      %v835 = vld [vmem:[%s821 + $0x34] sm:$0xf]
      %v836 = vld [vmem:[%s821 + $0x38] sm:$0xf]
      %v837 = vld [vmem:[%s821 + $0x3c] sm:$0xf]
      %v838 = vld [vmem:[%s821 + $0x40] sm:$0xf]
      %v839 = vld [vmem:[%s821 + $0x44] sm:$0xf]
      %v840 = vld [vmem:[%s821 + $0x48] sm:$0xf]
      %v841 = vld [vmem:[%s821 + $0x4c] sm:$0xf]
      %v842 = vld [vmem:[%s821 + $0x50] sm:$0xf]
      %v843 = vld [vmem:[%s821 + $0x54] sm:$0xf]
      %v844 = vld [vmem:[%s821 + $0x58] sm:$0xf]
      %v845 = vld [vmem:[%s821 + $0x5c] sm:$0xf]
      %v846 = vld [vmem:[%s821 + $0x60] sm:$0xf]
      %v847 = vld [vmem:[%s821 + $0x64] sm:$0xf]
      %v848 = vld [vmem:[%s821 + $0x68] sm:$0xf]
      %v849 = vld [vmem:[%s821 + $0x6c] sm:$0xf]
      %v850 = vld [vmem:[%s821 + $0x70] sm:$0xf]
      %v851 = vld [vmem:[%s821 + $0x74] sm:$0xf]
      %v852 = vld [vmem:[%s821 + $0x78] sm:$0xf]
      %v853 = vld [vmem:[%s821 + $0x7c] sm:$0xf]
      %v854 = vld [vmem:[%s821 + $0x80] sm:$0xf]
      %v855 = vld [vmem:[%s821 + $0x84] sm:$0xf]
      %v856 = vld [vmem:[%s821 + $0x88] sm:$0xf]
      %v857 = vld [vmem:[%s821 + $0x8c] sm:$0xf]
      %v858 = vld [vmem:[%s821 + $0x90] sm:$0xf]
      %v859 = vld [vmem:[%s821 + $0x94] sm:$0xf]
      %v860 = vld [vmem:[%s821 + $0x98] sm:$0xf]
      %v861 = vld [vmem:[%s821 + $0x9c] sm:$0xf]
      %v862 = vld [vmem:[%s821 + $0xa0] sm:$0xf]
      %v863 = vld [vmem:[%s821 + $0xa4] sm:$0xf]
      %v864 = vld [vmem:[%s821 + $0xa8] sm:$0xf]
      %v865 = vld [vmem:[%s821 + $0xac] sm:$0xf]
      %v866 = vld [vmem:[%s821 + $0xb0] sm:$0xf]
      %v867 = vld [vmem:[%s821 + $0xb4] sm:$0xf]
      %v868 = vld [vmem:[%s821 + $0xb8] sm:$0xf]
      %v869 = vld [vmem:[%s821 + $0xbc] sm:$0xf]
      %v918 = vunpack.c.l.b16 %v822
      %v919 = vunpack.c.l.b16 %v823
      %v920 = vunpack.c.l.b16 %v824
      %v921 = vunpack.c.l.b16 %v825
      %v922 = vunpack.c.l.b16 %v826
      %v923 = vunpack.c.l.b16 %v827
      %v924 = vunpack.c.l.b16 %v828
      %v925 = vunpack.c.l.b16 %v829
      %v926 = vunpack.c.l.b16 %v830
      %v927 = vunpack.c.l.b16 %v831
      %v928 = vunpack.c.l.b16 %v832
      %v929 = vunpack.c.l.b16 %v833
      %v930 = vunpack.c.l.b16 %v834
      %v931 = vunpack.c.l.b16 %v835
      %v932 = vunpack.c.l.b16 %v836
      %v933 = vunpack.c.l.b16 %v837
      %v934 = vunpack.c.l.b16 %v838
      %v935 = vunpack.c.l.b16 %v839
      %v936 = vunpack.c.l.b16 %v840
      %v937 = vunpack.c.l.b16 %v841
      %v938 = vunpack.c.l.b16 %v842
      %v939 = vunpack.c.l.b16 %v843
      %v940 = vunpack.c.l.b16 %v844
      %v941 = vunpack.c.l.b16 %v845
      %v942 = vunpack.c.l.b16 %v846
      %v943 = vunpack.c.l.b16 %v847
      %v944 = vunpack.c.l.b16 %v848
      %v945 = vunpack.c.l.b16 %v849
      %v946 = vunpack.c.l.b16 %v850
      %v947 = vunpack.c.l.b16 %v851
      %v948 = vunpack.c.l.b16 %v852
      %v949 = vunpack.c.l.b16 %v853
      %v950 = vunpack.c.l.b16 %v854
      %v951 = vunpack.c.l.b16 %v855
      %v952 = vunpack.c.l.b16 %v856
      %v953 = vunpack.c.l.b16 %v857
      %v954 = vunpack.c.l.b16 %v858
      %v955 = vunpack.c.l.b16 %v859
      %v956 = vunpack.c.l.b16 %v860
      %v957 = vunpack.c.l.b16 %v861
      %v958 = vunpack.c.l.b16 %v862
      %v959 = vunpack.c.l.b16 %v863
      %v960 = vunpack.c.l.b16 %v864
      %v961 = vunpack.c.l.b16 %v865
      %v962 = vunpack.c.l.b16 %v866
      %v963 = vunpack.c.l.b16 %v867
      %v964 = vunpack.c.l.b16 %v868
      %v965 = vunpack.c.l.b16 %v869
      %v966 = vpack.c.b16 %v919, %v918
      %v967 = vpack.c.b16 %v921, %v920
      %v968 = vpack.c.b16 %v923, %v922
      %v969 = vpack.c.b16 %v925, %v924
      %v970 = vpack.c.b16 %v927, %v926
      %v971 = vpack.c.b16 %v929, %v928
      %v972 = vpack.c.b16 %v931, %v930
      %v973 = vpack.c.b16 %v933, %v932
      %v974 = vpack.c.b16 %v935, %v934
      %v975 = vpack.c.b16 %v937, %v936
      %v976 = vpack.c.b16 %v939, %v938
      %v977 = vpack.c.b16 %v941, %v940
      %v978 = vpack.c.b16 %v943, %v942
      %v979 = vpack.c.b16 %v945, %v944
      %v980 = vpack.c.b16 %v947, %v946
      %v981 = vpack.c.b16 %v949, %v948
      %v982 = vpack.c.b16 %v951, %v950
      %v983 = vpack.c.b16 %v953, %v952
      %v984 = vpack.c.b16 %v955, %v954
      %v985 = vpack.c.b16 %v957, %v956
      %v986 = vpack.c.b16 %v959, %v958
      %v987 = vpack.c.b16 %v961, %v960
      %v988 = vpack.c.b16 %v963, %v962
      %v989 = vpack.c.b16 %v965, %v964
      %1014 = vmatprep.subr.bf16.mxu0 0
      %1015 = vmatpush1.bf16.msra.mxu0 %v966
      %1016 = vmatprep.subr.bf16.mxu0 0
      %1017 = vmatpush1.bf16.msra.mxu0 %v967
      %1018 = vmatprep.subr.bf16.mxu0 0
      %1019 = vmatpush1.bf16.msra.mxu0 %v968
      %1020 = vmatprep.subr.bf16.mxu0 0
      %1021 = vmatpush1.bf16.msra.mxu0 %v969
      %1022 = vmatprep.subr.bf16.mxu0 0
      %1023 = vmatpush1.bf16.msra.mxu0 %v970
      %1024 = vmatprep.subr.bf16.mxu0 0
      %1025 = vmatpush1.bf16.msra.mxu0 %v971
      %1026 = vmatprep.subr.bf16.mxu0 0
      %1027 = vmatpush1.bf16.msra.mxu0 %v972
      %1028 = vmatprep.subr.bf16.mxu0 0
      %1029 = vmatpush1.bf16.msra.mxu0 %v973
      %1030 = vmatprep.subr.bf16.mxu0 0
      %1031 = vmatpush1.bf16.msra.mxu0 %v974
      %1032 = vmatprep.subr.bf16.mxu0 0
      %1033 = vmatpush1.bf16.msra.mxu0 %v975
      %1034 = vmatprep.subr.bf16.mxu0 0
      %1035 = vmatpush1.bf16.msra.mxu0 %v976
      %1036 = vmatprep.subr.bf16.mxu0 0
      %1037 = vmatpush1.bf16.msra.mxu0 %v977
      %1038 = vmatprep.subr.bf16.mxu0 0
      %1039 = vmatpush1.bf16.msra.mxu0 %v978
      %1040 = vmatprep.subr.bf16.mxu0 0
      %1041 = vmatpush1.bf16.msra.mxu0 %v979
      %1042 = vmatprep.subr.bf16.mxu0 0
      %1043 = vmatpush1.bf16.msra.mxu0 %v980
      %1044 = vmatprep.subr.bf16.mxu0 0
      %1045 = vmatpush1.bf16.msra.mxu0 %v981
      %1046 = vmatprep.mubr.bf16.mxu0 %v489
      %1047 = vmatmul.mubr.bf16.gmra.mrb[0].mxu0 %v376
      %v1048 = vpop.f32.mrb[0].mxu0
      %v1049 = vadd.f32 0.0, %v1048
      %v1050 = vpop.f32.mrb[0].mxu0
      %v1051 = vpop.f32.mrb[0].mxu0
      %v1052 = vadd.f32 0.0, %v1051
      %v1053 = vpop.f32.mrb[0].mxu0
      %1054 = vmatprep.mubr.bf16.mxu0 %v501
      %1055 = vmatmul.mubr.bf16.gmra.mrb[0].mxu0 %v377
      %v1056 = vpop.f32.mrb[0].mxu0
      %v1057 = vadd.f32 0.0, %v1056
      %v1058 = vpop.f32.mrb[0].mxu0
      %v1059 = vpop.f32.mrb[0].mxu0
      %v1060 = vadd.f32 0.0, %v1059
      %v1061 = vpop.f32.mrb[0].mxu0
      %1062 = vmatprep.mubr.bf16.mxu0 %v513
      %1063 = vmatmul.mubr.bf16.gmra.mrb[0].mxu0 %v378
      %v1064 = vpop.f32.mrb[0].mxu0
      %v1065 = vadd.f32 0.0, %v1064
      %v1066 = vpop.f32.mrb[0].mxu0
      %v1067 = vpop.f32.mrb[0].mxu0
      %v1068 = vadd.f32 0.0, %v1067
      %v1069 = vpop.f32.mrb[0].mxu0
      %1070 = vmatprep.mubr.bf16.mxu0 %v525
      %1071 = vmatmul.mubr.bf16.gmra.mrb[0].mxu0 %v379
      %v1072 = vpop.f32.mrb[0].mxu0
      %v1073 = vadd.f32 0.0, %v1072
      %v1074 = vpop.f32.mrb[0].mxu0
      %v1075 = vpop.f32.mrb[0].mxu0
      %v1076 = vadd.f32 0.0, %v1075
      %v1077 = vpop.f32.mrb[0].mxu0
      %1078 = vmatprep.mubr.bf16.mxu0 %v537
      %1079 = vmatmul.mubr.bf16.gmra.mrb[0].mxu0 %v380
      %v1080 = vpop.f32.mrb[0].mxu0
      %v1081 = vadd.f32 0.0, %v1080
      %v1082 = vpop.f32.mrb[0].mxu0
      %v1083 = vpop.f32.mrb[0].mxu0
      %v1084 = vadd.f32 0.0, %v1083
      %v1085 = vpop.f32.mrb[0].mxu0
      %1086 = vmatprep.mubr.bf16.mxu0 %v549
      %1087 = vmatmul.mubr.bf16.gmra.mrb[0].mxu0 %v381
      %v1088 = vpop.f32.mrb[0].mxu0
      %v1089 = vadd.f32 0.0, %v1088
      %v1090 = vpop.f32.mrb[0].mxu0
      %v1091 = vpop.f32.mrb[0].mxu0
      %v1092 = vadd.f32 0.0, %v1091
      %v1093 = vpop.f32.mrb[0].mxu0
      %1094 = vmatprep.mubr.bf16.mxu0 %v561
      %1095 = vmatmul.mubr.bf16.gmra.mrb[0].mxu0 %v382
      %v1096 = vpop.f32.mrb[0].mxu0
      %v1097 = vadd.f32 0.0, %v1096
      %v1098 = vpop.f32.mrb[0].mxu0
      %v1099 = vpop.f32.mrb[0].mxu0
      %v1100 = vadd.f32 0.0, %v1099
      %v1101 = vpop.f32.mrb[0].mxu0
      %1102 = vmatprep.mubr.bf16.mxu0 %v573
      %1103 = vmatmul.mubr.bf16.gmra.mrb[0].mxu0 %v383
      %v1104 = vpop.f32.mrb[0].mxu0
      %v1105 = vadd.f32 0.0, %v1104
      %v1106 = vpop.f32.mrb[0].mxu0
      %v1107 = vpop.f32.mrb[0].mxu0
      %v1108 = vadd.f32 0.0, %v1107
      %v1109 = vpop.f32.mrb[0].mxu0
      %1110 = vmatprep.mubr.bf16.mxu0 %v585
      %1111 = vmatmul.mubr.bf16.gmra.mrb[0].mxu0 %v384
      %v1112 = vpop.f32.mrb[0].mxu0
      %v1113 = vadd.f32 0.0, %v1112
      %v1114 = vpop.f32.mrb[0].mxu0
      %v1115 = vpop.f32.mrb[0].mxu0
      %v1116 = vadd.f32 0.0, %v1115
      %v1117 = vpop.f32.mrb[0].mxu0
      %1118 = vmatprep.mubr.bf16.mxu0 %v597
      %1119 = vmatmul.mubr.bf16.gmra.mrb[0].mxu0 %v385
      %v1120 = vpop.f32.mrb[0].mxu0
      %v1121 = vadd.f32 0.0, %v1120
      %v1122 = vpop.f32.mrb[0].mxu0
      %v1123 = vpop.f32.mrb[0].mxu0
      %v1124 = vadd.f32 0.0, %v1123
      %v1125 = vpop.f32.mrb[0].mxu0
      %1126 = vmatprep.mubr.bf16.mxu0 %v609
      %1127 = vmatmul.mubr.bf16.gmra.mrb[0].mxu0 %v386
      %v1128 = vpop.f32.mrb[0].mxu0
      %v1129 = vadd.f32 0.0, %v1128
      %v1130 = vpop.f32.mrb[0].mxu0
      %v1131 = vpop.f32.mrb[0].mxu0
      %v1132 = vadd.f32 0.0, %v1131
      %v1133 = vpop.f32.mrb[0].mxu0
      %1134 = vmatprep.mubr.bf16.mxu0 %v621
      %1135 = vmatmul.mubr.bf16.gmra.mrb[0].mxu0 %v387
      %v1136 = vpop.f32.mrb[0].mxu0
      %v1137 = vadd.f32 0.0, %v1136
      %v1138 = vpop.f32.mrb[0].mxu0
      %v1139 = vpop.f32.mrb[0].mxu0
      %v1140 = vadd.f32 0.0, %v1139
      %v1141 = vpop.f32.mrb[0].mxu0
      %1142 = vmatprep.mubr.bf16.mxu0 %v633
      %1143 = vmatmul.mubr.bf16.gmra.mrb[0].mxu0 %v388
      %v1144 = vpop.f32.mrb[0].mxu0
      %v1145 = vadd.f32 0.0, %v1144
      %v1146 = vpop.f32.mrb[0].mxu0
      %v1147 = vpop.f32.mrb[0].mxu0
      %v1148 = vadd.f32 0.0, %v1147
      %v1149 = vpop.f32.mrb[0].mxu0
      %1150 = vmatprep.mubr.bf16.mxu0 %v645
      %1151 = vmatmul.mubr.bf16.gmra.mrb[0].mxu0 %v389
      %v1152 = vpop.f32.mrb[0].mxu0
      %v1153 = vadd.f32 0.0, %v1152
      %v1154 = vpop.f32.mrb[0].mxu0
      %v1155 = vpop.f32.mrb[0].mxu0
      %v1156 = vadd.f32 0.0, %v1155
      %v1157 = vpop.f32.mrb[0].mxu0
      %1158 = vmatprep.mubr.bf16.mxu0 %v657
      %1159 = vmatmul.mubr.bf16.gmra.mrb[0].mxu0 %v390
      %v1160 = vpop.f32.mrb[0].mxu0
      %v1161 = vadd.f32 0.0, %v1160
      %v1162 = vpop.f32.mrb[0].mxu0
      %v1163 = vpop.f32.mrb[0].mxu0
      %v1164 = vadd.f32 0.0, %v1163
      %v1165 = vpop.f32.mrb[0].mxu0
      %1166 = vmatprep.mubr.bf16.mxu0 %v669
      %1167 = vmatmul.mubr.bf16.gmra.mrb[0].mxu0 %v391
      %v1168 = vpop.f32.mrb[0].mxu0
      %v1169 = vadd.f32 0.0, %v1168
      %v1170 = vpop.f32.mrb[0].mxu0
      %v1171 = vpop.f32.mrb[0].mxu0
      %v1172 = vadd.f32 0.0, %v1171
      %v1173 = vpop.f32.mrb[0].mxu0
      %1174 = vdwg.mxu0
      %1175 = vmatprep.subr.bf16.mxu0 0
      %1176 = vmatpush1.bf16.msra.mxu0 %v982
      %1177 = vmatprep.subr.bf16.mxu0 0
      %1178 = vmatpush1.bf16.msra.mxu0 %v983
      %1179 = vmatprep.subr.bf16.mxu0 0
      %1180 = vmatpush1.bf16.msra.mxu0 %v984
      %1181 = vmatprep.subr.bf16.mxu0 0
      %1182 = vmatpush1.bf16.msra.mxu0 %v985
      %1183 = vmatprep.subr.bf16.mxu0 0
      %1184 = vmatpush1.bf16.msra.mxu0 %v986
      %1185 = vmatprep.subr.bf16.mxu0 0
      %1186 = vmatpush1.bf16.msra.mxu0 %v987
      %1187 = vmatprep.subr.bf16.mxu0 0
      %1188 = vmatpush1.bf16.msra.mxu0 %v988
      %1189 = vmatprep.subr.bf16.mxu0 0
      %1190 = vmatpush1.bf16.msra.mxu0 %v989
      %1191 = vmatprep.subr.bf16.mxu0 0
      %1192 = vmatpush1.bf16.msra.mxu0 0
      %1193 = vmatprep.subr.bf16.mxu0 0
      %1194 = vmatpush1.bf16.msra.mxu0 0
      %1195 = vmatprep.subr.bf16.mxu0 0
      %1196 = vmatpush1.bf16.msra.mxu0 0
      %1197 = vmatprep.subr.bf16.mxu0 0
      %1198 = vmatpush1.bf16.msra.mxu0 0
      %1199 = vmatprep.subr.bf16.mxu0 0
      %1200 = vmatpush1.bf16.msra.mxu0 0
      %1201 = vmatprep.subr.bf16.mxu0 0
      %1202 = vmatpush1.bf16.msra.mxu0 0
      %1203 = vmatprep.subr.bf16.mxu0 0
      %1204 = vmatpush1.bf16.msra.mxu0 0
      %1205 = vmatprep.subr.bf16.mxu0 0
      %1206 = vmatpush1.bf16.msra.mxu0 0
      %1207 = vmatprep.mubr.bf16.mxu0 0
      %1208 = vmatmul.mubr.bf16.gmra.mrb[0].mxu0 %v706
      %v1209 = vpop.f32.mrb[0].mxu0
      %v1210 = vadd.f32 %v1049, %v1209
      %v1211 = vpop.f32.mrb[0].mxu0
      %v1212 = vpop.f32.mrb[0].mxu0
      %v1213 = vadd.f32 %v1052, %v1212
      %v1214 = vpop.f32.mrb[0].mxu0
      %1215 = vmatprep.mubr.bf16.mxu0 0
      %1216 = vmatmul.mubr.bf16.gmra.mrb[0].mxu0 %v709
      %v1217 = vpop.f32.mrb[0].mxu0
      %v1218 = vadd.f32 %v1057, %v1217
      %v1219 = vpop.f32.mrb[0].mxu0
      %v1220 = vpop.f32.mrb[0].mxu0
      %v1221 = vadd.f32 %v1060, %v1220
      %v1222 = vpop.f32.mrb[0].mxu0
      %1223 = vmatprep.mubr.bf16.mxu0 0
      %1224 = vmatmul.mubr.bf16.gmra.mrb[0].mxu0 %v712
      %v1225 = vpop.f32.mrb[0].mxu0
      %v1226 = vadd.f32 %v1065, %v1225
      %v1227 = vpop.f32.mrb[0].mxu0
      %v1228 = vpop.f32.mrb[0].mxu0
      %v1229 = vadd.f32 %v1068, %v1228
      %v1230 = vpop.f32.mrb[0].mxu0
      %1231 = vmatprep.mubr.bf16.mxu0 0
      %1232 = vmatmul.mubr.bf16.gmra.mrb[0].mxu0 %v715
      %v1233 = vpop.f32.mrb[0].mxu0
      %v1234 = vadd.f32 %v1073, %v1233
      %v1235 = vpop.f32.mrb[0].mxu0
      %v1236 = vpop.f32.mrb[0].mxu0
      %v1237 = vadd.f32 %v1076, %v1236
      %v1238 = vpop.f32.mrb[0].mxu0
      %1239 = vmatprep.mubr.bf16.mxu0 0
      %1240 = vmatmul.mubr.bf16.gmra.mrb[0].mxu0 %v718
      %v1241 = vpop.f32.mrb[0].mxu0
      %v1242 = vadd.f32 %v1081, %v1241
      %v1243 = vpop.f32.mrb[0].mxu0
      %v1244 = vpop.f32.mrb[0].mxu0
      %v1245 = vadd.f32 %v1084, %v1244
      %v1246 = vpop.f32.mrb[0].mxu0
      %1247 = vmatprep.mubr.bf16.mxu0 0
      %1248 = vmatmul.mubr.bf16.gmra.mrb[0].mxu0 %v721
      %v1249 = vpop.f32.mrb[0].mxu0
      %v1250 = vadd.f32 %v1089, %v1249
      %v1251 = vpop.f32.mrb[0].mxu0
      %v1252 = vpop.f32.mrb[0].mxu0
      %v1253 = vadd.f32 %v1092, %v1252
      %v1254 = vpop.f32.mrb[0].mxu0
      %1255 = vmatprep.mubr.bf16.mxu0 0
      %1256 = vmatmul.mubr.bf16.gmra.mrb[0].mxu0 %v724
      %v1257 = vpop.f32.mrb[0].mxu0
      %v1258 = vadd.f32 %v1097, %v1257
      %v1259 = vpop.f32.mrb[0].mxu0
      %v1260 = vpop.f32.mrb[0].mxu0
      %v1261 = vadd.f32 %v1100, %v1260
      %v1262 = vpop.f32.mrb[0].mxu0
      %1263 = vmatprep.mubr.bf16.mxu0 0
      %1264 = vmatmul.mubr.bf16.gmra.mrb[0].mxu0 %v727
      %v1265 = vpop.f32.mrb[0].mxu0
      %v1266 = vadd.f32 %v1105, %v1265
      %v1267 = vpop.f32.mrb[0].mxu0
      %v1268 = vpop.f32.mrb[0].mxu0
      %v1269 = vadd.f32 %v1108, %v1268
      %v1270 = vpop.f32.mrb[0].mxu0
      %1271 = vmatprep.mubr.bf16.mxu0 0
      %1272 = vmatmul.mubr.bf16.gmra.mrb[0].mxu0 %v730
      %v1273 = vpop.f32.mrb[0].mxu0
      %v1274 = vadd.f32 %v1113, %v1273
      %v1275 = vpop.f32.mrb[0].mxu0
      %v1276 = vpop.f32.mrb[0].mxu0
      %v1277 = vadd.f32 %v1116, %v1276
      %v1278 = vpop.f32.mrb[0].mxu0
      %1279 = vmatprep.mubr.bf16.mxu0 0
      %1280 = vmatmul.mubr.bf16.gmra.mrb[0].mxu0 %v733
      %v1281 = vpop.f32.mrb[0].mxu0
      %v1282 = vadd.f32 %v1121, %v1281
      %v1283 = vpop.f32.mrb[0].mxu0
      %v1284 = vpop.f32.mrb[0].mxu0
      %v1285 = vadd.f32 %v1124, %v1284
      %v1286 = vpop.f32.mrb[0].mxu0
      %1287 = vmatprep.mubr.bf16.mxu0 0
      %1288 = vmatmul.mubr.bf16.gmra.mrb[0].mxu0 %v736
      %v1289 = vpop.f32.mrb[0].mxu0
      %v1290 = vadd.f32 %v1129, %v1289
      %v1291 = vpop.f32.mrb[0].mxu0
      %v1292 = vpop.f32.mrb[0].mxu0
      %v1293 = vadd.f32 %v1132, %v1292
      %v1294 = vpop.f32.mrb[0].mxu0
      %1295 = vmatprep.mubr.bf16.mxu0 0
      %1296 = vmatmul.mubr.bf16.gmra.mrb[0].mxu0 %v739
      %v1297 = vpop.f32.mrb[0].mxu0
      %v1298 = vadd.f32 %v1137, %v1297
      %v1299 = vpop.f32.mrb[0].mxu0
      %v1300 = vpop.f32.mrb[0].mxu0
      %v1301 = vadd.f32 %v1140, %v1300
      %v1302 = vpop.f32.mrb[0].mxu0
      %1303 = vmatprep.mubr.bf16.mxu0 0
      %1304 = vmatmul.mubr.bf16.gmra.mrb[0].mxu0 %v742
      %v1305 = vpop.f32.mrb[0].mxu0
      %v1306 = vadd.f32 %v1145, %v1305
      %v1307 = vpop.f32.mrb[0].mxu0
      %v1308 = vpop.f32.mrb[0].mxu0
      %v1309 = vadd.f32 %v1148, %v1308
      %v1310 = vpop.f32.mrb[0].mxu0
      %1311 = vmatprep.mubr.bf16.mxu0 0
      %1312 = vmatmul.mubr.bf16.gmra.mrb[0].mxu0 %v745
      %v1313 = vpop.f32.mrb[0].mxu0
      %v1314 = vadd.f32 %v1153, %v1313
      %v1315 = vpop.f32.mrb[0].mxu0
      %v1316 = vpop.f32.mrb[0].mxu0
      %v1317 = vadd.f32 %v1156, %v1316
      %v1318 = vpop.f32.mrb[0].mxu0
      %1319 = vmatprep.mubr.bf16.mxu0 0
      %1320 = vmatmul.mubr.bf16.gmra.mrb[0].mxu0 %v748
      %v1321 = vpop.f32.mrb[0].mxu0
      %v1322 = vadd.f32 %v1161, %v1321
      %v1323 = vpop.f32.mrb[0].mxu0
      %v1324 = vpop.f32.mrb[0].mxu0
      %v1325 = vadd.f32 %v1164, %v1324
      %v1326 = vpop.f32.mrb[0].mxu0
      %1327 = vmatprep.mubr.bf16.mxu0 0
      %1328 = vmatmul.mubr.bf16.gmra.mrb[0].mxu0 %v751
      %v1329 = vpop.f32.mrb[0].mxu0
      %v1330 = vadd.f32 %v1169, %v1329
      %v1331 = vpop.f32.mrb[0].mxu0
      %v1332 = vpop.f32.mrb[0].mxu0
      %v1333 = vadd.f32 %v1172, %v1332
      %v1334 = vpop.f32.mrb[0].mxu0
      %1335 = vdwg.mxu0
      %v1384 = vunpack.c.l.b16 %v773
      %v1385 = vunpack.c.l.b16 %v774
      %v1386 = vunpack.c.l.b16 %v775
      %v1387 = vunpack.c.l.b16 %v776
      %v1388 = vunpack.c.l.b16 %v777
      %v1389 = vunpack.c.l.b16 %v778
      %v1390 = vunpack.c.l.b16 %v779
      %v1391 = vunpack.c.l.b16 %v780
      %v1392 = vunpack.c.l.b16 %v781
      %v1393 = vunpack.c.l.b16 %v782
      %v1394 = vunpack.c.l.b16 %v783
      %v1395 = vunpack.c.l.b16 %v784
      %v1396 = vunpack.c.l.b16 %v785
      %v1397 = vunpack.c.l.b16 %v786
      %v1398 = vunpack.c.l.b16 %v787
      %v1399 = vunpack.c.l.b16 %v788
      %v1400 = vunpack.c.l.b16 %v789
      %v1401 = vunpack.c.l.b16 %v790
      %v1402 = vunpack.c.l.b16 %v791
      %v1403 = vunpack.c.l.b16 %v792
      %v1404 = vunpack.c.l.b16 %v793
      %v1405 = vunpack.c.l.b16 %v794
      %v1406 = vunpack.c.l.b16 %v795
      %v1407 = vunpack.c.l.b16 %v796
      %v1408 = vunpack.c.l.b16 %v797
      %v1409 = vunpack.c.l.b16 %v798
      %v1410 = vunpack.c.l.b16 %v799
      %v1411 = vunpack.c.l.b16 %v800
      %v1412 = vunpack.c.l.b16 %v801
      %v1413 = vunpack.c.l.b16 %v802
      %v1414 = vunpack.c.l.b16 %v803
      %v1415 = vunpack.c.l.b16 %v804
      %v1416 = vunpack.c.l.b16 %v805
      %v1417 = vunpack.c.l.b16 %v806
      %v1418 = vunpack.c.l.b16 %v807
      %v1419 = vunpack.c.l.b16 %v808
      %v1420 = vunpack.c.l.b16 %v809
      %v1421 = vunpack.c.l.b16 %v810
      %v1422 = vunpack.c.l.b16 %v811
      %v1423 = vunpack.c.l.b16 %v812
      %v1424 = vunpack.c.l.b16 %v813
      %v1425 = vunpack.c.l.b16 %v814
      %v1426 = vunpack.c.l.b16 %v815
      %v1427 = vunpack.c.l.b16 %v816
      %v1428 = vunpack.c.l.b16 %v817
      %v1429 = vunpack.c.l.b16 %v818
      %v1430 = vunpack.c.l.b16 %v819
      %v1431 = vunpack.c.l.b16 %v820
      %v1432 = vpack.c.b16 %v1385, %v1384
      %v1433 = vpack.c.b16 %v1387, %v1386
      %v1434 = vpack.c.b16 %v1389, %v1388
      %v1435 = vpack.c.b16 %v1391, %v1390
      %v1436 = vpack.c.b16 %v1393, %v1392
      %v1437 = vpack.c.b16 %v1395, %v1394
      %v1438 = vpack.c.b16 %v1397, %v1396
      %v1439 = vpack.c.b16 %v1399, %v1398
      %v1440 = vpack.c.b16 %v1401, %v1400
      %v1441 = vpack.c.b16 %v1403, %v1402
      %v1442 = vpack.c.b16 %v1405, %v1404
      %v1443 = vpack.c.b16 %v1407, %v1406
      %v1444 = vpack.c.b16 %v1409, %v1408
      %v1445 = vpack.c.b16 %v1411, %v1410
      %v1446 = vpack.c.b16 %v1413, %v1412
      %v1447 = vpack.c.b16 %v1415, %v1414
      %v1448 = vpack.c.b16 %v1417, %v1416
      %v1449 = vpack.c.b16 %v1419, %v1418
      %v1450 = vpack.c.b16 %v1421, %v1420
      %v1451 = vpack.c.b16 %v1423, %v1422
      %v1452 = vpack.c.b16 %v1425, %v1424
      %v1453 = vpack.c.b16 %v1427, %v1426
      %v1454 = vpack.c.b16 %v1429, %v1428
      %v1455 = vpack.c.b16 %v1431, %v1430
      %1480 = vmatprep.subr.bf16.mxu0 0
      %1481 = vmatpush1.bf16.msra.mxu0 %v1432
      %1482 = vmatprep.subr.bf16.mxu0 0
      %1483 = vmatpush1.bf16.msra.mxu0 %v1433
      %1484 = vmatprep.subr.bf16.mxu0 0
      %1485 = vmatpush1.bf16.msra.mxu0 %v1434
      %1486 = vmatprep.subr.bf16.mxu0 0
      %1487 = vmatpush1.bf16.msra.mxu0 %v1435
      %1488 = vmatprep.subr.bf16.mxu0 0
      %1489 = vmatpush1.bf16.msra.mxu0 %v1436
      %1490 = vmatprep.subr.bf16.mxu0 0
      %1491 = vmatpush1.bf16.msra.mxu0 %v1437
      %1492 = vmatprep.subr.bf16.mxu0 0
      %1493 = vmatpush1.bf16.msra.mxu0 %v1438
      %1494 = vmatprep.subr.bf16.mxu0 0
      %1495 = vmatpush1.bf16.msra.mxu0 %v1439
      %1496 = vmatprep.subr.bf16.mxu0 0
      %1497 = vmatpush1.bf16.msra.mxu0 %v1440
      %1498 = vmatprep.subr.bf16.mxu0 0
      %1499 = vmatpush1.bf16.msra.mxu0 %v1441
      %1500 = vmatprep.subr.bf16.mxu0 0
      %1501 = vmatpush1.bf16.msra.mxu0 %v1442
      %1502 = vmatprep.subr.bf16.mxu0 0
      %1503 = vmatpush1.bf16.msra.mxu0 %v1443
      %1504 = vmatprep.subr.bf16.mxu0 0
      %1505 = vmatpush1.bf16.msra.mxu0 %v1444
      %1506 = vmatprep.subr.bf16.mxu0 0
      %1507 = vmatpush1.bf16.msra.mxu0 %v1445
      %1508 = vmatprep.subr.bf16.mxu0 0
      %1509 = vmatpush1.bf16.msra.mxu0 %v1446
      %1510 = vmatprep.subr.bf16.mxu0 0
      %1511 = vmatpush1.bf16.msra.mxu0 %v1447
      %1512 = vmatprep.mubr.bf16.mxu0 %v477
      %1513 = vmatmul.mubr.bf16.gmra.mrb[0].mxu0 %v375
      %v1514 = vpop.f32.mrb[0].mxu0
      %v1515 = vadd.f32 %v1210, %v1514
      %v1516 = vpop.f32.mrb[0].mxu0
      %v1517 = vpop.f32.mrb[0].mxu0
      %v1518 = vadd.f32 %v1213, %v1517
      %v1519 = vpop.f32.mrb[0].mxu0
      %1520 = vmatprep.mubr.bf16.mxu0 %v489
      %1521 = vmatmul.mubr.bf16.gmra.mrb[0].mxu0 %v376
      %v1522 = vpop.f32.mrb[0].mxu0
      %v1523 = vadd.f32 %v1218, %v1522
      %v1524 = vpop.f32.mrb[0].mxu0
      %v1525 = vpop.f32.mrb[0].mxu0
      %v1526 = vadd.f32 %v1221, %v1525
      %v1527 = vpop.f32.mrb[0].mxu0
      %1528 = vmatprep.mubr.bf16.mxu0 %v501
      %1529 = vmatmul.mubr.bf16.gmra.mrb[0].mxu0 %v377
      %v1530 = vpop.f32.mrb[0].mxu0
      %v1531 = vadd.f32 %v1226, %v1530
      %v1532 = vpop.f32.mrb[0].mxu0
      %v1533 = vpop.f32.mrb[0].mxu0
      %v1534 = vadd.f32 %v1229, %v1533
      %v1535 = vpop.f32.mrb[0].mxu0
      %1536 = vmatprep.mubr.bf16.mxu0 %v513
      %1537 = vmatmul.mubr.bf16.gmra.mrb[0].mxu0 %v378
      %v1538 = vpop.f32.mrb[0].mxu0
      %v1539 = vadd.f32 %v1234, %v1538
      %v1540 = vpop.f32.mrb[0].mxu0
      %v1541 = vpop.f32.mrb[0].mxu0
      %v1542 = vadd.f32 %v1237, %v1541
      %v1543 = vpop.f32.mrb[0].mxu0
      %1544 = vmatprep.mubr.bf16.mxu0 %v525
      %1545 = vmatmul.mubr.bf16.gmra.mrb[0].mxu0 %v379
      %v1546 = vpop.f32.mrb[0].mxu0
      %v1547 = vadd.f32 %v1242, %v1546
      %v1548 = vpop.f32.mrb[0].mxu0
      %v1549 = vpop.f32.mrb[0].mxu0
      %v1550 = vadd.f32 %v1245, %v1549
      %v1551 = vpop.f32.mrb[0].mxu0
      %1552 = vmatprep.mubr.bf16.mxu0 %v537
      %1553 = vmatmul.mubr.bf16.gmra.mrb[0].mxu0 %v380
      %v1554 = vpop.f32.mrb[0].mxu0
      %v1555 = vadd.f32 %v1250, %v1554
      %v1556 = vpop.f32.mrb[0].mxu0
      %v1557 = vpop.f32.mrb[0].mxu0
      %v1558 = vadd.f32 %v1253, %v1557
      %v1559 = vpop.f32.mrb[0].mxu0
      %1560 = vmatprep.mubr.bf16.mxu0 %v549
      %1561 = vmatmul.mubr.bf16.gmra.mrb[0].mxu0 %v381
      %v1562 = vpop.f32.mrb[0].mxu0
      %v1563 = vadd.f32 %v1258, %v1562
      %v1564 = vpop.f32.mrb[0].mxu0
      %v1565 = vpop.f32.mrb[0].mxu0
      %v1566 = vadd.f32 %v1261, %v1565
      %v1567 = vpop.f32.mrb[0].mxu0
      %1568 = vmatprep.mubr.bf16.mxu0 %v561
      %1569 = vmatmul.mubr.bf16.gmra.mrb[0].mxu0 %v382
      %v1570 = vpop.f32.mrb[0].mxu0
      %v1571 = vadd.f32 %v1266, %v1570
      %v1572 = vpop.f32.mrb[0].mxu0
      %v1573 = vpop.f32.mrb[0].mxu0
      %v1574 = vadd.f32 %v1269, %v1573
      %v1575 = vpop.f32.mrb[0].mxu0
      %1576 = vmatprep.mubr.bf16.mxu0 %v573
      %1577 = vmatmul.mubr.bf16.gmra.mrb[0].mxu0 %v383
      %v1578 = vpop.f32.mrb[0].mxu0
      %v1579 = vadd.f32 %v1274, %v1578
      %v1580 = vpop.f32.mrb[0].mxu0
      %v1581 = vpop.f32.mrb[0].mxu0
      %v1582 = vadd.f32 %v1277, %v1581
      %v1583 = vpop.f32.mrb[0].mxu0
      %1584 = vmatprep.mubr.bf16.mxu0 %v585
      %1585 = vmatmul.mubr.bf16.gmra.mrb[0].mxu0 %v384
      %v1586 = vpop.f32.mrb[0].mxu0
      %v1587 = vadd.f32 %v1282, %v1586
      %v1588 = vpop.f32.mrb[0].mxu0
      %v1589 = vpop.f32.mrb[0].mxu0
      %v1590 = vadd.f32 %v1285, %v1589
      %v1591 = vpop.f32.mrb[0].mxu0
      %1592 = vmatprep.mubr.bf16.mxu0 %v597
      %1593 = vmatmul.mubr.bf16.gmra.mrb[0].mxu0 %v385
      %v1594 = vpop.f32.mrb[0].mxu0
      %v1595 = vadd.f32 %v1290, %v1594
      %v1596 = vpop.f32.mrb[0].mxu0
      %v1597 = vpop.f32.mrb[0].mxu0
      %v1598 = vadd.f32 %v1293, %v1597
      %v1599 = vpop.f32.mrb[0].mxu0
      %1600 = vmatprep.mubr.bf16.mxu0 %v609
      %1601 = vmatmul.mubr.bf16.gmra.mrb[0].mxu0 %v386
      %v1602 = vpop.f32.mrb[0].mxu0
      %v1603 = vadd.f32 %v1298, %v1602
      %v1604 = vpop.f32.mrb[0].mxu0
      %v1605 = vpop.f32.mrb[0].mxu0
      %v1606 = vadd.f32 %v1301, %v1605
      %v1607 = vpop.f32.mrb[0].mxu0
      %1608 = vmatprep.mubr.bf16.mxu0 %v621
      %1609 = vmatmul.mubr.bf16.gmra.mrb[0].mxu0 %v387
      %v1610 = vpop.f32.mrb[0].mxu0
      %v1611 = vadd.f32 %v1306, %v1610
      %v1612 = vpop.f32.mrb[0].mxu0
      %v1613 = vpop.f32.mrb[0].mxu0
      %v1614 = vadd.f32 %v1309, %v1613
      %v1615 = vpop.f32.mrb[0].mxu0
      %1616 = vmatprep.mubr.bf16.mxu0 %v633
      %1617 = vmatmul.mubr.bf16.gmra.mrb[0].mxu0 %v388
      %v1618 = vpop.f32.mrb[0].mxu0
      %v1619 = vadd.f32 %v1314, %v1618
      %v1620 = vpop.f32.mrb[0].mxu0
      %v1621 = vpop.f32.mrb[0].mxu0
      %v1622 = vadd.f32 %v1317, %v1621
      %v1623 = vpop.f32.mrb[0].mxu0
      %1624 = vmatprep.mubr.bf16.mxu0 %v645
      %1625 = vmatmul.mubr.bf16.gmra.mrb[0].mxu0 %v389
      %v1626 = vpop.f32.mrb[0].mxu0
      %v1627 = vadd.f32 %v1322, %v1626
      %v1628 = vpop.f32.mrb[0].mxu0
      %v1629 = vpop.f32.mrb[0].mxu0
      %v1630 = vadd.f32 %v1325, %v1629
      %v1631 = vpop.f32.mrb[0].mxu0
      %1632 = vmatprep.mubr.bf16.mxu0 %v657
      %1633 = vmatmul.mubr.bf16.gmra.mrb[0].mxu0 %v390
      %v1634 = vpop.f32.mrb[0].mxu0
      %v1635 = vadd.f32 %v1330, %v1634
      %v1636 = vpop.f32.mrb[0].mxu0
      %v1637 = vpop.f32.mrb[0].mxu0
      %v1638 = vadd.f32 %v1333, %v1637
      %v1639 = vpop.f32.mrb[0].mxu0
      %1640 = vdwg.mxu0
      %1641 = vmatprep.subr.bf16.mxu0 0
      %1642 = vmatpush1.bf16.msra.mxu0 %v1448
      %1643 = vmatprep.subr.bf16.mxu0 0
      %1644 = vmatpush1.bf16.msra.mxu0 %v1449
      %1645 = vmatprep.subr.bf16.mxu0 0
      %1646 = vmatpush1.bf16.msra.mxu0 %v1450
      %1647 = vmatprep.subr.bf16.mxu0 0
      %1648 = vmatpush1.bf16.msra.mxu0 %v1451
      %1649 = vmatprep.subr.bf16.mxu0 0
      %1650 = vmatpush1.bf16.msra.mxu0 %v1452
      %1651 = vmatprep.subr.bf16.mxu0 0
      %1652 = vmatpush1.bf16.msra.mxu0 %v1453
      %1653 = vmatprep.subr.bf16.mxu0 0
      %1654 = vmatpush1.bf16.msra.mxu0 %v1454
      %1655 = vmatprep.subr.bf16.mxu0 0
      %1656 = vmatpush1.bf16.msra.mxu0 %v1455
      %1657 = vmatprep.subr.bf16.mxu0 0
      %1658 = vmatpush1.bf16.msra.mxu0 0
      %1659 = vmatprep.subr.bf16.mxu0 0
      %1660 = vmatpush1.bf16.msra.mxu0 0
      %1661 = vmatprep.subr.bf16.mxu0 0
      %1662 = vmatpush1.bf16.msra.mxu0 0
      %1663 = vmatprep.subr.bf16.mxu0 0
      %1664 = vmatpush1.bf16.msra.mxu0 0
      %1665 = vmatprep.subr.bf16.mxu0 0
      %1666 = vmatpush1.bf16.msra.mxu0 0
      %1667 = vmatprep.subr.bf16.mxu0 0
      %1668 = vmatpush1.bf16.msra.mxu0 0
      %1669 = vmatprep.subr.bf16.mxu0 0
      %1670 = vmatpush1.bf16.msra.mxu0 0
      %1671 = vmatprep.subr.bf16.mxu0 0
      %1672 = vmatpush1.bf16.msra.mxu0 0
      %1673 = vmatprep.mubr.bf16.mxu0 0
      %1674 = vmatmul.mubr.bf16.gmra.mrb[0].mxu0 %v703
      %v1675 = vpop.f32.mrb[0].mxu0
      %v1676 = vadd.f32 %v1515, %v1675
      %v1677 = vpop.f32.mrb[0].mxu0
      %v1678 = vpop.f32.mrb[0].mxu0
      %v1679 = vadd.f32 %v1518, %v1678
      %v1680 = vpop.f32.mrb[0].mxu0
      %1681 = vmatprep.mubr.bf16.mxu0 0
      %1682 = vmatmul.mubr.bf16.gmra.mrb[0].mxu0 %v706
      %v1683 = vpop.f32.mrb[0].mxu0
      %v1684 = vadd.f32 %v1523, %v1683
      %v1685 = vpop.f32.mrb[0].mxu0
      %v1686 = vpop.f32.mrb[0].mxu0
      %v1687 = vadd.f32 %v1526, %v1686
      %v1688 = vpop.f32.mrb[0].mxu0
      %1689 = vmatprep.mubr.bf16.mxu0 0
      %1690 = vmatmul.mubr.bf16.gmra.mrb[0].mxu0 %v709
      %v1691 = vpop.f32.mrb[0].mxu0
      %v1692 = vadd.f32 %v1531, %v1691
      %v1693 = vpop.f32.mrb[0].mxu0
      %v1694 = vpop.f32.mrb[0].mxu0
      %v1695 = vadd.f32 %v1534, %v1694
      %v1696 = vpop.f32.mrb[0].mxu0
      %1697 = vmatprep.mubr.bf16.mxu0 0
      %1698 = vmatmul.mubr.bf16.gmra.mrb[0].mxu0 %v712
      %v1699 = vpop.f32.mrb[0].mxu0
      %v1700 = vadd.f32 %v1539, %v1699
      %v1701 = vpop.f32.mrb[0].mxu0
      %v1702 = vpop.f32.mrb[0].mxu0
      %v1703 = vadd.f32 %v1542, %v1702
      %v1704 = vpop.f32.mrb[0].mxu0
      %1705 = vmatprep.mubr.bf16.mxu0 0
      %1706 = vmatmul.mubr.bf16.gmra.mrb[0].mxu0 %v715
      %v1707 = vpop.f32.mrb[0].mxu0
      %v1708 = vadd.f32 %v1547, %v1707
      %v1709 = vpop.f32.mrb[0].mxu0
      %v1710 = vpop.f32.mrb[0].mxu0
      %v1711 = vadd.f32 %v1550, %v1710
      %v1712 = vpop.f32.mrb[0].mxu0
      %1713 = vmatprep.mubr.bf16.mxu0 0
      %1714 = vmatmul.mubr.bf16.gmra.mrb[0].mxu0 %v718
      %v1715 = vpop.f32.mrb[0].mxu0
      %v1716 = vadd.f32 %v1555, %v1715
      %v1717 = vpop.f32.mrb[0].mxu0
      %v1718 = vpop.f32.mrb[0].mxu0
      %v1719 = vadd.f32 %v1558, %v1718
      %v1720 = vpop.f32.mrb[0].mxu0
      %1721 = vmatprep.mubr.bf16.mxu0 0
      %1722 = vmatmul.mubr.bf16.gmra.mrb[0].mxu0 %v721
      %v1723 = vpop.f32.mrb[0].mxu0
      %v1724 = vadd.f32 %v1563, %v1723
      %v1725 = vpop.f32.mrb[0].mxu0
      %v1726 = vpop.f32.mrb[0].mxu0
      %v1727 = vadd.f32 %v1566, %v1726
      %v1728 = vpop.f32.mrb[0].mxu0
      %1729 = vmatprep.mubr.bf16.mxu0 0
      %1730 = vmatmul.mubr.bf16.gmra.mrb[0].mxu0 %v724
      %v1731 = vpop.f32.mrb[0].mxu0
      %v1732 = vadd.f32 %v1571, %v1731
      %v1733 = vpop.f32.mrb[0].mxu0
      %v1734 = vpop.f32.mrb[0].mxu0
      %v1735 = vadd.f32 %v1574, %v1734
      %v1736 = vpop.f32.mrb[0].mxu0
      %1737 = vmatprep.mubr.bf16.mxu0 0
      %1738 = vmatmul.mubr.bf16.gmra.mrb[0].mxu0 %v727
      %v1739 = vpop.f32.mrb[0].mxu0
      %v1740 = vadd.f32 %v1579, %v1739
      %v1741 = vpop.f32.mrb[0].mxu0
      %v1742 = vpop.f32.mrb[0].mxu0
      %v1743 = vadd.f32 %v1582, %v1742
      %v1744 = vpop.f32.mrb[0].mxu0
      %1745 = vmatprep.mubr.bf16.mxu0 0
      %1746 = vmatmul.mubr.bf16.gmra.mrb[0].mxu0 %v730
      %v1747 = vpop.f32.mrb[0].mxu0
      %v1748 = vadd.f32 %v1587, %v1747
      %v1749 = vpop.f32.mrb[0].mxu0
      %v1750 = vpop.f32.mrb[0].mxu0
      %v1751 = vadd.f32 %v1590, %v1750
      %v1752 = vpop.f32.mrb[0].mxu0
      %1753 = vmatprep.mubr.bf16.mxu0 0
      %1754 = vmatmul.mubr.bf16.gmra.mrb[0].mxu0 %v733
      %v1755 = vpop.f32.mrb[0].mxu0
      %v1756 = vadd.f32 %v1595, %v1755
      %v1757 = vpop.f32.mrb[0].mxu0
      %v1758 = vpop.f32.mrb[0].mxu0
      %v1759 = vadd.f32 %v1598, %v1758
      %v1760 = vpop.f32.mrb[0].mxu0
      %1761 = vmatprep.mubr.bf16.mxu0 0
      %1762 = vmatmul.mubr.bf16.gmra.mrb[0].mxu0 %v736
      %v1763 = vpop.f32.mrb[0].mxu0
      %v1764 = vadd.f32 %v1603, %v1763
      %v1765 = vpop.f32.mrb[0].mxu0
      %v1766 = vpop.f32.mrb[0].mxu0
      %v1767 = vadd.f32 %v1606, %v1766
      %v1768 = vpop.f32.mrb[0].mxu0
      %1769 = vmatprep.mubr.bf16.mxu0 0
      %1770 = vmatmul.mubr.bf16.gmra.mrb[0].mxu0 %v739
      %v1771 = vpop.f32.mrb[0].mxu0
      %v1772 = vadd.f32 %v1611, %v1771
      %v1773 = vpop.f32.mrb[0].mxu0
      %v1774 = vpop.f32.mrb[0].mxu0
      %v1775 = vadd.f32 %v1614, %v1774
      %v1776 = vpop.f32.mrb[0].mxu0
      %1777 = vmatprep.mubr.bf16.mxu0 0
      %1778 = vmatmul.mubr.bf16.gmra.mrb[0].mxu0 %v742
      %v1779 = vpop.f32.mrb[0].mxu0
      %v1780 = vadd.f32 %v1619, %v1779
      %v1781 = vpop.f32.mrb[0].mxu0
      %v1782 = vpop.f32.mrb[0].mxu0
      %v1783 = vadd.f32 %v1622, %v1782
      %v1784 = vpop.f32.mrb[0].mxu0
      %1785 = vmatprep.mubr.bf16.mxu0 0
      %1786 = vmatmul.mubr.bf16.gmra.mrb[0].mxu0 %v745
      %v1787 = vpop.f32.mrb[0].mxu0
      %v1788 = vadd.f32 %v1627, %v1787
      %v1789 = vpop.f32.mrb[0].mxu0
      %v1790 = vpop.f32.mrb[0].mxu0
      %v1791 = vadd.f32 %v1630, %v1790
      %v1792 = vpop.f32.mrb[0].mxu0
      %1793 = vmatprep.mubr.bf16.mxu0 0
      %1794 = vmatmul.mubr.bf16.gmra.mrb[0].mxu0 %v748
      %v1795 = vpop.f32.mrb[0].mxu0
      %v1796 = vadd.f32 %v1635, %v1795
      %v1797 = vpop.f32.mrb[0].mxu0
      %v1798 = vpop.f32.mrb[0].mxu0
      %v1799 = vadd.f32 %v1638, %v1798
      %v1800 = vpop.f32.mrb[0].mxu0
      %1801 = vdwg.mxu0
      %s1802 = scalar_lea.vmem %s1, 384
      %v1803 = vld [vmem:[%s1802] sm:$0xf]
      %v1804 = vld [vmem:[%s1802 + $0x4] sm:$0xf]
      %v1805 = vld [vmem:[%s1802 + $0x8] sm:$0xf]
      %v1806 = vld [vmem:[%s1802 + $0xc] sm:$0xf]
      %v1807 = vld [vmem:[%s1802 + $0x10] sm:$0xf]
      %v1808 = vld [vmem:[%s1802 + $0x14] sm:$0xf]
      %v1809 = vld [vmem:[%s1802 + $0x18] sm:$0xf]
      %v1810 = vld [vmem:[%s1802 + $0x1c] sm:$0xf]
      %v1811 = vld [vmem:[%s1802 + $0x20] sm:$0xf]
      %v1812 = vld [vmem:[%s1802 + $0x24] sm:$0xf]
      %v1813 = vld [vmem:[%s1802 + $0x28] sm:$0xf]
      %v1814 = vld [vmem:[%s1802 + $0x2c] sm:$0xf]
      %v1815 = vld [vmem:[%s1802 + $0x30] sm:$0xf]
      %v1816 = vld [vmem:[%s1802 + $0x34] sm:$0xf]
      %v1817 = vld [vmem:[%s1802 + $0x38] sm:$0xf]
      %v1818 = vld [vmem:[%s1802 + $0x3c] sm:$0xf]
      %v1819 = vld [vmem:[%s1802 + $0x40] sm:$0xf]
      %v1820 = vld [vmem:[%s1802 + $0x44] sm:$0xf]
      %v1821 = vld [vmem:[%s1802 + $0x48] sm:$0xf]
      %v1822 = vld [vmem:[%s1802 + $0x4c] sm:$0xf]
      %v1823 = vld [vmem:[%s1802 + $0x50] sm:$0xf]
      %v1824 = vld [vmem:[%s1802 + $0x54] sm:$0xf]
      %v1825 = vld [vmem:[%s1802 + $0x58] sm:$0xf]
      %v1826 = vld [vmem:[%s1802 + $0x5c] sm:$0xf]
      %v1827 = vld [vmem:[%s1802 + $0x60] sm:$0xf]
      %v1828 = vld [vmem:[%s1802 + $0x64] sm:$0xf]
      %v1829 = vld [vmem:[%s1802 + $0x68] sm:$0xf]
      %v1830 = vld [vmem:[%s1802 + $0x6c] sm:$0xf]
      %v1831 = vld [vmem:[%s1802 + $0x70] sm:$0xf]
      %v1832 = vld [vmem:[%s1802 + $0x74] sm:$0xf]
      %v1833 = vld [vmem:[%s1802 + $0x78] sm:$0xf]
      %v1834 = vld [vmem:[%s1802 + $0x7c] sm:$0xf]
      %v1835 = vld [vmem:[%s1802 + $0x80] sm:$0xf]
      %v1836 = vld [vmem:[%s1802 + $0x84] sm:$0xf]
      %v1837 = vld [vmem:[%s1802 + $0x88] sm:$0xf]
      %v1838 = vld [vmem:[%s1802 + $0x8c] sm:$0xf]
      %v1839 = vld [vmem:[%s1802 + $0x90] sm:$0xf]
      %v1840 = vld [vmem:[%s1802 + $0x94] sm:$0xf]
      %v1841 = vld [vmem:[%s1802 + $0x98] sm:$0xf]
      %v1842 = vld [vmem:[%s1802 + $0x9c] sm:$0xf]
      %v1843 = vld [vmem:[%s1802 + $0xa0] sm:$0xf]
      %v1844 = vld [vmem:[%s1802 + $0xa4] sm:$0xf]
      %v1845 = vld [vmem:[%s1802 + $0xa8] sm:$0xf]
      %v1846 = vld [vmem:[%s1802 + $0xac] sm:$0xf]
      %v1847 = vld [vmem:[%s1802 + $0xb0] sm:$0xf]
      %v1848 = vld [vmem:[%s1802 + $0xb4] sm:$0xf]
      %v1849 = vld [vmem:[%s1802 + $0xb8] sm:$0xf]
      %v1850 = vld [vmem:[%s1802 + $0xbc] sm:$0xf]
      %v1899 = vunpack.c.l.b16 %v1803
      %v1900 = vunpack.c.l.b16 %v1804
      %v1901 = vunpack.c.l.b16 %v1805
      %v1902 = vunpack.c.l.b16 %v1806
      %v1903 = vunpack.c.l.b16 %v1807
      %v1904 = vunpack.c.l.b16 %v1808
      %v1905 = vunpack.c.l.b16 %v1809
      %v1906 = vunpack.c.l.b16 %v1810
      %v1907 = vunpack.c.l.b16 %v1811
      %v1908 = vunpack.c.l.b16 %v1812
      %v1909 = vunpack.c.l.b16 %v1813
      %v1910 = vunpack.c.l.b16 %v1814
      %v1911 = vunpack.c.l.b16 %v1815
      %v1912 = vunpack.c.l.b16 %v1816
      %v1913 = vunpack.c.l.b16 %v1817
      %v1914 = vunpack.c.l.b16 %v1818
      %v1915 = vunpack.c.l.b16 %v1819
      %v1916 = vunpack.c.l.b16 %v1820
      %v1917 = vunpack.c.l.b16 %v1821
      %v1918 = vunpack.c.l.b16 %v1822
      %v1919 = vunpack.c.l.b16 %v1823
      %v1920 = vunpack.c.l.b16 %v1824
      %v1921 = vunpack.c.l.b16 %v1825
      %v1922 = vunpack.c.l.b16 %v1826
      %v1923 = vunpack.c.l.b16 %v1827
      %v1924 = vunpack.c.l.b16 %v1828
      %v1925 = vunpack.c.l.b16 %v1829
      %v1926 = vunpack.c.l.b16 %v1830
      %v1927 = vunpack.c.l.b16 %v1831
      %v1928 = vunpack.c.l.b16 %v1832
      %v1929 = vunpack.c.l.b16 %v1833
      %v1930 = vunpack.c.l.b16 %v1834
      %v1931 = vunpack.c.l.b16 %v1835
      %v1932 = vunpack.c.l.b16 %v1836
      %v1933 = vunpack.c.l.b16 %v1837
      %v1934 = vunpack.c.l.b16 %v1838
      %v1935 = vunpack.c.l.b16 %v1839
      %v1936 = vunpack.c.l.b16 %v1840
      %v1937 = vunpack.c.l.b16 %v1841
      %v1938 = vunpack.c.l.b16 %v1842
      %v1939 = vunpack.c.l.b16 %v1843
      %v1940 = vunpack.c.l.b16 %v1844
      %v1941 = vunpack.c.l.b16 %v1845
      %v1942 = vunpack.c.l.b16 %v1846
      %v1943 = vunpack.c.l.b16 %v1847
      %v1944 = vunpack.c.l.b16 %v1848
      %v1945 = vunpack.c.l.b16 %v1849
      %v1946 = vunpack.c.l.b16 %v1850
      %v1947 = vpack.c.b16 %v1900, %v1899
      %v1948 = vpack.c.b16 %v1902, %v1901
      %v1949 = vpack.c.b16 %v1904, %v1903
      %v1950 = vpack.c.b16 %v1906, %v1905
      %v1951 = vpack.c.b16 %v1908, %v1907
      %v1952 = vpack.c.b16 %v1910, %v1909
      %v1953 = vpack.c.b16 %v1912, %v1911
      %v1954 = vpack.c.b16 %v1914, %v1913
      %v1955 = vpack.c.b16 %v1916, %v1915
      %v1956 = vpack.c.b16 %v1918, %v1917
      %v1957 = vpack.c.b16 %v1920, %v1919
      %v1958 = vpack.c.b16 %v1922, %v1921
      %v1959 = vpack.c.b16 %v1924, %v1923
      %v1960 = vpack.c.b16 %v1926, %v1925
      %v1961 = vpack.c.b16 %v1928, %v1927
      %v1962 = vpack.c.b16 %v1930, %v1929
      %v1963 = vpack.c.b16 %v1932, %v1931
      %v1964 = vpack.c.b16 %v1934, %v1933
      %v1965 = vpack.c.b16 %v1936, %v1935
      %v1966 = vpack.c.b16 %v1938, %v1937
      %v1967 = vpack.c.b16 %v1940, %v1939
      %v1968 = vpack.c.b16 %v1942, %v1941
      %v1969 = vpack.c.b16 %v1944, %v1943
      %v1970 = vpack.c.b16 %v1946, %v1945
      %1995 = vmatprep.subr.bf16.mxu0 0
      %1996 = vmatpush1.bf16.msra.mxu0 %v1947
      %1997 = vmatprep.subr.bf16.mxu0 0
      %1998 = vmatpush1.bf16.msra.mxu0 %v1948
      %1999 = vmatprep.subr.bf16.mxu0 0
      %2000 = vmatpush1.bf16.msra.mxu0 %v1949
      %2001 = vmatprep.subr.bf16.mxu0 0
      %2002 = vmatpush1.bf16.msra.mxu0 %v1950
      %2003 = vmatprep.subr.bf16.mxu0 0
      %2004 = vmatpush1.bf16.msra.mxu0 %v1951
      %2005 = vmatprep.subr.bf16.mxu0 0
      %2006 = vmatpush1.bf16.msra.mxu0 %v1952
      %2007 = vmatprep.subr.bf16.mxu0 0
      %2008 = vmatpush1.bf16.msra.mxu0 %v1953
      %2009 = vmatprep.subr.bf16.mxu0 0
      %2010 = vmatpush1.bf16.msra.mxu0 %v1954
      %2011 = vmatprep.subr.bf16.mxu0 0
      %2012 = vmatpush1.bf16.msra.mxu0 %v1955
      %2013 = vmatprep.subr.bf16.mxu0 0
      %2014 = vmatpush1.bf16.msra.mxu0 %v1956
      %2015 = vmatprep.subr.bf16.mxu0 0
      %2016 = vmatpush1.bf16.msra.mxu0 %v1957
      %2017 = vmatprep.subr.bf16.mxu0 0
      %2018 = vmatpush1.bf16.msra.mxu0 %v1958
      %2019 = vmatprep.subr.bf16.mxu0 0
      %2020 = vmatpush1.bf16.msra.mxu0 %v1959
      %2021 = vmatprep.subr.bf16.mxu0 0
      %2022 = vmatpush1.bf16.msra.mxu0 %v1960
      %2023 = vmatprep.subr.bf16.mxu0 0
      %2024 = vmatpush1.bf16.msra.mxu0 %v1961
      %2025 = vmatprep.subr.bf16.mxu0 0
      %2026 = vmatpush1.bf16.msra.mxu0 %v1962
      %2027 = vmatprep.mubr.bf16.mxu0 %v501
      %2028 = vmatmul.mubr.bf16.gmra.mrb[0].mxu0 %v377
      %v2029 = vpop.f32.mrb[0].mxu0
      %v2030 = vadd.f32 0.0, %v2029
      %v2031 = vpop.f32.mrb[0].mxu0
      %v2032 = vpop.f32.mrb[0].mxu0
      %v2033 = vadd.f32 0.0, %v2032
      %v2034 = vpop.f32.mrb[0].mxu0
      %2035 = vmatprep.mubr.bf16.mxu0 %v513
      %2036 = vmatmul.mubr.bf16.gmra.mrb[0].mxu0 %v378
      %v2037 = vpop.f32.mrb[0].mxu0
      %v2038 = vadd.f32 0.0, %v2037
      %v2039 = vpop.f32.mrb[0].mxu0
      %v2040 = vpop.f32.mrb[0].mxu0
      %v2041 = vadd.f32 0.0, %v2040
      %v2042 = vpop.f32.mrb[0].mxu0
      %2043 = vmatprep.mubr.bf16.mxu0 %v525
      %2044 = vmatmul.mubr.bf16.gmra.mrb[0].mxu0 %v379
      %v2045 = vpop.f32.mrb[0].mxu0
      %v2046 = vadd.f32 0.0, %v2045
      %v2047 = vpop.f32.mrb[0].mxu0
      %v2048 = vpop.f32.mrb[0].mxu0
      %v2049 = vadd.f32 0.0, %v2048
      %v2050 = vpop.f32.mrb[0].mxu0
      %2051 = vmatprep.mubr.bf16.mxu0 %v537
      %2052 = vmatmul.mubr.bf16.gmra.mrb[0].mxu0 %v380
      %v2053 = vpop.f32.mrb[0].mxu0
      %v2054 = vadd.f32 0.0, %v2053
      %v2055 = vpop.f32.mrb[0].mxu0
      %v2056 = vpop.f32.mrb[0].mxu0
      %v2057 = vadd.f32 0.0, %v2056
      %v2058 = vpop.f32.mrb[0].mxu0
      %2059 = vmatprep.mubr.bf16.mxu0 %v549
      %2060 = vmatmul.mubr.bf16.gmra.mrb[0].mxu0 %v381
      %v2061 = vpop.f32.mrb[0].mxu0
      %v2062 = vadd.f32 0.0, %v2061
      %v2063 = vpop.f32.mrb[0].mxu0
      %v2064 = vpop.f32.mrb[0].mxu0
      %v2065 = vadd.f32 0.0, %v2064
      %v2066 = vpop.f32.mrb[0].mxu0
      %2067 = vmatprep.mubr.bf16.mxu0 %v561
      %2068 = vmatmul.mubr.bf16.gmra.mrb[0].mxu0 %v382
      %v2069 = vpop.f32.mrb[0].mxu0
      %v2070 = vadd.f32 0.0, %v2069
      %v2071 = vpop.f32.mrb[0].mxu0
      %v2072 = vpop.f32.mrb[0].mxu0
      %v2073 = vadd.f32 0.0, %v2072
      %v2074 = vpop.f32.mrb[0].mxu0
      %2075 = vmatprep.mubr.bf16.mxu0 %v573
      %2076 = vmatmul.mubr.bf16.gmra.mrb[0].mxu0 %v383
      %v2077 = vpop.f32.mrb[0].mxu0
      %v2078 = vadd.f32 0.0, %v2077
      %v2079 = vpop.f32.mrb[0].mxu0
      %v2080 = vpop.f32.mrb[0].mxu0
      %v2081 = vadd.f32 0.0, %v2080
      %v2082 = vpop.f32.mrb[0].mxu0
      %2083 = vmatprep.mubr.bf16.mxu0 %v585
      %2084 = vmatmul.mubr.bf16.gmra.mrb[0].mxu0 %v384
      %v2085 = vpop.f32.mrb[0].mxu0
      %v2086 = vadd.f32 0.0, %v2085
      %v2087 = vpop.f32.mrb[0].mxu0
      %v2088 = vpop.f32.mrb[0].mxu0
      %v2089 = vadd.f32 0.0, %v2088
      %v2090 = vpop.f32.mrb[0].mxu0
      %2091 = vmatprep.mubr.bf16.mxu0 %v597
      %2092 = vmatmul.mubr.bf16.gmra.mrb[0].mxu0 %v385
      %v2093 = vpop.f32.mrb[0].mxu0
      %v2094 = vadd.f32 0.0, %v2093
      %v2095 = vpop.f32.mrb[0].mxu0
      %v2096 = vpop.f32.mrb[0].mxu0
      %v2097 = vadd.f32 0.0, %v2096
      %v2098 = vpop.f32.mrb[0].mxu0
      %2099 = vmatprep.mubr.bf16.mxu0 %v609
      %2100 = vmatmul.mubr.bf16.gmra.mrb[0].mxu0 %v386
      %v2101 = vpop.f32.mrb[0].mxu0
      %v2102 = vadd.f32 0.0, %v2101
      %v2103 = vpop.f32.mrb[0].mxu0
      %v2104 = vpop.f32.mrb[0].mxu0
      %v2105 = vadd.f32 0.0, %v2104
      %v2106 = vpop.f32.mrb[0].mxu0
      %2107 = vmatprep.mubr.bf16.mxu0 %v621
      %2108 = vmatmul.mubr.bf16.gmra.mrb[0].mxu0 %v387
      %v2109 = vpop.f32.mrb[0].mxu0
      %v2110 = vadd.f32 0.0, %v2109
      %v2111 = vpop.f32.mrb[0].mxu0
      %v2112 = vpop.f32.mrb[0].mxu0
      %v2113 = vadd.f32 0.0, %v2112
      %v2114 = vpop.f32.mrb[0].mxu0
      %2115 = vmatprep.mubr.bf16.mxu0 %v633
      %2116 = vmatmul.mubr.bf16.gmra.mrb[0].mxu0 %v388
      %v2117 = vpop.f32.mrb[0].mxu0
      %v2118 = vadd.f32 0.0, %v2117
      %v2119 = vpop.f32.mrb[0].mxu0
      %v2120 = vpop.f32.mrb[0].mxu0
      %v2121 = vadd.f32 0.0, %v2120
      %v2122 = vpop.f32.mrb[0].mxu0
      %2123 = vmatprep.mubr.bf16.mxu0 %v645
      %2124 = vmatmul.mubr.bf16.gmra.mrb[0].mxu0 %v389
      %v2125 = vpop.f32.mrb[0].mxu0
      %v2126 = vadd.f32 0.0, %v2125
      %v2127 = vpop.f32.mrb[0].mxu0
      %v2128 = vpop.f32.mrb[0].mxu0
      %v2129 = vadd.f32 0.0, %v2128
      %v2130 = vpop.f32.mrb[0].mxu0
      %2131 = vmatprep.mubr.bf16.mxu0 %v657
      %2132 = vmatmul.mubr.bf16.gmra.mrb[0].mxu0 %v390
      %v2133 = vpop.f32.mrb[0].mxu0
      %v2134 = vadd.f32 0.0, %v2133
      %v2135 = vpop.f32.mrb[0].mxu0
      %v2136 = vpop.f32.mrb[0].mxu0
      %v2137 = vadd.f32 0.0, %v2136
      %v2138 = vpop.f32.mrb[0].mxu0
      %2139 = vmatprep.mubr.bf16.mxu0 %v669
      %2140 = vmatmul.mubr.bf16.gmra.mrb[0].mxu0 %v391
      %v2141 = vpop.f32.mrb[0].mxu0
      %v2142 = vadd.f32 0.0, %v2141
      %v2143 = vpop.f32.mrb[0].mxu0
      %v2144 = vpop.f32.mrb[0].mxu0
      %v2145 = vadd.f32 0.0, %v2144
      %v2146 = vpop.f32.mrb[0].mxu0
      %2147 = vmatprep.mubr.bf16.mxu0 %v681
      %2148 = vmatmul.mubr.bf16.gmra.mrb[0].mxu0 %v392
      %v2149 = vpop.f32.mrb[0].mxu0
      %v2150 = vadd.f32 0.0, %v2149
      %v2151 = vpop.f32.mrb[0].mxu0
      %v2152 = vpop.f32.mrb[0].mxu0
      %v2153 = vadd.f32 0.0, %v2152
      %v2154 = vpop.f32.mrb[0].mxu0
      %2155 = vdwg.mxu0
      %2156 = vmatprep.subr.bf16.mxu0 0
      %2157 = vmatpush1.bf16.msra.mxu0 %v1963
      %2158 = vmatprep.subr.bf16.mxu0 0
      %2159 = vmatpush1.bf16.msra.mxu0 %v1964
      %2160 = vmatprep.subr.bf16.mxu0 0
      %2161 = vmatpush1.bf16.msra.mxu0 %v1965
      %2162 = vmatprep.subr.bf16.mxu0 0
      %2163 = vmatpush1.bf16.msra.mxu0 %v1966
      %2164 = vmatprep.subr.bf16.mxu0 0
      %2165 = vmatpush1.bf16.msra.mxu0 %v1967
      %2166 = vmatprep.subr.bf16.mxu0 0
      %2167 = vmatpush1.bf16.msra.mxu0 %v1968
      %2168 = vmatprep.subr.bf16.mxu0 0
      %2169 = vmatpush1.bf16.msra.mxu0 %v1969
      %2170 = vmatprep.subr.bf16.mxu0 0
      %2171 = vmatpush1.bf16.msra.mxu0 %v1970
      %2172 = vmatprep.subr.bf16.mxu0 0
      %2173 = vmatpush1.bf16.msra.mxu0 0
      %2174 = vmatprep.subr.bf16.mxu0 0
      %2175 = vmatpush1.bf16.msra.mxu0 0
      %2176 = vmatprep.subr.bf16.mxu0 0
      %2177 = vmatpush1.bf16.msra.mxu0 0
      %2178 = vmatprep.subr.bf16.mxu0 0
      %2179 = vmatpush1.bf16.msra.mxu0 0
      %2180 = vmatprep.subr.bf16.mxu0 0
      %2181 = vmatpush1.bf16.msra.mxu0 0
      %2182 = vmatprep.subr.bf16.mxu0 0
      %2183 = vmatpush1.bf16.msra.mxu0 0
      %2184 = vmatprep.subr.bf16.mxu0 0
      %2185 = vmatpush1.bf16.msra.mxu0 0
      %2186 = vmatprep.subr.bf16.mxu0 0
      %2187 = vmatpush1.bf16.msra.mxu0 0
      %2188 = vmatprep.mubr.bf16.mxu0 0
      %2189 = vmatmul.mubr.bf16.gmra.mrb[0].mxu0 %v709
      %v2190 = vpop.f32.mrb[0].mxu0
      %v2191 = vadd.f32 %v2030, %v2190
      %v2192 = vpop.f32.mrb[0].mxu0
      %v2193 = vpop.f32.mrb[0].mxu0
      %v2194 = vadd.f32 %v2033, %v2193
      %v2195 = vpop.f32.mrb[0].mxu0
      %2196 = vmatprep.mubr.bf16.mxu0 0
      %2197 = vmatmul.mubr.bf16.gmra.mrb[0].mxu0 %v712
      %v2198 = vpop.f32.mrb[0].mxu0
      %v2199 = vadd.f32 %v2038, %v2198
      %v2200 = vpop.f32.mrb[0].mxu0
      %v2201 = vpop.f32.mrb[0].mxu0
      %v2202 = vadd.f32 %v2041, %v2201
      %v2203 = vpop.f32.mrb[0].mxu0
      %2204 = vmatprep.mubr.bf16.mxu0 0
      %2205 = vmatmul.mubr.bf16.gmra.mrb[0].mxu0 %v715
      %v2206 = vpop.f32.mrb[0].mxu0
      %v2207 = vadd.f32 %v2046, %v2206
      %v2208 = vpop.f32.mrb[0].mxu0
      %v2209 = vpop.f32.mrb[0].mxu0
      %v2210 = vadd.f32 %v2049, %v2209
      %v2211 = vpop.f32.mrb[0].mxu0
      %2212 = vmatprep.mubr.bf16.mxu0 0
      %2213 = vmatmul.mubr.bf16.gmra.mrb[0].mxu0 %v718
      %v2214 = vpop.f32.mrb[0].mxu0
      %v2215 = vadd.f32 %v2054, %v2214
      %v2216 = vpop.f32.mrb[0].mxu0
      %v2217 = vpop.f32.mrb[0].mxu0
      %v2218 = vadd.f32 %v2057, %v2217
      %v2219 = vpop.f32.mrb[0].mxu0
      %2220 = vmatprep.mubr.bf16.mxu0 0
      %2221 = vmatmul.mubr.bf16.gmra.mrb[0].mxu0 %v721
      %v2222 = vpop.f32.mrb[0].mxu0
      %v2223 = vadd.f32 %v2062, %v2222
      %v2224 = vpop.f32.mrb[0].mxu0
      %v2225 = vpop.f32.mrb[0].mxu0
      %v2226 = vadd.f32 %v2065, %v2225
      %v2227 = vpop.f32.mrb[0].mxu0
      %2228 = vmatprep.mubr.bf16.mxu0 0
      %2229 = vmatmul.mubr.bf16.gmra.mrb[0].mxu0 %v724
      %v2230 = vpop.f32.mrb[0].mxu0
      %v2231 = vadd.f32 %v2070, %v2230
      %v2232 = vpop.f32.mrb[0].mxu0
      %v2233 = vpop.f32.mrb[0].mxu0
      %v2234 = vadd.f32 %v2073, %v2233
      %v2235 = vpop.f32.mrb[0].mxu0
      %2236 = vmatprep.mubr.bf16.mxu0 0
      %2237 = vmatmul.mubr.bf16.gmra.mrb[0].mxu0 %v727
      %v2238 = vpop.f32.mrb[0].mxu0
      %v2239 = vadd.f32 %v2078, %v2238
      %v2240 = vpop.f32.mrb[0].mxu0
      %v2241 = vpop.f32.mrb[0].mxu0
      %v2242 = vadd.f32 %v2081, %v2241
      %v2243 = vpop.f32.mrb[0].mxu0
      %2244 = vmatprep.mubr.bf16.mxu0 0
      %2245 = vmatmul.mubr.bf16.gmra.mrb[0].mxu0 %v730
      %v2246 = vpop.f32.mrb[0].mxu0
      %v2247 = vadd.f32 %v2086, %v2246
      %v2248 = vpop.f32.mrb[0].mxu0
      %v2249 = vpop.f32.mrb[0].mxu0
      %v2250 = vadd.f32 %v2089, %v2249
      %v2251 = vpop.f32.mrb[0].mxu0
      %2252 = vmatprep.mubr.bf16.mxu0 0
      %2253 = vmatmul.mubr.bf16.gmra.mrb[0].mxu0 %v733
      %v2254 = vpop.f32.mrb[0].mxu0
      %v2255 = vadd.f32 %v2094, %v2254
      %v2256 = vpop.f32.mrb[0].mxu0
      %v2257 = vpop.f32.mrb[0].mxu0
      %v2258 = vadd.f32 %v2097, %v2257
      %v2259 = vpop.f32.mrb[0].mxu0
      %2260 = vmatprep.mubr.bf16.mxu0 0
      %2261 = vmatmul.mubr.bf16.gmra.mrb[0].mxu0 %v736
      %v2262 = vpop.f32.mrb[0].mxu0
      %v2263 = vadd.f32 %v2102, %v2262
      %v2264 = vpop.f32.mrb[0].mxu0
      %v2265 = vpop.f32.mrb[0].mxu0
      %v2266 = vadd.f32 %v2105, %v2265
      %v2267 = vpop.f32.mrb[0].mxu0
      %2268 = vmatprep.mubr.bf16.mxu0 0
      %2269 = vmatmul.mubr.bf16.gmra.mrb[0].mxu0 %v739
      %v2270 = vpop.f32.mrb[0].mxu0
      %v2271 = vadd.f32 %v2110, %v2270
      %v2272 = vpop.f32.mrb[0].mxu0
      %v2273 = vpop.f32.mrb[0].mxu0
      %v2274 = vadd.f32 %v2113, %v2273
      %v2275 = vpop.f32.mrb[0].mxu0
      %2276 = vmatprep.mubr.bf16.mxu0 0
      %2277 = vmatmul.mubr.bf16.gmra.mrb[0].mxu0 %v742
      %v2278 = vpop.f32.mrb[0].mxu0
      %v2279 = vadd.f32 %v2118, %v2278
      %v2280 = vpop.f32.mrb[0].mxu0
      %v2281 = vpop.f32.mrb[0].mxu0
      %v2282 = vadd.f32 %v2121, %v2281
      %v2283 = vpop.f32.mrb[0].mxu0
      %2284 = vmatprep.mubr.bf16.mxu0 0
      %2285 = vmatmul.mubr.bf16.gmra.mrb[0].mxu0 %v745
      %v2286 = vpop.f32.mrb[0].mxu0
      %v2287 = vadd.f32 %v2126, %v2286
      %v2288 = vpop.f32.mrb[0].mxu0
      %v2289 = vpop.f32.mrb[0].mxu0
      %v2290 = vadd.f32 %v2129, %v2289
      %v2291 = vpop.f32.mrb[0].mxu0
      %2292 = vmatprep.mubr.bf16.mxu0 0
      %2293 = vmatmul.mubr.bf16.gmra.mrb[0].mxu0 %v748
      %v2294 = vpop.f32.mrb[0].mxu0
      %v2295 = vadd.f32 %v2134, %v2294
      %v2296 = vpop.f32.mrb[0].mxu0
      %v2297 = vpop.f32.mrb[0].mxu0
      %v2298 = vadd.f32 %v2137, %v2297
      %v2299 = vpop.f32.mrb[0].mxu0
      %2300 = vmatprep.mubr.bf16.mxu0 0
      %2301 = vmatmul.mubr.bf16.gmra.mrb[0].mxu0 %v751
      %v2302 = vpop.f32.mrb[0].mxu0
      %v2303 = vadd.f32 %v2142, %v2302
      %v2304 = vpop.f32.mrb[0].mxu0
      %v2305 = vpop.f32.mrb[0].mxu0
      %v2306 = vadd.f32 %v2145, %v2305
      %v2307 = vpop.f32.mrb[0].mxu0
      %2308 = vmatprep.mubr.bf16.mxu0 0
      %2309 = vmatmul.mubr.bf16.gmra.mrb[0].mxu0 %v754
      %v2310 = vpop.f32.mrb[0].mxu0
      %v2311 = vadd.f32 %v2150, %v2310
      %v2312 = vpop.f32.mrb[0].mxu0
      %v2313 = vpop.f32.mrb[0].mxu0
      %v2314 = vadd.f32 %v2153, %v2313
      %v2315 = vpop.f32.mrb[0].mxu0
      %2316 = vdwg.mxu0
      %v2317 = vadd.f32 %v1676, %v2191
      %v2318 = vadd.f32 %v1679, %v2194
      %v2319 = vadd.f32 %v1684, %v2199
      %v2320 = vadd.f32 %v1687, %v2202
      %v2321 = vadd.f32 %v1692, %v2207
      %v2322 = vadd.f32 %v1695, %v2210
      %v2323 = vadd.f32 %v1700, %v2215
      %v2324 = vadd.f32 %v1703, %v2218
      %v2325 = vadd.f32 %v1708, %v2223
      %v2326 = vadd.f32 %v1711, %v2226
      %v2327 = vadd.f32 %v1716, %v2231
      %v2328 = vadd.f32 %v1719, %v2234
      %v2329 = vadd.f32 %v1724, %v2239
      %v2330 = vadd.f32 %v1727, %v2242
      %v2331 = vadd.f32 %v1732, %v2247
      %v2332 = vadd.f32 %v1735, %v2250
      %v2333 = vadd.f32 %v1740, %v2255
      %v2334 = vadd.f32 %v1743, %v2258
      %v2335 = vadd.f32 %v1748, %v2263
      %v2336 = vadd.f32 %v1751, %v2266
      %v2337 = vadd.f32 %v1756, %v2271
      %v2338 = vadd.f32 %v1759, %v2274
      %v2339 = vadd.f32 %v1764, %v2279
      %v2340 = vadd.f32 %v1767, %v2282
      %v2341 = vadd.f32 %v1772, %v2287
      %v2342 = vadd.f32 %v1775, %v2290
      %v2343 = vadd.f32 %v1780, %v2295
      %v2344 = vadd.f32 %v1783, %v2298
      %v2345 = vadd.f32 %v1788, %v2303
      %v2346 = vadd.f32 %v1791, %v2306
      %v2347 = vadd.f32 %v1796, %v2311
      %v2348 = vadd.f32 %v1799, %v2314
      %v2349 = vpack.c.bf16 %v2318, %v2317
      %v2350 = vpack.c.bf16 %v2320, %v2319
      %v2351 = vpack.c.bf16 %v2322, %v2321
      %v2352 = vpack.c.bf16 %v2324, %v2323
      %v2353 = vpack.c.bf16 %v2326, %v2325
      %v2354 = vpack.c.bf16 %v2328, %v2327
      %v2355 = vpack.c.bf16 %v2330, %v2329
      %v2356 = vpack.c.bf16 %v2332, %v2331
      %v2357 = vpack.c.bf16 %v2334, %v2333
      %v2358 = vpack.c.bf16 %v2336, %v2335
      %v2359 = vpack.c.bf16 %v2338, %v2337
      %v2360 = vpack.c.bf16 %v2340, %v2339
      %v2361 = vpack.c.bf16 %v2342, %v2341
      %v2362 = vpack.c.bf16 %v2344, %v2343
      %v2363 = vpack.c.bf16 %v2346, %v2345
      %v2364 = vpack.c.bf16 %v2348, %v2347
      %v2381 = vunpack.c.l.b16 %v2349
      %v2382 = vunpack.c.h.b16 %v2349
      %v2383 = vunpack.c.l.b16 %v2350
      %v2384 = vunpack.c.h.b16 %v2350
      %v2385 = vunpack.c.l.b16 %v2351
      %v2386 = vunpack.c.h.b16 %v2351
      %v2387 = vunpack.c.l.b16 %v2352
      %v2388 = vunpack.c.h.b16 %v2352
      %v2389 = vunpack.c.l.b16 %v2353
      %v2390 = vunpack.c.h.b16 %v2353
      %v2391 = vunpack.c.l.b16 %v2354
      %v2392 = vunpack.c.h.b16 %v2354
      %v2393 = vunpack.c.l.b16 %v2355
      %v2394 = vunpack.c.h.b16 %v2355
      %v2395 = vunpack.c.l.b16 %v2356
      %v2396 = vunpack.c.h.b16 %v2356
      %v2397 = vunpack.c.l.b16 %v2357
      %v2398 = vunpack.c.h.b16 %v2357
      %v2399 = vunpack.c.l.b16 %v2358
      %v2400 = vunpack.c.h.b16 %v2358
      %v2401 = vunpack.c.l.b16 %v2359
      %v2402 = vunpack.c.h.b16 %v2359
      %v2403 = vunpack.c.l.b16 %v2360
      %v2404 = vunpack.c.h.b16 %v2360
      %v2405 = vunpack.c.l.b16 %v2361
      %v2406 = vunpack.c.h.b16 %v2361
      %v2407 = vunpack.c.l.b16 %v2362
      %v2408 = vunpack.c.h.b16 %v2362
      %v2409 = vunpack.c.l.b16 %v2363
      %v2410 = vunpack.c.h.b16 %v2363
      %v2411 = vunpack.c.l.b16 %v2364
      %v2412 = vunpack.c.h.b16 %v2364
      %v2413 = vpack.c.b16 %v2381, %v2381
      %v2414 = vpack.c.b16 %v2382, %v2382
      %v2415 = vpack.c.b16 %v2383, %v2383
      %v2416 = vpack.c.b16 %v2384, %v2384
      %v2417 = vpack.c.b16 %v2385, %v2385
      %v2418 = vpack.c.b16 %v2386, %v2386
      %v2419 = vpack.c.b16 %v2387, %v2387
      %v2420 = vpack.c.b16 %v2388, %v2388
      %v2421 = vpack.c.b16 %v2389, %v2389
      %v2422 = vpack.c.b16 %v2390, %v2390
      %v2423 = vpack.c.b16 %v2391, %v2391
      %v2424 = vpack.c.b16 %v2392, %v2392
      %v2425 = vpack.c.b16 %v2393, %v2393
      %v2426 = vpack.c.b16 %v2394, %v2394
      %v2427 = vpack.c.b16 %v2395, %v2395
      %v2428 = vpack.c.b16 %v2396, %v2396
      %v2429 = vpack.c.b16 %v2397, %v2397
      %v2430 = vpack.c.b16 %v2398, %v2398
      %v2431 = vpack.c.b16 %v2399, %v2399
      %v2432 = vpack.c.b16 %v2400, %v2400
      %v2433 = vpack.c.b16 %v2401, %v2401
      %v2434 = vpack.c.b16 %v2402, %v2402
      %v2435 = vpack.c.b16 %v2403, %v2403
      %v2436 = vpack.c.b16 %v2404, %v2404
      %v2437 = vpack.c.b16 %v2405, %v2405
      %v2438 = vpack.c.b16 %v2406, %v2406
      %v2439 = vpack.c.b16 %v2407, %v2407
      %v2440 = vpack.c.b16 %v2408, %v2408
      %v2441 = vpack.c.b16 %v2409, %v2409
      %v2442 = vpack.c.b16 %v2410, %v2410
      %v2443 = vpack.c.b16 %v2411, %v2411
      %v2444 = vpack.c.b16 %v2412, %v2412
      %2477 = vst [vmem:[%s238] sm:$0xf] %v2413
      %2478 = vst [vmem:[%s238 + $0x4] sm:$0xf] %v2414
      %2479 = vst [vmem:[%s238 + $0x8] sm:$0xf] %v2415
      %2480 = vst [vmem:[%s238 + $0xc] sm:$0xf] %v2416
      %2481 = vst [vmem:[%s238 + $0x10] sm:$0xf] %v2417
      %2482 = vst [vmem:[%s238 + $0x14] sm:$0xf] %v2418
      %2483 = vst [vmem:[%s238 + $0x18] sm:$0xf] %v2419
      %2484 = vst [vmem:[%s238 + $0x1c] sm:$0xf] %v2420
      %2485 = vst [vmem:[%s238 + $0x20] sm:$0xf] %v2421
      %2486 = vst [vmem:[%s238 + $0x24] sm:$0xf] %v2422
      %2487 = vst [vmem:[%s238 + $0x28] sm:$0xf] %v2423
      %2488 = vst [vmem:[%s238 + $0x2c] sm:$0xf] %v2424
      %2489 = vst [vmem:[%s238 + $0x30] sm:$0xf] %v2425
      %2490 = vst [vmem:[%s238 + $0x34] sm:$0xf] %v2426
      %2491 = vst [vmem:[%s238 + $0x38] sm:$0xf] %v2427
      %2492 = vst [vmem:[%s238 + $0x3c] sm:$0xf] %v2428
      %2493 = vst [vmem:[%s238 + $0x40] sm:$0xf] %v2429
      %2494 = vst [vmem:[%s238 + $0x44] sm:$0xf] %v2430
      %2495 = vst [vmem:[%s238 + $0x48] sm:$0xf] %v2431
      %2496 = vst [vmem:[%s238 + $0x4c] sm:$0xf] %v2432
      %2497 = vst [vmem:[%s238 + $0x50] sm:$0xf] %v2433
      %2498 = vst [vmem:[%s238 + $0x54] sm:$0xf] %v2434
      %2499 = vst [vmem:[%s238 + $0x58] sm:$0xf] %v2435
      %2500 = vst [vmem:[%s238 + $0x5c] sm:$0xf] %v2436
      %2501 = vst [vmem:[%s238 + $0x60] sm:$0xf] %v2437
      %2502 = vst [vmem:[%s238 + $0x64] sm:$0xf] %v2438
      %2503 = vst [vmem:[%s238 + $0x68] sm:$0xf] %v2439
      %2504 = vst [vmem:[%s238 + $0x6c] sm:$0xf] %v2440
      %2505 = vst [vmem:[%s238 + $0x70] sm:$0xf] %v2441
      %2506 = vst [vmem:[%s238 + $0x74] sm:$0xf] %v2442
      %2507 = vst [vmem:[%s238 + $0x78] sm:$0xf] %v2443
      %2508 = vst [vmem:[%s238 + $0x7c] sm:$0xf] %v2444
      %v2509 = vld [vmem:[%s2] sm:$0xf]
      %v2510 = vld [vmem:[%s2 + $0x4] sm:$0xf]
      %v2511 = vld [vmem:[%s2 + $0x8] sm:$0xf]
      %v2512 = vld [vmem:[%s2 + $0xc] sm:$0xf]
      %v2513 = vld [vmem:[%s2 + $0x10] sm:$0xf]
      %v2514 = vld [vmem:[%s2 + $0x14] sm:$0xf]
      %v2515 = vld [vmem:[%s2 + $0x18] sm:$0xf]
      %v2516 = vld [vmem:[%s2 + $0x1c] sm:$0xf]
      %v2517 = vld [vmem:[%s2 + $0x20] sm:$0xf]
      %v2518 = vld [vmem:[%s2 + $0x24] sm:$0xf]
      %v2519 = vld [vmem:[%s2 + $0x28] sm:$0xf]
      %v2520 = vld [vmem:[%s2 + $0x2c] sm:$0xf]
      %v2521 = vld [vmem:[%s2 + $0x30] sm:$0xf]
      %v2522 = vld [vmem:[%s2 + $0x34] sm:$0xf]
      %v2523 = vld [vmem:[%s2 + $0x38] sm:$0xf]
      %v2524 = vld [vmem:[%s2 + $0x3c] sm:$0xf]
      %v2541 = vunpack.c.l.b16 %v2509
      %v2542 = vunpack.c.l.b16 %v2510
      %v2543 = vunpack.c.l.b16 %v2511
      %v2544 = vunpack.c.l.b16 %v2512
      %v2545 = vunpack.c.l.b16 %v2513
      %v2546 = vunpack.c.l.b16 %v2514
      %v2547 = vunpack.c.l.b16 %v2515
      %v2548 = vunpack.c.l.b16 %v2516
      %v2549 = vunpack.c.l.b16 %v2517
      %v2550 = vunpack.c.l.b16 %v2518
      %v2551 = vunpack.c.l.b16 %v2519
      %v2552 = vunpack.c.l.b16 %v2520
      %v2553 = vunpack.c.l.b16 %v2521
      %v2554 = vunpack.c.l.b16 %v2522
      %v2555 = vunpack.c.l.b16 %v2523
      %v2556 = vunpack.c.l.b16 %v2524
      %v2557 = vpack.c.b16 %v2542, %v2541
      %v2558 = vpack.c.b16 %v2544, %v2543
      %v2559 = vpack.c.b16 %v2546, %v2545
      %v2560 = vpack.c.b16 %v2548, %v2547
      %v2561 = vpack.c.b16 %v2550, %v2549
      %v2562 = vpack.c.b16 %v2552, %v2551
      %v2563 = vpack.c.b16 %v2554, %v2553
      %v2564 = vpack.c.b16 %v2556, %v2555
      %2573 = vmatprep.subr.bf16.mxu0 0
      %2574 = vmatpush1.bf16.msra.mxu0 %v2557
      %2575 = vmatprep.subr.bf16.mxu0 0
      %2576 = vmatpush1.bf16.msra.mxu0 %v2558
      %2577 = vmatprep.subr.bf16.mxu0 0
      %2578 = vmatpush1.bf16.msra.mxu0 %v2559
      %2579 = vmatprep.subr.bf16.mxu0 0
      %2580 = vmatpush1.bf16.msra.mxu0 %v2560
      %2581 = vmatprep.subr.bf16.mxu0 0
      %2582 = vmatpush1.bf16.msra.mxu0 %v2561
      %2583 = vmatprep.subr.bf16.mxu0 0
      %2584 = vmatpush1.bf16.msra.mxu0 %v2562
      %2585 = vmatprep.subr.bf16.mxu0 0
      %2586 = vmatpush1.bf16.msra.mxu0 %v2563
      %2587 = vmatprep.subr.bf16.mxu0 0
      %2588 = vmatpush1.bf16.msra.mxu0 %v2564
      %2589 = vmatprep.subr.bf16.mxu0 0
      %2590 = vmatpush1.bf16.msra.mxu0 0
      %2591 = vmatprep.subr.bf16.mxu0 0
      %2592 = vmatpush1.bf16.msra.mxu0 0
      %2593 = vmatprep.subr.bf16.mxu0 0
      %2594 = vmatpush1.bf16.msra.mxu0 0
      %2595 = vmatprep.subr.bf16.mxu0 0
      %2596 = vmatpush1.bf16.msra.mxu0 0
      %2597 = vmatprep.subr.bf16.mxu0 0
      %2598 = vmatpush1.bf16.msra.mxu0 0
      %2599 = vmatprep.subr.bf16.mxu0 0
      %2600 = vmatpush1.bf16.msra.mxu0 0
      %2601 = vmatprep.subr.bf16.mxu0 0
      %2602 = vmatpush1.bf16.msra.mxu0 0
      %2603 = vmatprep.subr.bf16.mxu0 0
      %2604 = vmatpush1.bf16.msra.mxu0 0
      %2605 = vmatprep.mubr.bf16.mxu0 0
      %2606 = vmatmul.mubr.bf16.gmra.mrb[0].mxu0 %v489
      %v2607 = vpop.f32.mrb[0].mxu0
      %v2608 = vadd.f32 0.0, %v2607
      %v2609 = vpop.f32.mrb[0].mxu0
      %v2610 = vpop.f32.mrb[0].mxu0
      %v2611 = vadd.f32 0.0, %v2610
      %v2612 = vpop.f32.mrb[0].mxu0
      %2613 = vmatprep.mubr.bf16.mxu0 0
      %2614 = vmatmul.mubr.bf16.gmra.mrb[0].mxu0 %v501
      %v2615 = vpop.f32.mrb[0].mxu0
      %v2616 = vadd.f32 0.0, %v2615
      %v2617 = vpop.f32.mrb[0].mxu0
      %v2618 = vpop.f32.mrb[0].mxu0
      %v2619 = vadd.f32 0.0, %v2618
      %v2620 = vpop.f32.mrb[0].mxu0
      %2621 = vmatprep.mubr.bf16.mxu0 0
      %2622 = vmatmul.mubr.bf16.gmra.mrb[0].mxu0 %v513
      %v2623 = vpop.f32.mrb[0].mxu0
      %v2624 = vadd.f32 0.0, %v2623
      %v2625 = vpop.f32.mrb[0].mxu0
      %v2626 = vpop.f32.mrb[0].mxu0
      %v2627 = vadd.f32 0.0, %v2626
      %v2628 = vpop.f32.mrb[0].mxu0
      %2629 = vmatprep.mubr.bf16.mxu0 0
      %2630 = vmatmul.mubr.bf16.gmra.mrb[0].mxu0 %v525
      %v2631 = vpop.f32.mrb[0].mxu0
      %v2632 = vadd.f32 0.0, %v2631
      %v2633 = vpop.f32.mrb[0].mxu0
      %v2634 = vpop.f32.mrb[0].mxu0
      %v2635 = vadd.f32 0.0, %v2634
      %v2636 = vpop.f32.mrb[0].mxu0
      %2637 = vmatprep.mubr.bf16.mxu0 0
      %2638 = vmatmul.mubr.bf16.gmra.mrb[0].mxu0 %v537
      %v2639 = vpop.f32.mrb[0].mxu0
      %v2640 = vadd.f32 0.0, %v2639
      %v2641 = vpop.f32.mrb[0].mxu0
      %v2642 = vpop.f32.mrb[0].mxu0
      %v2643 = vadd.f32 0.0, %v2642
      %v2644 = vpop.f32.mrb[0].mxu0
      %2645 = vmatprep.mubr.bf16.mxu0 0
      %2646 = vmatmul.mubr.bf16.gmra.mrb[0].mxu0 %v549
      %v2647 = vpop.f32.mrb[0].mxu0
      %v2648 = vadd.f32 0.0, %v2647
      %v2649 = vpop.f32.mrb[0].mxu0
      %v2650 = vpop.f32.mrb[0].mxu0
      %v2651 = vadd.f32 0.0, %v2650
      %v2652 = vpop.f32.mrb[0].mxu0
      %2653 = vmatprep.mubr.bf16.mxu0 0
      %2654 = vmatmul.mubr.bf16.gmra.mrb[0].mxu0 %v561
      %v2655 = vpop.f32.mrb[0].mxu0
      %v2656 = vadd.f32 0.0, %v2655
      %v2657 = vpop.f32.mrb[0].mxu0
      %v2658 = vpop.f32.mrb[0].mxu0
      %v2659 = vadd.f32 0.0, %v2658
      %v2660 = vpop.f32.mrb[0].mxu0
      %2661 = vmatprep.mubr.bf16.mxu0 0
      %2662 = vmatmul.mubr.bf16.gmra.mrb[0].mxu0 %v573
      %v2663 = vpop.f32.mrb[0].mxu0
      %v2664 = vadd.f32 0.0, %v2663
      %v2665 = vpop.f32.mrb[0].mxu0
      %v2666 = vpop.f32.mrb[0].mxu0
      %v2667 = vadd.f32 0.0, %v2666
      %v2668 = vpop.f32.mrb[0].mxu0
      %2669 = vmatprep.mubr.bf16.mxu0 0
      %2670 = vmatmul.mubr.bf16.gmra.mrb[0].mxu0 %v585
      %v2671 = vpop.f32.mrb[0].mxu0
      %v2672 = vadd.f32 0.0, %v2671
      %v2673 = vpop.f32.mrb[0].mxu0
      %v2674 = vpop.f32.mrb[0].mxu0
      %v2675 = vadd.f32 0.0, %v2674
      %v2676 = vpop.f32.mrb[0].mxu0
      %2677 = vmatprep.mubr.bf16.mxu0 0
      %2678 = vmatmul.mubr.bf16.gmra.mrb[0].mxu0 %v597
      %v2679 = vpop.f32.mrb[0].mxu0
      %v2680 = vadd.f32 0.0, %v2679
      %v2681 = vpop.f32.mrb[0].mxu0
      %v2682 = vpop.f32.mrb[0].mxu0
      %v2683 = vadd.f32 0.0, %v2682
      %v2684 = vpop.f32.mrb[0].mxu0
      %2685 = vmatprep.mubr.bf16.mxu0 0
      %2686 = vmatmul.mubr.bf16.gmra.mrb[0].mxu0 %v609
      %v2687 = vpop.f32.mrb[0].mxu0
      %v2688 = vadd.f32 0.0, %v2687
      %v2689 = vpop.f32.mrb[0].mxu0
      %v2690 = vpop.f32.mrb[0].mxu0
      %v2691 = vadd.f32 0.0, %v2690
      %v2692 = vpop.f32.mrb[0].mxu0
      %2693 = vmatprep.mubr.bf16.mxu0 0
      %2694 = vmatmul.mubr.bf16.gmra.mrb[0].mxu0 %v621
      %v2695 = vpop.f32.mrb[0].mxu0
      %v2696 = vadd.f32 0.0, %v2695
      %v2697 = vpop.f32.mrb[0].mxu0
      %v2698 = vpop.f32.mrb[0].mxu0
      %v2699 = vadd.f32 0.0, %v2698
      %v2700 = vpop.f32.mrb[0].mxu0
      %2701 = vmatprep.mubr.bf16.mxu0 0
      %2702 = vmatmul.mubr.bf16.gmra.mrb[0].mxu0 %v633
      %v2703 = vpop.f32.mrb[0].mxu0
      %v2704 = vadd.f32 0.0, %v2703
      %v2705 = vpop.f32.mrb[0].mxu0
      %v2706 = vpop.f32.mrb[0].mxu0
      %v2707 = vadd.f32 0.0, %v2706
      %v2708 = vpop.f32.mrb[0].mxu0
      %2709 = vmatprep.mubr.bf16.mxu0 0
      %2710 = vmatmul.mubr.bf16.gmra.mrb[0].mxu0 %v645
      %v2711 = vpop.f32.mrb[0].mxu0
      %v2712 = vadd.f32 0.0, %v2711
      %v2713 = vpop.f32.mrb[0].mxu0
      %v2714 = vpop.f32.mrb[0].mxu0
      %v2715 = vadd.f32 0.0, %v2714
      %v2716 = vpop.f32.mrb[0].mxu0
      %2717 = vmatprep.mubr.bf16.mxu0 0
      %2718 = vmatmul.mubr.bf16.gmra.mrb[0].mxu0 %v657
      %v2719 = vpop.f32.mrb[0].mxu0
      %v2720 = vadd.f32 0.0, %v2719
      %v2721 = vpop.f32.mrb[0].mxu0
      %v2722 = vpop.f32.mrb[0].mxu0
      %v2723 = vadd.f32 0.0, %v2722
      %v2724 = vpop.f32.mrb[0].mxu0
      %2725 = vmatprep.mubr.bf16.mxu0 0
      %2726 = vmatmul.mubr.bf16.gmra.mrb[0].mxu0 %v669
      %v2727 = vpop.f32.mrb[0].mxu0
      %v2728 = vadd.f32 0.0, %v2727
      %v2729 = vpop.f32.mrb[0].mxu0
      %v2730 = vpop.f32.mrb[0].mxu0
      %v2731 = vadd.f32 0.0, %v2730
      %v2732 = vpop.f32.mrb[0].mxu0
      %2733 = vdwg.mxu0
      %v2734 = vpack.c.bf16 %v2611, %v2608
      %v2735 = vpack.c.bf16 %v2619, %v2616
      %v2736 = vpack.c.bf16 %v2627, %v2624
      %v2737 = vpack.c.bf16 %v2635, %v2632
      %v2738 = vpack.c.bf16 %v2643, %v2640
      %v2739 = vpack.c.bf16 %v2651, %v2648
      %v2740 = vpack.c.bf16 %v2659, %v2656
      %v2741 = vpack.c.bf16 %v2667, %v2664
      %v2742 = vpack.c.bf16 %v2675, %v2672
      %v2743 = vpack.c.bf16 %v2683, %v2680
      %v2744 = vpack.c.bf16 %v2691, %v2688
      %v2745 = vpack.c.bf16 %v2699, %v2696
      %v2746 = vpack.c.bf16 %v2707, %v2704
      %v2747 = vpack.c.bf16 %v2715, %v2712
      %v2748 = vpack.c.bf16 %v2723, %v2720
      %v2749 = vpack.c.bf16 %v2731, %v2728
      %v2766 = vunpack.c.l.b16 %v2734
      %v2767 = vunpack.c.h.b16 %v2734
      %v2768 = vunpack.c.l.b16 %v2735
      %v2769 = vunpack.c.h.b16 %v2735
      %v2770 = vunpack.c.l.b16 %v2736
      %v2771 = vunpack.c.h.b16 %v2736
      %v2772 = vunpack.c.l.b16 %v2737
      %v2773 = vunpack.c.h.b16 %v2737
      %v2774 = vunpack.c.l.b16 %v2738
      %v2775 = vunpack.c.h.b16 %v2738
      %v2776 = vunpack.c.l.b16 %v2739
      %v2777 = vunpack.c.h.b16 %v2739
      %v2778 = vunpack.c.l.b16 %v2740
      %v2779 = vunpack.c.h.b16 %v2740
      %v2780 = vunpack.c.l.b16 %v2741
      %v2781 = vunpack.c.h.b16 %v2741
      %v2782 = vunpack.c.l.b16 %v2742
      %v2783 = vunpack.c.h.b16 %v2742
      %v2784 = vunpack.c.l.b16 %v2743
      %v2785 = vunpack.c.h.b16 %v2743
      %v2786 = vunpack.c.l.b16 %v2744
      %v2787 = vunpack.c.h.b16 %v2744
      %v2788 = vunpack.c.l.b16 %v2745
      %v2789 = vunpack.c.h.b16 %v2745
      %v2790 = vunpack.c.l.b16 %v2746
      %v2791 = vunpack.c.h.b16 %v2746
      %v2792 = vunpack.c.l.b16 %v2747
      %v2793 = vunpack.c.h.b16 %v2747
      %v2794 = vunpack.c.l.b16 %v2748
      %v2795 = vunpack.c.h.b16 %v2748
      %v2796 = vunpack.c.l.b16 %v2749
      %v2797 = vunpack.c.h.b16 %v2749
      %v2798 = vpack.c.b16 %v2766, %v2766
      %v2799 = vpack.c.b16 %v2767, %v2767
      %v2800 = vpack.c.b16 %v2768, %v2768
      %v2801 = vpack.c.b16 %v2769, %v2769
      %v2802 = vpack.c.b16 %v2770, %v2770
      %v2803 = vpack.c.b16 %v2771, %v2771
      %v2804 = vpack.c.b16 %v2772, %v2772
      %v2805 = vpack.c.b16 %v2773, %v2773
      %v2806 = vpack.c.b16 %v2774, %v2774
      %v2807 = vpack.c.b16 %v2775, %v2775
      %v2808 = vpack.c.b16 %v2776, %v2776
      %v2809 = vpack.c.b16 %v2777, %v2777
      %v2810 = vpack.c.b16 %v2778, %v2778
      %v2811 = vpack.c.b16 %v2779, %v2779
      %v2812 = vpack.c.b16 %v2780, %v2780
      %v2813 = vpack.c.b16 %v2781, %v2781
      %v2814 = vpack.c.b16 %v2782, %v2782
      %v2815 = vpack.c.b16 %v2783, %v2783
      %v2816 = vpack.c.b16 %v2784, %v2784
      %v2817 = vpack.c.b16 %v2785, %v2785
      %v2818 = vpack.c.b16 %v2786, %v2786
      %v2819 = vpack.c.b16 %v2787, %v2787
      %v2820 = vpack.c.b16 %v2788, %v2788
      %v2821 = vpack.c.b16 %v2789, %v2789
      %v2822 = vpack.c.b16 %v2790, %v2790
      %v2823 = vpack.c.b16 %v2791, %v2791
      %v2824 = vpack.c.b16 %v2792, %v2792
      %v2825 = vpack.c.b16 %v2793, %v2793
      %v2826 = vpack.c.b16 %v2794, %v2794
      %v2827 = vpack.c.b16 %v2795, %v2795
      %v2828 = vpack.c.b16 %v2796, %v2796
      %v2829 = vpack.c.b16 %v2797, %v2797
      %2862 = vst [vmem:[%s243] sm:$0xf] %v2798
      %2863 = vst [vmem:[%s243 + $0x4] sm:$0xf] %v2799
      %2864 = vst [vmem:[%s243 + $0x8] sm:$0xf] %v2800
      %2865 = vst [vmem:[%s243 + $0xc] sm:$0xf] %v2801
      %2866 = vst [vmem:[%s243 + $0x10] sm:$0xf] %v2802
      %2867 = vst [vmem:[%s243 + $0x14] sm:$0xf] %v2803
      %2868 = vst [vmem:[%s243 + $0x18] sm:$0xf] %v2804
      %2869 = vst [vmem:[%s243 + $0x1c] sm:$0xf] %v2805
      %2870 = vst [vmem:[%s243 + $0x20] sm:$0xf] %v2806
      %2871 = vst [vmem:[%s243 + $0x24] sm:$0xf] %v2807
      %2872 = vst [vmem:[%s243 + $0x28] sm:$0xf] %v2808
      %2873 = vst [vmem:[%s243 + $0x2c] sm:$0xf] %v2809
      %2874 = vst [vmem:[%s243 + $0x30] sm:$0xf] %v2810
      %2875 = vst [vmem:[%s243 + $0x34] sm:$0xf] %v2811
      %2876 = vst [vmem:[%s243 + $0x38] sm:$0xf] %v2812
      %2877 = vst [vmem:[%s243 + $0x3c] sm:$0xf] %v2813
      %2878 = vst [vmem:[%s243 + $0x40] sm:$0xf] %v2814
      %2879 = vst [vmem:[%s243 + $0x44] sm:$0xf] %v2815
      %2880 = vst [vmem:[%s243 + $0x48] sm:$0xf] %v2816
      %2881 = vst [vmem:[%s243 + $0x4c] sm:$0xf] %v2817
      %2882 = vst [vmem:[%s243 + $0x50] sm:$0xf] %v2818
      %2883 = vst [vmem:[%s243 + $0x54] sm:$0xf] %v2819
      %2884 = vst [vmem:[%s243 + $0x58] sm:$0xf] %v2820
      %2885 = vst [vmem:[%s243 + $0x5c] sm:$0xf] %v2821
      %2886 = vst [vmem:[%s243 + $0x60] sm:$0xf] %v2822
      %2887 = vst [vmem:[%s243 + $0x64] sm:$0xf] %v2823
      %2888 = vst [vmem:[%s243 + $0x68] sm:$0xf] %v2824
      %2889 = vst [vmem:[%s243 + $0x6c] sm:$0xf] %v2825
      %2890 = vst [vmem:[%s243 + $0x70] sm:$0xf] %v2826
      %2891 = vst [vmem:[%s243 + $0x74] sm:$0xf] %v2827
      %2892 = vst [vmem:[%s243 + $0x78] sm:$0xf] %v2828
      %2893 = vst [vmem:[%s243 + $0x7c] sm:$0xf] %v2829
      %v2894 = vadd.f32 %v2317, %v2318
      %v2895 = vadd.f32 %v2894, %v2319
      %v2896 = vadd.f32 %v2895, %v2320
      %v2897 = vadd.f32 %v2896, %v2321
      %v2898 = vadd.f32 %v2897, %v2322
      %v2899 = vadd.f32 %v2898, %v2323
      %v2900 = vadd.f32 %v2899, %v2324
      %v2901 = vadd.f32 %v2900, %v2325
      %v2902 = vadd.f32 %v2901, %v2326
      %v2903 = vadd.f32 %v2902, %v2327
      %v2904 = vadd.f32 %v2903, %v2328
      %v2905 = vadd.f32 %v2904, %v2329
      %v2906 = vadd.f32 %v2905, %v2330
      %v2907 = vadd.f32 %v2906, %v2331
      %v2908 = vadd.f32 %v2907, %v2332
      %v2909 = vadd.f32 %v2908, %v2333
      %v2910 = vadd.f32 %v2909, %v2334
      %v2911 = vadd.f32 %v2910, %v2335
      %v2912 = vadd.f32 %v2911, %v2336
      %v2913 = vadd.f32 %v2912, %v2337
      %v2914 = vadd.f32 %v2913, %v2338
      %v2915 = vadd.f32 %v2914, %v2339
      %v2916 = vadd.f32 %v2915, %v2340
      %v2917 = vadd.f32 %v2916, %v2341
      %v2918 = vadd.f32 %v2917, %v2342
      %v2919 = vadd.f32 %v2918, %v2343
      %v2920 = vadd.f32 %v2919, %v2344
      %v2921 = vadd.f32 %v2920, %v2345
      %v2922 = vadd.f32 %v2921, %v2346
      %v2923 = vadd.f32 %v2922, %v2347
      %v2924 = vadd.f32 %v2923, %v2348
      %v2925 = vrot.slane %v2924, 4
      %v2926 = vadd.f32 %v2924, %v2925
      %v2927 = vrot.slane %v2926, 2
      %v2928 = vadd.f32 %v2926, %v2927
      %v2929 = vrot.slane %v2928, 1
      %v2930 = vadd.f32 %v2928, %v2929
      %v2931 = vmul.f32 %v2317, %v2317
      %v2932 = vmul.f32 %v2318, %v2318
      %v2933 = vmul.f32 %v2319, %v2319
      %v2934 = vmul.f32 %v2320, %v2320
      %v2935 = vmul.f32 %v2321, %v2321
      %v2936 = vmul.f32 %v2322, %v2322
      %v2937 = vmul.f32 %v2323, %v2323
      %v2938 = vmul.f32 %v2324, %v2324
      %v2939 = vmul.f32 %v2325, %v2325
      %v2940 = vmul.f32 %v2326, %v2326
      %v2941 = vmul.f32 %v2327, %v2327
      %v2942 = vmul.f32 %v2328, %v2328
      %v2943 = vmul.f32 %v2329, %v2329
      %v2944 = vmul.f32 %v2330, %v2330
      %v2945 = vmul.f32 %v2331, %v2331
      %v2946 = vmul.f32 %v2332, %v2332
      %v2947 = vmul.f32 %v2333, %v2333
      %v2948 = vmul.f32 %v2334, %v2334
      %v2949 = vmul.f32 %v2335, %v2335
      %v2950 = vmul.f32 %v2336, %v2336
      %v2951 = vmul.f32 %v2337, %v2337
      %v2952 = vmul.f32 %v2338, %v2338
      %v2953 = vmul.f32 %v2339, %v2339
      %v2954 = vmul.f32 %v2340, %v2340
      %v2955 = vmul.f32 %v2341, %v2341
      %v2956 = vmul.f32 %v2342, %v2342
      %v2957 = vmul.f32 %v2343, %v2343
      %v2958 = vmul.f32 %v2344, %v2344
      %v2959 = vmul.f32 %v2345, %v2345
      %v2960 = vmul.f32 %v2346, %v2346
      %v2961 = vmul.f32 %v2347, %v2347
      %v2962 = vmul.f32 %v2348, %v2348
      %v2963 = vadd.f32 %v2931, %v2932
      %v2964 = vadd.f32 %v2963, %v2933
      %v2965 = vadd.f32 %v2964, %v2934
      %v2966 = vadd.f32 %v2965, %v2935
      %v2967 = vadd.f32 %v2966, %v2936
      %v2968 = vadd.f32 %v2967, %v2937
      %v2969 = vadd.f32 %v2968, %v2938
      %v2970 = vadd.f32 %v2969, %v2939
      %v2971 = vadd.f32 %v2970, %v2940
      %v2972 = vadd.f32 %v2971, %v2941
      %v2973 = vadd.f32 %v2972, %v2942
      %v2974 = vadd.f32 %v2973, %v2943
      %v2975 = vadd.f32 %v2974, %v2944
      %v2976 = vadd.f32 %v2975, %v2945
      %v2977 = vadd.f32 %v2976, %v2946
      %v2978 = vadd.f32 %v2977, %v2947
      %v2979 = vadd.f32 %v2978, %v2948
      %v2980 = vadd.f32 %v2979, %v2949
      %v2981 = vadd.f32 %v2980, %v2950
      %v2982 = vadd.f32 %v2981, %v2951
      %v2983 = vadd.f32 %v2982, %v2952
      %v2984 = vadd.f32 %v2983, %v2953
      %v2985 = vadd.f32 %v2984, %v2954
      %v2986 = vadd.f32 %v2985, %v2955
      %v2987 = vadd.f32 %v2986, %v2956
      %v2988 = vadd.f32 %v2987, %v2957
      %v2989 = vadd.f32 %v2988, %v2958
      %v2990 = vadd.f32 %v2989, %v2959
      %v2991 = vadd.f32 %v2990, %v2960
      %v2992 = vadd.f32 %v2991, %v2961
      %v2993 = vadd.f32 %v2992, %v2962
      %v2994 = vrot.slane %v2993, 4
      %v2995 = vadd.f32 %v2993, %v2994
      %v2996 = vrot.slane %v2995, 2
      %v2997 = vadd.f32 %v2995, %v2996
      %v2998 = vrot.slane %v2997, 1
      %v2999 = vadd.f32 %v2997, %v2998
      %v3000 = vadd.f32 %v2608, %v2611
      %v3001 = vadd.f32 %v3000, %v2616
      %v3002 = vadd.f32 %v3001, %v2619
      %v3003 = vadd.f32 %v3002, %v2624
      %v3004 = vadd.f32 %v3003, %v2627
      %v3005 = vadd.f32 %v3004, %v2632
      %v3006 = vadd.f32 %v3005, %v2635
      %v3007 = vadd.f32 %v3006, %v2640
      %v3008 = vadd.f32 %v3007, %v2643
      %v3009 = vadd.f32 %v3008, %v2648
      %v3010 = vadd.f32 %v3009, %v2651
      %v3011 = vadd.f32 %v3010, %v2656
      %v3012 = vadd.f32 %v3011, %v2659
      %v3013 = vadd.f32 %v3012, %v2664
      %v3014 = vadd.f32 %v3013, %v2667
      %v3015 = vadd.f32 %v3014, %v2672
      %v3016 = vadd.f32 %v3015, %v2675
      %v3017 = vadd.f32 %v3016, %v2680
      %v3018 = vadd.f32 %v3017, %v2683
      %v3019 = vadd.f32 %v3018, %v2688
      %v3020 = vadd.f32 %v3019, %v2691
      %v3021 = vadd.f32 %v3020, %v2696
      %v3022 = vadd.f32 %v3021, %v2699
      %v3023 = vadd.f32 %v3022, %v2704
      %v3024 = vadd.f32 %v3023, %v2707
      %v3025 = vadd.f32 %v3024, %v2712
      %v3026 = vadd.f32 %v3025, %v2715
      %v3027 = vadd.f32 %v3026, %v2720
      %v3028 = vadd.f32 %v3027, %v2723
      %v3029 = vadd.f32 %v3028, %v2728
      %v3030 = vadd.f32 %v3029, %v2731
      %v3031 = vrot.slane %v3030, 4
      %v3032 = vadd.f32 %v3030, %v3031
      %v3033 = vrot.slane %v3032, 2
      %v3034 = vadd.f32 %v3032, %v3033
      %v3035 = vrot.slane %v3034, 1
      %v3036 = vadd.f32 %v3034, %v3035
      %v3037 = vmul.f32 %v2608, %v2608
      %v3038 = vmul.f32 %v2611, %v2611
      %v3039 = vmul.f32 %v2616, %v2616
      %v3040 = vmul.f32 %v2619, %v2619
      %v3041 = vmul.f32 %v2624, %v2624
      %v3042 = vmul.f32 %v2627, %v2627
      %v3043 = vmul.f32 %v2632, %v2632
      %v3044 = vmul.f32 %v2635, %v2635
      %v3045 = vmul.f32 %v2640, %v2640
      %v3046 = vmul.f32 %v2643, %v2643
      %v3047 = vmul.f32 %v2648, %v2648
      %v3048 = vmul.f32 %v2651, %v2651
      %v3049 = vmul.f32 %v2656, %v2656
      %v3050 = vmul.f32 %v2659, %v2659
      %v3051 = vmul.f32 %v2664, %v2664
      %v3052 = vmul.f32 %v2667, %v2667
      %v3053 = vmul.f32 %v2672, %v2672
      %v3054 = vmul.f32 %v2675, %v2675
      %v3055 = vmul.f32 %v2680, %v2680
      %v3056 = vmul.f32 %v2683, %v2683
      %v3057 = vmul.f32 %v2688, %v2688
      %v3058 = vmul.f32 %v2691, %v2691
      %v3059 = vmul.f32 %v2696, %v2696
      %v3060 = vmul.f32 %v2699, %v2699
      %v3061 = vmul.f32 %v2704, %v2704
      %v3062 = vmul.f32 %v2707, %v2707
      %v3063 = vmul.f32 %v2712, %v2712
      %v3064 = vmul.f32 %v2715, %v2715
      %v3065 = vmul.f32 %v2720, %v2720
      %v3066 = vmul.f32 %v2723, %v2723
      %v3067 = vmul.f32 %v2728, %v2728
      %v3068 = vmul.f32 %v2731, %v2731
      %v3069 = vadd.f32 %v3037, %v3038
      %v3070 = vadd.f32 %v3069, %v3039
      %v3071 = vadd.f32 %v3070, %v3040
      %v3072 = vadd.f32 %v3071, %v3041
      %v3073 = vadd.f32 %v3072, %v3042
      %v3074 = vadd.f32 %v3073, %v3043
      %v3075 = vadd.f32 %v3074, %v3044
      %v3076 = vadd.f32 %v3075, %v3045
      %v3077 = vadd.f32 %v3076, %v3046
      %v3078 = vadd.f32 %v3077, %v3047
      %v3079 = vadd.f32 %v3078, %v3048
      %v3080 = vadd.f32 %v3079, %v3049
      %v3081 = vadd.f32 %v3080, %v3050
      %v3082 = vadd.f32 %v3081, %v3051
      %v3083 = vadd.f32 %v3082, %v3052
      %v3084 = vadd.f32 %v3083, %v3053
      %v3085 = vadd.f32 %v3084, %v3054
      %v3086 = vadd.f32 %v3085, %v3055
      %v3087 = vadd.f32 %v3086, %v3056
      %v3088 = vadd.f32 %v3087, %v3057
      %v3089 = vadd.f32 %v3088, %v3058
      %v3090 = vadd.f32 %v3089, %v3059
      %v3091 = vadd.f32 %v3090, %v3060
      %v3092 = vadd.f32 %v3091, %v3061
      %v3093 = vadd.f32 %v3092, %v3062
      %v3094 = vadd.f32 %v3093, %v3063
      %v3095 = vadd.f32 %v3094, %v3064
      %v3096 = vadd.f32 %v3095, %v3065
      %v3097 = vadd.f32 %v3096, %v3066
      %v3098 = vadd.f32 %v3097, %v3067
      %v3099 = vadd.f32 %v3098, %v3068
      %v3100 = vrot.slane %v3099, 4
      %v3101 = vadd.f32 %v3099, %v3100
      %v3102 = vrot.slane %v3101, 2
      %v3103 = vadd.f32 %v3101, %v3102
      %v3104 = vrot.slane %v3103, 1
      %v3105 = vadd.f32 %v3103, %v3104
      %vm3106 = vcmask 1040384
      %v3107 = vsel %vm3106, %v2930, %v2999
      %vm3108 = vcmask 1041408
      %v3109 = vsel %vm3108, %v3107, %v3036
      %vm3110 = vcmask 1042432
      %v3111 = vsel %vm3110, %v3109, %v3105
      %3112 = vst [vmem:[%s247] sm:$0xf] %v3111
      %p3113 = scmp.lt.s32.totalorder %s17, 1
      %s3114 = scalar_select %p3113, %s17, 1
      %s3115 = smul.addr %s3114, 32
      %s3116 = smul.addr %s3115, 4
      %s3117 = scalar_lea.vmem %s3, %s3116
      %p3118 = scmp.lt.s32.totalorder %s17, 1
      %s3119 = scalar_select %p3118, %s17, 1
      %s3120 = smul.addr %s3119, 32
      %s3121 = smul.addr %s3120, 4
      %s3122 = scalar_lea.vmem %s4, %s3121
      %p3123 = scmp.lt.s32.totalorder %s17, 1
      %s3124 = scalar_select %p3123, %s17, 1
      %s3125 = smul.addr %s3124, 4
      %s3126 = scalar_lea.vmem %s5, %s3125
      // Predicated region
      $region33: #{first_res_block.3} parent=31 // pred_check
        %p3127 = pneg %p103
      $region34: #{first_res_block.3} parent=31 // pred_check_branch
        %3129 = sbr.rel (%p3127) target = $region36
      $region35: #{first_res_block.3} parent=31 // pred_region
        _
      $region36: #{first_res_block.3} parent=31 // pred_fallthru
        _
      // Predicated region
      $region37: #{first_res_block.3} parent=31 // pred_check
        %p3130 = pneg %p129
      $region38: #{first_res_block.3} parent=31 // pred_check_branch
        %3132 = sbr.rel (%p3130) target = $region40
      $region39: #{first_res_block.3} parent=31 // pred_region
        _
      $region40: #{first_res_block.3} parent=31 // pred_fallthru
        _
      // Predicated region
      $region41: #{first_res_block.3} parent=31 // pred_check
        %p3133 = pneg %p155
      $region42: #{first_res_block.3} parent=31 // pred_check_branch
        %3135 = sbr.rel (%p3133) target = $region44
      $region43: #{first_res_block.3} parent=31 // pred_region
        _
      $region44: #{first_res_block.3} parent=31 // pred_fallthru
        _
    $region32: #{first_res_block.3} parent=5 // pred_fallthru
      _
    %p3136 = scmp.le.s32.totalorder 2, %s12
    // Predicated region
    $region45: #{first_res_block.3} parent=5 // pred_check
      %p3137 = pneg %p3136
    $region46: #{first_res_block.3} parent=5 // pred_check_branch
      %3139 = sbr.rel (%p3137) target = $region48
    $region47: #{first_res_block.3} parent=5 // pred_region
      %s3140 = ssub.s32 %s12, 2
      // Predicated region
      $region49: #{first_res_block.3} parent=47 // pred_check
        %p3141 = pneg %p109
      $region50: #{first_res_block.3} parent=47 // pred_check_branch
        %3143 = sbr.rel (%p3141) target = $region52
      $region51: #{first_res_block.3} parent=47 // pred_region
        %p3144 = scmp.lt.s32.totalorder %s18, 1
        %s3145 = scalar_select %p3144, %s18, 1
        %s3146 = smul.addr %s3145, 32
        %s3147 = smul.addr %s3146, 4
        %s3148 = scalar_lea.vmem %s3, %s3147
      $region52: #{first_res_block.3} parent=47 // pred_fallthru
        _
      // Predicated region
      $region53: #{first_res_block.3} parent=47 // pred_check
        %p3149 = pneg %p135
      $region54: #{first_res_block.3} parent=47 // pred_check_branch
        %3151 = sbr.rel (%p3149) target = $region56
      $region55: #{first_res_block.3} parent=47 // pred_region
        %p3152 = scmp.lt.s32.totalorder %s18, 1
        %s3153 = scalar_select %p3152, %s18, 1
        %s3154 = smul.addr %s3153, 32
        %s3155 = smul.addr %s3154, 4
        %s3156 = scalar_lea.vmem %s4, %s3155
      $region56: #{first_res_block.3} parent=47 // pred_fallthru
        _
      // Predicated region
      $region57: #{first_res_block.3} parent=47 // pred_check
        %p3157 = pneg %p161
      $region58: #{first_res_block.3} parent=47 // pred_check_branch
        %3159 = sbr.rel (%p3157) target = $region60
      $region59: #{first_res_block.3} parent=47 // pred_region
        %p3160 = scmp.lt.s32.totalorder %s18, 1
        %s3161 = scalar_select %p3160, %s18, 1
        %s3162 = smul.addr %s3161, 4
        %s3163 = scalar_lea.vmem %s5, %s3162
      $region60: #{first_res_block.3} parent=47 // pred_fallthru
        _
    $region48: #{first_res_block.3} parent=5 // pred_fallthru
      _
  $region6: #{first_res_block.3} parent=0 // loop_footer
    %s16 = sadd.s32 1, %s12
  $region7: #{first_res_block.3} parent=0 // loop_footer_branch
    %11 = sbr.rel target = $region3
  $region8: #{first_res_block.3} parent=0 // loop_exit
    _

// kernel: first_res_block.4
$region0: #{first_res_block.4}
  #allocation0 [shape = 'u32[]', space=smem, size = 0x4, offset = 0x4, fixed_abs, tag = 'smem constant byte address 0x4 - core index']
  #allocation1 [shape = 'u32[144,128]{1,0:T(1,128)}', space=vmem, size = 0x12000, scoped, tag = 'internal scratch']
  %s0 = inlined_call_operand.vmem [shape: bf16[2,16,16,128], index: 0, kind: input, shape index: {}]
  %s1 = inlined_call_operand.vmem [shape: f32[1,128], index: 1, kind: input, shape index: {}]
  %s2 = inlined_call_operand.vmem [shape: f32[1,128], index: 2, kind: input, shape index: {}]
  %s3 = inlined_call_operand.vmem [shape: bf16[3,384,128], index: 3, kind: input, shape index: {}]
  %s4 = inlined_call_operand.vmem [shape: bf16[2,16,16,128], index: 4, kind: output, shape index: {0}]
  %s5 = inlined_call_operand.vmem [shape: f32[2,2,128], index: 5, kind: output, shape index: {1}]
  %6 = xla_tuple %s4, %s5
  %s7 = sld [smem:[#allocation0]]
  $region57: #{first_res_block.4} parent=0
    _
  %s9 = ssub.s32 1, %s7
  %s10 = scalar_select 0, %s9, %s7
  loop: start=0, step=1, limit=4
  $region2: #{first_res_block.4} parent=0 // loop_pre_header
    _
  $region3: #{first_res_block.4} parent=0 // loop_header
    %s12 = sphi 0, %s16
    %p13 = scmp.ge.s32.totalorder %s12, 4
    %s22 = sphi 0, %s24
    %s25 = sphi 0, %s22
    %s26 = sphi 0, %s25
    %s42 = sphi 0, %s26
    %s46 = sphi 0, %s46
    %s48 = sphi 0, %s46
    %s49 = sphi 0, %s48
    %s63 = sphi 0, %s49
    %s67 = sphi 0, %s67
    %s69 = sphi 0, %s67
    %s70 = sphi 0, %s69
    %s84 = sphi 0, %s70
    %s88 = sphi 0, %s88
    %s90 = sphi 0, %s88
    %s91 = sphi 0, %s90
    %s105 = sphi 0, %s91
    %s111 = sphi 0, %s113
    %s114 = sphi 0, %s111
    %s115 = sphi 0, %s114
    %s131 = sphi 0, %s115
    %s137 = sphi 0, %s139
    %s140 = sphi 0, %s137
    %s141 = sphi 0, %s140
    %s157 = sphi 0, %s141
  $region4: #{first_res_block.4} parent=0 // loop_header_branch
    %15 = sbr.rel (%p13) target = $region8
  $region5: #{first_res_block.4} parent=0 // loop_body
    %s17 = ssub.s32 %s12, 1
    %s18 = ssub.s32 %s12, 2
    %s19 = sadd.s32 %s12, 1
    %s20 = ssub.s32 %s12, %s19
    %p21 = scmp.eq.s32.totalorder %s20, 0
    %s23 = sadd.s32 %s22, 1
    %s24 = scalar_select %p21, %s22, %s23
    %p27 = pneg %p21
    %p28 = scmp.eq.s32.totalorder %s12, 1
    %p29 = por %p27, %p28
    %p30 = scmp.ne.s32.totalorder %s22, %s25
    %p31 = scmp.eq.s32.totalorder %s12, 0
    %p32 = por %p30, %p31
    %p33 = scmp.ne.s32.totalorder %s22, %s25
    %p34 = scmp.eq.s32.totalorder %s17, 1
    %p35 = por %p33, %p34
    %p36 = scmp.ne.s32.totalorder %s25, %s26
    %p37 = scmp.eq.s32.totalorder %s17, 0
    %p38 = por %p36, %p37
    %p39 = scmp.ne.s32.totalorder %s25, %s26
    %p40 = scmp.eq.s32.totalorder %s18, 1
    %p41 = por %p39, %p40
    %p43 = scmp.ne.s32.totalorder %s26, %s42
    %p44 = scmp.eq.s32.totalorder %s18, 0
    %p45 = por %p43, %p44
    %s47 = sadd.s32 %s46, 1
    %p50 = scmp.eq.s32.totalorder %s12, 1
    %p51 = scmp.ne.s32.totalorder %s46, %s48
    %p52 = scmp.eq.s32.totalorder %s12, 0
    %p53 = por %p51, %p52
    %p54 = scmp.ne.s32.totalorder %s46, %s48
    %p55 = scmp.eq.s32.totalorder %s17, 1
    %p56 = por %p54, %p55
    %p57 = scmp.ne.s32.totalorder %s48, %s49
    %p58 = scmp.eq.s32.totalorder %s17, 0
    %p59 = por %p57, %p58
    %p60 = scmp.ne.s32.totalorder %s48, %s49
    %p61 = scmp.eq.s32.totalorder %s18, 1
    %p62 = por %p60, %p61
    %p64 = scmp.ne.s32.totalorder %s49, %s63
    %p65 = scmp.eq.s32.totalorder %s18, 0
    %p66 = por %p64, %p65
    %s68 = sadd.s32 %s67, 1
    %p71 = scmp.eq.s32.totalorder %s12, 1
    %p72 = scmp.ne.s32.totalorder %s67, %s69
    %p73 = scmp.eq.s32.totalorder %s12, 0
    %p74 = por %p72, %p73
    %p75 = scmp.ne.s32.totalorder %s67, %s69
    %p76 = scmp.eq.s32.totalorder %s17, 1
    %p77 = por %p75, %p76
    %p78 = scmp.ne.s32.totalorder %s69, %s70
    %p79 = scmp.eq.s32.totalorder %s17, 0
    %p80 = por %p78, %p79
    %p81 = scmp.ne.s32.totalorder %s69, %s70
    %p82 = scmp.eq.s32.totalorder %s18, 1
    %p83 = por %p81, %p82
    %p85 = scmp.ne.s32.totalorder %s70, %s84
    %p86 = scmp.eq.s32.totalorder %s18, 0
    %p87 = por %p85, %p86
    %s89 = sadd.s32 %s88, 1
    %p92 = scmp.eq.s32.totalorder %s12, 1
    %p93 = scmp.ne.s32.totalorder %s88, %s90
    %p94 = scmp.eq.s32.totalorder %s12, 0
    %p95 = por %p93, %p94
    %p96 = scmp.ne.s32.totalorder %s88, %s90
    %p97 = scmp.eq.s32.totalorder %s17, 1
    %p98 = por %p96, %p97
    %p99 = scmp.ne.s32.totalorder %s90, %s91
    %p100 = scmp.eq.s32.totalorder %s17, 0
    %p101 = por %p99, %p100
    %p102 = scmp.ne.s32.totalorder %s90, %s91
    %p103 = scmp.eq.s32.totalorder %s18, 1
    %p104 = por %p102, %p103
    %p106 = scmp.ne.s32.totalorder %s91, %s105
    %p107 = scmp.eq.s32.totalorder %s18, 0
    %p108 = por %p106, %p107
    %s109 = ssub.s32 %s12, %s19
    %p110 = scmp.eq.s32.totalorder %s109, 0
    %s112 = sadd.s32 %s111, 1
    %s113 = scalar_select %p110, %s111, %s112
    %p116 = pneg %p110
    %p117 = scmp.eq.s32.totalorder %s12, 1
    %p118 = por %p116, %p117
    %p119 = scmp.ne.s32.totalorder %s111, %s114
    %p120 = scmp.eq.s32.totalorder %s12, 0
    %p121 = por %p119, %p120
    %p122 = scmp.ne.s32.totalorder %s111, %s114
    %p123 = scmp.eq.s32.totalorder %s17, 1
    %p124 = por %p122, %p123
    %p125 = scmp.ne.s32.totalorder %s114, %s115
    %p126 = scmp.eq.s32.totalorder %s17, 0
    %p127 = por %p125, %p126
    %p128 = scmp.ne.s32.totalorder %s114, %s115
    %p129 = scmp.eq.s32.totalorder %s18, 1
    %p130 = por %p128, %p129
    %p132 = scmp.ne.s32.totalorder %s115, %s131
    %p133 = scmp.eq.s32.totalorder %s18, 0
    %p134 = por %p132, %p133
    %s135 = ssub.s32 %s12, %s19
    %p136 = scmp.eq.s32.totalorder %s135, 0
    %s138 = sadd.s32 %s137, 1
    %s139 = scalar_select %p136, %s137, %s138
    %p142 = pneg %p136
    %p143 = scmp.eq.s32.totalorder %s12, 1
    %p144 = por %p142, %p143
    %p145 = scmp.ne.s32.totalorder %s137, %s140
    %p146 = scmp.eq.s32.totalorder %s12, 0
    %p147 = por %p145, %p146
    %p148 = scmp.ne.s32.totalorder %s137, %s140
    %p149 = scmp.eq.s32.totalorder %s17, 1
    %p150 = por %p148, %p149
    %p151 = scmp.ne.s32.totalorder %s140, %s141
    %p152 = scmp.eq.s32.totalorder %s17, 0
    %p153 = por %p151, %p152
    %p154 = scmp.ne.s32.totalorder %s140, %s141
    %p155 = scmp.eq.s32.totalorder %s18, 1
    %p156 = por %p154, %p155
    %p158 = scmp.ne.s32.totalorder %s141, %s157
    %p159 = scmp.eq.s32.totalorder %s18, 0
    %p160 = por %p158, %p159
    %p161 = scmp.le.s32.totalorder 1, %s12
    %p162 = scmp.lt.s32.totalorder %s12, 3
    %p163 = pnand %p161, %p162
    %p164 = pneg %p163
    // Predicated region
    $region9: #{first_res_block.4} parent=5 // pred_check
      _
    $region10: #{first_res_block.4} parent=5 // pred_check_branch
      %166 = sbr.rel (%p163) target = $region12
    $region11: #{first_res_block.4} parent=5 // pred_region
      %s167 = ssub.s32 %s12, 1
      // Predicated region
      $region13: #{first_res_block.4} parent=11 // pred_check
        %p168 = pneg %p59
      $region14: #{first_res_block.4} parent=11 // pred_check_branch
        %170 = sbr.rel (%p168) target = $region16
      $region15: #{first_res_block.4} parent=11 // pred_region
        _
      $region16: #{first_res_block.4} parent=11 // pred_fallthru
        _
      // Predicated region
      $region17: #{first_res_block.4} parent=11 // pred_check
        %p171 = pneg %p80
      $region18: #{first_res_block.4} parent=11 // pred_check_branch
        %173 = sbr.rel (%p171) target = $region20
      $region19: #{first_res_block.4} parent=11 // pred_region
        _
      $region20: #{first_res_block.4} parent=11 // pred_fallthru
        _
      // Predicated region
      $region21: #{first_res_block.4} parent=11 // pred_check
        %p174 = pneg %p101
      $region22: #{first_res_block.4} parent=11 // pred_check_branch
        %176 = sbr.rel (%p174) target = $region24
      $region23: #{first_res_block.4} parent=11 // pred_region
        _
      $region24: #{first_res_block.4} parent=11 // pred_fallthru
        _
    $region12: #{first_res_block.4} parent=5 // pred_fallthru
      _
    %p177 = scmp.lt.s32.totalorder %s12, 2
    // Predicated region
    $region25: #{first_res_block.4} parent=5 // pred_check
      %p178 = pneg %p177
    $region26: #{first_res_block.4} parent=5 // pred_check_branch
      %180 = sbr.rel (%p178) target = $region28
    $region27: #{first_res_block.4} parent=5 // pred_region
      // Predicated region
      $region29: #{first_res_block.4} parent=27 // pred_check
        %p181 = pneg %p32
      $region30: #{first_res_block.4} parent=27 // pred_check_branch
        %183 = sbr.rel (%p181) target = $region32
      $region31: #{first_res_block.4} parent=27 // pred_region
        %p184 = scmp.lt.s32.totalorder %s12, 1
        %s185 = scalar_select %p184, %s12, 1
        %s186 = smul.addr %s185, 32
        %s187 = smul.addr %s186, 4
        %s188 = scalar_lea.vmem %s0, %s187
      $region32: #{first_res_block.4} parent=27 // pred_fallthru
        _
    $region28: #{first_res_block.4} parent=5 // pred_fallthru
      _
    %p189 = scmp.le.s32.totalorder 1, %s12
    %p190 = scmp.lt.s32.totalorder %s12, 3
    %p191 = pnand %p189, %p190
    %p192 = pneg %p191
    // Predicated region
    $region33: #{first_res_block.4} parent=5 // pred_check
      _
    $region34: #{first_res_block.4} parent=5 // pred_check_branch
      %194 = sbr.rel (%p191) target = $region36
    $region35: #{first_res_block.4} parent=5 // pred_region
      %s195 = ssub.s32 %s12, 1
      %p196 = scmp.lt.s32.totalorder %s17, 1
      %s197 = scalar_select %p196, %s17, 1
      %s198 = smul.addr %s197, 32
      %s199 = smul.addr %s198, 4
      %s200 = scalar_lea.vmem %s0, %s199
      %p201 = pneg %p38
      %p202 = pneg %p35
      %p203 = pneg %p59
      %p204 = pneg %p56
      %p205 = pneg %p80
      %p206 = pneg %p77
      %p207 = pneg %p101
      %p208 = pneg %p98
      %p209 = pneg %p127
      %p210 = pneg %p124
      %p211 = scmp.lt.s32.totalorder %s17, 1
      %s212 = scalar_select %p211, %s17, 1
      %s213 = smul.addr %s212, 32
      %s214 = smul.addr %s213, 4
      %s215 = scalar_lea.vmem %s4, %s214
      %p216 = pneg %p153
      %p217 = pneg %p150
      %p218 = scmp.lt.s32.totalorder %s17, 1
      %s219 = scalar_select %p218, %s17, 1
      %s220 = smul.addr %s219, 2
      %s221 = scalar_lea.vmem %s5, %s220
      %p222 = scmp.lt.s32.totalorder %s17, 1
      %s223 = scalar_select %p222, %s17, 1
      %s224 = smul.addr %s223, 32
      %s225 = smul.addr %s224, 4
      %s226 = scalar_lea.vmem %s0, %s225
      %p227 = scmp.lt.s32.totalorder %s17, 1
      %s228 = scalar_select %p227, %s17, 1
      %s229 = smul.addr %s228, 32
      %s230 = smul.addr %s229, 4
      %s231 = scalar_lea.vmem %s4, %s230
      %p232 = scmp.lt.s32.totalorder %s17, 1
      %s233 = scalar_select %p232, %s17, 1
      %s234 = smul.addr %s233, 2
      %s235 = scalar_lea.vmem %s5, %s234
      %v237 = vld [vmem:[%s226] sm:$0xf]
      %v238 = vld [vmem:[%s226 + $0x4] sm:$0xf]
      %v239 = vld [vmem:[%s226 + $0x8] sm:$0xf]
      %v240 = vld [vmem:[%s226 + $0xc] sm:$0xf]
      %v241 = vld [vmem:[%s226 + $0x10] sm:$0xf]
      %v242 = vld [vmem:[%s226 + $0x14] sm:$0xf]
      %v243 = vld [vmem:[%s226 + $0x18] sm:$0xf]
      %v244 = vld [vmem:[%s226 + $0x1c] sm:$0xf]
      %v245 = vld [vmem:[%s226 + $0x20] sm:$0xf]
      %v246 = vld [vmem:[%s226 + $0x24] sm:$0xf]
      %v247 = vld [vmem:[%s226 + $0x28] sm:$0xf]
      %v248 = vld [vmem:[%s226 + $0x2c] sm:$0xf]
      %v249 = vld [vmem:[%s226 + $0x30] sm:$0xf]
      %v250 = vld [vmem:[%s226 + $0x34] sm:$0xf]
      %v251 = vld [vmem:[%s226 + $0x38] sm:$0xf]
      %v252 = vld [vmem:[%s226 + $0x3c] sm:$0xf]
      %v253 = vld [vmem:[%s226 + $0x40] sm:$0xf]
      %v254 = vld [vmem:[%s226 + $0x44] sm:$0xf]
      %v255 = vld [vmem:[%s226 + $0x48] sm:$0xf]
      %v256 = vld [vmem:[%s226 + $0x4c] sm:$0xf]
      %v257 = vld [vmem:[%s226 + $0x50] sm:$0xf]
      %v258 = vld [vmem:[%s226 + $0x54] sm:$0xf]
      %v259 = vld [vmem:[%s226 + $0x58] sm:$0xf]
      %v260 = vld [vmem:[%s226 + $0x5c] sm:$0xf]
      %v261 = vld [vmem:[%s226 + $0x60] sm:$0xf]
      %v262 = vld [vmem:[%s226 + $0x64] sm:$0xf]
      %v263 = vld [vmem:[%s226 + $0x68] sm:$0xf]
      %v264 = vld [vmem:[%s226 + $0x6c] sm:$0xf]
      %v265 = vld [vmem:[%s226 + $0x70] sm:$0xf]
      %v266 = vld [vmem:[%s226 + $0x74] sm:$0xf]
      %v267 = vld [vmem:[%s226 + $0x78] sm:$0xf]
      %v268 = vld [vmem:[%s226 + $0x7c] sm:$0xf]
      %v269 = vunpack.c.l.bf16 %v237
      %v270 = vunpack.c.l.bf16 %v238
      %v271 = vunpack.c.l.bf16 %v239
      %v272 = vunpack.c.l.bf16 %v240
      %v273 = vunpack.c.l.bf16 %v241
      %v274 = vunpack.c.l.bf16 %v242
      %v275 = vunpack.c.l.bf16 %v243
      %v276 = vunpack.c.l.bf16 %v244
      %v277 = vunpack.c.l.bf16 %v245
      %v278 = vunpack.c.l.bf16 %v246
      %v279 = vunpack.c.l.bf16 %v247
      %v280 = vunpack.c.l.bf16 %v248
      %v281 = vunpack.c.l.bf16 %v249
      %v282 = vunpack.c.l.bf16 %v250
      %v283 = vunpack.c.l.bf16 %v251
      %v284 = vunpack.c.l.bf16 %v252
      %v285 = vunpack.c.l.bf16 %v253
      %v286 = vunpack.c.l.bf16 %v254
      %v287 = vunpack.c.l.bf16 %v255
      %v288 = vunpack.c.l.bf16 %v256
      %v289 = vunpack.c.l.bf16 %v257
      %v290 = vunpack.c.l.bf16 %v258
      %v291 = vunpack.c.l.bf16 %v259
      %v292 = vunpack.c.l.bf16 %v260
      %v293 = vunpack.c.l.bf16 %v261
      %v294 = vunpack.c.l.bf16 %v262
      %v295 = vunpack.c.l.bf16 %v263
      %v296 = vunpack.c.l.bf16 %v264
      %v297 = vunpack.c.l.bf16 %v265
      %v298 = vunpack.c.l.bf16 %v266
      %v299 = vunpack.c.l.bf16 %v267
      %v300 = vunpack.c.l.bf16 %v268
      %v301 = vld [vmem:[%s1] sm:$0x1]
      %v303 = vlaneseq
      %v304 = vshrl.u32 %v303, 7
      %v305 = vsub.s32 0, %v304
      %v306 = vrot.slane %v301, %v305
      %v308 = vmul.f32 %v269, %v306
      %v309 = vmul.f32 %v270, %v306
      %v310 = vmul.f32 %v271, %v306
      %v311 = vmul.f32 %v272, %v306
      %v312 = vmul.f32 %v273, %v306
      %v313 = vmul.f32 %v274, %v306
      %v314 = vmul.f32 %v275, %v306
      %v315 = vmul.f32 %v276, %v306
      %v316 = vmul.f32 %v277, %v306
      %v317 = vmul.f32 %v278, %v306
      %v318 = vmul.f32 %v279, %v306
      %v319 = vmul.f32 %v280, %v306
      %v320 = vmul.f32 %v281, %v306
      %v321 = vmul.f32 %v282, %v306
      %v322 = vmul.f32 %v283, %v306
      %v323 = vmul.f32 %v284, %v306
      %v324 = vmul.f32 %v285, %v306
      %v325 = vmul.f32 %v286, %v306
      %v326 = vmul.f32 %v287, %v306
      %v327 = vmul.f32 %v288, %v306
      %v328 = vmul.f32 %v289, %v306
      %v329 = vmul.f32 %v290, %v306
      %v330 = vmul.f32 %v291, %v306
      %v331 = vmul.f32 %v292, %v306
      %v332 = vmul.f32 %v293, %v306
      %v333 = vmul.f32 %v294, %v306
      %v334 = vmul.f32 %v295, %v306
      %v335 = vmul.f32 %v296, %v306
      %v336 = vmul.f32 %v297, %v306
      %v337 = vmul.f32 %v298, %v306
      %v338 = vmul.f32 %v299, %v306
      %v339 = vmul.f32 %v300, %v306
      %v340 = vld [vmem:[%s2] sm:$0x1]
      %v342 = vlaneseq
      %v343 = vshrl.u32 %v342, 7
      %v344 = vsub.s32 0, %v343
      %v345 = vrot.slane %v340, %v344
      %v347 = vadd.f32 %v308, %v345
      %v348 = vadd.f32 %v309, %v345
      %v349 = vadd.f32 %v310, %v345
      %v350 = vadd.f32 %v311, %v345
      %v351 = vadd.f32 %v312, %v345
      %v352 = vadd.f32 %v313, %v345
      %v353 = vadd.f32 %v314, %v345
      %v354 = vadd.f32 %v315, %v345
      %v355 = vadd.f32 %v316, %v345
      %v356 = vadd.f32 %v317, %v345
      %v357 = vadd.f32 %v318, %v345
      %v358 = vadd.f32 %v319, %v345
      %v359 = vadd.f32 %v320, %v345
      %v360 = vadd.f32 %v321, %v345
      %v361 = vadd.f32 %v322, %v345
      %v362 = vadd.f32 %v323, %v345
      %v363 = vadd.f32 %v324, %v345
      %v364 = vadd.f32 %v325, %v345
      %v365 = vadd.f32 %v326, %v345
      %v366 = vadd.f32 %v327, %v345
      %v367 = vadd.f32 %v328, %v345
      %v368 = vadd.f32 %v329, %v345
      %v369 = vadd.f32 %v330, %v345
      %v370 = vadd.f32 %v331, %v345
      %v371 = vadd.f32 %v332, %v345
      %v372 = vadd.f32 %v333, %v345
      %v373 = vadd.f32 %v334, %v345
      %v374 = vadd.f32 %v335, %v345
      %v375 = vadd.f32 %v336, %v345
      %v376 = vadd.f32 %v337, %v345
      %v377 = vadd.f32 %v338, %v345
      %v378 = vadd.f32 %v339, %v345
      %v379 = vmax.f32 %v347, 0.0
      %v380 = vmax.f32 %v348, 0.0
      %v381 = vmax.f32 %v349, 0.0
      %v382 = vmax.f32 %v350, 0.0
      %v383 = vmax.f32 %v351, 0.0
      %v384 = vmax.f32 %v352, 0.0
      %v385 = vmax.f32 %v353, 0.0
      %v386 = vmax.f32 %v354, 0.0
      %v387 = vmax.f32 %v355, 0.0
      %v388 = vmax.f32 %v356, 0.0
      %v389 = vmax.f32 %v357, 0.0
      %v390 = vmax.f32 %v358, 0.0
      %v391 = vmax.f32 %v359, 0.0
      %v392 = vmax.f32 %v360, 0.0
      %v393 = vmax.f32 %v361, 0.0
      %v394 = vmax.f32 %v362, 0.0
      %v395 = vmax.f32 %v363, 0.0
      %v396 = vmax.f32 %v364, 0.0
      %v397 = vmax.f32 %v365, 0.0
      %v398 = vmax.f32 %v366, 0.0
      %v399 = vmax.f32 %v367, 0.0
      %v400 = vmax.f32 %v368, 0.0
      %v401 = vmax.f32 %v369, 0.0
      %v402 = vmax.f32 %v370, 0.0
      %v403 = vmax.f32 %v371, 0.0
      %v404 = vmax.f32 %v372, 0.0
      %v405 = vmax.f32 %v373, 0.0
      %v406 = vmax.f32 %v374, 0.0
      %v407 = vmax.f32 %v375, 0.0
      %v408 = vmax.f32 %v376, 0.0
      %v409 = vmax.f32 %v377, 0.0
      %v410 = vmax.f32 %v378, 0.0
      %v411 = vpack.c.bf16 %v380, %v379
      %v412 = vpack.c.bf16 %v382, %v381
      %v413 = vpack.c.bf16 %v384, %v383
      %v414 = vpack.c.bf16 %v386, %v385
      %v415 = vpack.c.bf16 %v388, %v387
      %v416 = vpack.c.bf16 %v390, %v389
      %v417 = vpack.c.bf16 %v392, %v391
      %v418 = vpack.c.bf16 %v394, %v393
      %v419 = vpack.c.bf16 %v396, %v395
      %v420 = vpack.c.bf16 %v398, %v397
      %v421 = vpack.c.bf16 %v400, %v399
      %v422 = vpack.c.bf16 %v402, %v401
      %v423 = vpack.c.bf16 %v404, %v403
      %v424 = vpack.c.bf16 %v406, %v405
      %v425 = vpack.c.bf16 %v408, %v407
      %v426 = vpack.c.bf16 %v410, %v409
      %v428 = vshrl.u32 %v411, 16
      %v430 = vrot.slane %v428, 7
      %v431 = vshll.u32 %v411, 16
      %v433 = vor.u32 %v430, %v431
      %v435 = vshrl.u32 %v412, 16
      %v437 = vrot.slane %v435, 7
      %v438 = vshll.u32 %v412, 16
      %v440 = vor.u32 %v437, %v438
      %v442 = vshrl.u32 %v413, 16
      %v444 = vrot.slane %v442, 7
      %v445 = vshll.u32 %v413, 16
      %v447 = vor.u32 %v444, %v445
      %v449 = vshrl.u32 %v414, 16
      %v451 = vrot.slane %v449, 7
      %v452 = vshll.u32 %v414, 16
      %v454 = vor.u32 %v451, %v452
      %v456 = vshrl.u32 %v415, 16
      %v458 = vrot.slane %v456, 7
      %v459 = vshll.u32 %v415, 16
      %v461 = vor.u32 %v458, %v459
      %v463 = vshrl.u32 %v416, 16
      %v465 = vrot.slane %v463, 7
      %v466 = vshll.u32 %v416, 16
      %v468 = vor.u32 %v465, %v466
      %v470 = vshrl.u32 %v417, 16
      %v472 = vrot.slane %v470, 7
      %v473 = vshll.u32 %v417, 16
      %v475 = vor.u32 %v472, %v473
      %v477 = vshrl.u32 %v418, 16
      %v479 = vrot.slane %v477, 7
      %v480 = vshll.u32 %v418, 16
      %v482 = vor.u32 %v479, %v480
      %v484 = vshrl.u32 %v419, 16
      %v486 = vrot.slane %v484, 7
      %v487 = vshll.u32 %v419, 16
      %v489 = vor.u32 %v486, %v487
      %v491 = vshrl.u32 %v420, 16
      %v493 = vrot.slane %v491, 7
      %v494 = vshll.u32 %v420, 16
      %v496 = vor.u32 %v493, %v494
      %v498 = vshrl.u32 %v421, 16
      %v500 = vrot.slane %v498, 7
      %v501 = vshll.u32 %v421, 16
      %v503 = vor.u32 %v500, %v501
      %v505 = vshrl.u32 %v422, 16
      %v507 = vrot.slane %v505, 7
      %v508 = vshll.u32 %v422, 16
      %v510 = vor.u32 %v507, %v508
      %v512 = vshrl.u32 %v423, 16
      %v514 = vrot.slane %v512, 7
      %v515 = vshll.u32 %v423, 16
      %v517 = vor.u32 %v514, %v515
      %v519 = vshrl.u32 %v424, 16
      %v521 = vrot.slane %v519, 7
      %v522 = vshll.u32 %v424, 16
      %v524 = vor.u32 %v521, %v522
      %v526 = vshrl.u32 %v425, 16
      %v528 = vrot.slane %v526, 7
      %v529 = vshll.u32 %v425, 16
      %v531 = vor.u32 %v528, %v529
      %v533 = vshrl.u32 %v426, 16
      %v535 = vrot.slane %v533, 7
      %v536 = vshll.u32 %v426, 16
      %v538 = vor.u32 %v535, %v536
      %vm555 = vcmask 1040384
      %vm556 = vsmask.f32 256
      %vm557 = vmand %vm555, %vm556
      %v558 = vsel %vm557, 0, %v433
      %v559 = vsel %vm557, 0, %v440
      %v560 = vsel %vm557, 0, %v447
      %v561 = vsel %vm557, 0, %v454
      %v562 = vsel %vm557, 0, %v461
      %v563 = vsel %vm557, 0, %v468
      %v564 = vsel %vm557, 0, %v475
      %v565 = vsel %vm557, 0, %v482
      %v566 = vsel %vm557, 0, %v489
      %v567 = vsel %vm557, 0, %v496
      %v568 = vsel %vm557, 0, %v503
      %v569 = vsel %vm557, 0, %v510
      %v570 = vsel %vm557, 0, %v517
      %v571 = vsel %vm557, 0, %v524
      %v572 = vsel %vm557, 0, %v531
      %v573 = vsel %vm557, 0, %v538
      %v574 = vrot.slane %v431, 1
      %v575 = vor.u32 %v428, %v574
      %v576 = vrot.slane %v438, 1
      %v577 = vor.u32 %v435, %v576
      %v578 = vrot.slane %v445, 1
      %v579 = vor.u32 %v442, %v578
      %v580 = vrot.slane %v452, 1
      %v581 = vor.u32 %v449, %v580
      %v582 = vrot.slane %v459, 1
      %v583 = vor.u32 %v456, %v582
      %v584 = vrot.slane %v466, 1
      %v585 = vor.u32 %v463, %v584
      %v586 = vrot.slane %v473, 1
      %v587 = vor.u32 %v470, %v586
      %v588 = vrot.slane %v480, 1
      %v589 = vor.u32 %v477, %v588
      %v590 = vrot.slane %v487, 1
      %v591 = vor.u32 %v484, %v590
      %v592 = vrot.slane %v494, 1
      %v593 = vor.u32 %v491, %v592
      %v594 = vrot.slane %v501, 1
      %v595 = vor.u32 %v498, %v594
      %v596 = vrot.slane %v508, 1
      %v597 = vor.u32 %v505, %v596
      %v598 = vrot.slane %v515, 1
      %v599 = vor.u32 %v512, %v598
      %v600 = vrot.slane %v522, 1
      %v601 = vor.u32 %v519, %v600
      %v602 = vrot.slane %v529, 1
      %v603 = vor.u32 %v526, %v602
      %v604 = vrot.slane %v536, 1
      %v605 = vor.u32 %v533, %v604
      %vm622 = vcmask 1047552
      %vm623 = vsmask.f32 7424
      %vm624 = vmand %vm622, %vm623
      %v625 = vsel %vm624, %v575, 0
      %v626 = vsel %vm624, %v577, 0
      %v627 = vsel %vm624, %v579, 0
      %v628 = vsel %vm624, %v581, 0
      %v629 = vsel %vm624, %v583, 0
      %v630 = vsel %vm624, %v585, 0
      %v631 = vsel %vm624, %v587, 0
      %v632 = vsel %vm624, %v589, 0
      %v633 = vsel %vm624, %v591, 0
      %v634 = vsel %vm624, %v593, 0
      %v635 = vsel %vm624, %v595, 0
      %v636 = vsel %vm624, %v597, 0
      %v637 = vsel %vm624, %v599, 0
      %v638 = vsel %vm624, %v601, 0
      %v639 = vsel %vm624, %v603, 0
      %v640 = vsel %vm624, %v605, 0
      %v641 = vld [vmem:[%s3] sm:$0xf]
      %v642 = vld [vmem:[%s3 + $0x4] sm:$0xf]
      %v643 = vld [vmem:[%s3 + $0x8] sm:$0xf]
      %v644 = vld [vmem:[%s3 + $0xc] sm:$0xf]
      %v645 = vld [vmem:[%s3 + $0x10] sm:$0xf]
      %v646 = vld [vmem:[%s3 + $0x14] sm:$0xf]
      %v647 = vld [vmem:[%s3 + $0x18] sm:$0xf]
      %v648 = vld [vmem:[%s3 + $0x1c] sm:$0xf]
      %v649 = vld [vmem:[%s3 + $0x20] sm:$0xf]
      %v650 = vld [vmem:[%s3 + $0x24] sm:$0xf]
      %v651 = vld [vmem:[%s3 + $0x28] sm:$0xf]
      %v652 = vld [vmem:[%s3 + $0x2c] sm:$0xf]
      %v653 = vld [vmem:[%s3 + $0x30] sm:$0xf]
      %v654 = vld [vmem:[%s3 + $0x34] sm:$0xf]
      %v655 = vld [vmem:[%s3 + $0x38] sm:$0xf]
      %v656 = vld [vmem:[%s3 + $0x3c] sm:$0xf]
      %v657 = vld [vmem:[%s3 + $0x40] sm:$0xf]
      %v658 = vld [vmem:[%s3 + $0x44] sm:$0xf]
      %v659 = vld [vmem:[%s3 + $0x48] sm:$0xf]
      %v660 = vld [vmem:[%s3 + $0x4c] sm:$0xf]
      %v661 = vld [vmem:[%s3 + $0x50] sm:$0xf]
      %v662 = vld [vmem:[%s3 + $0x54] sm:$0xf]
      %v663 = vld [vmem:[%s3 + $0x58] sm:$0xf]
      %v664 = vld [vmem:[%s3 + $0x5c] sm:$0xf]
      %v665 = vld [vmem:[%s3 + $0x60] sm:$0xf]
      %v666 = vld [vmem:[%s3 + $0x64] sm:$0xf]
      %v667 = vld [vmem:[%s3 + $0x68] sm:$0xf]
      %v668 = vld [vmem:[%s3 + $0x6c] sm:$0xf]
      %v669 = vld [vmem:[%s3 + $0x70] sm:$0xf]
      %v670 = vld [vmem:[%s3 + $0x74] sm:$0xf]
      %v671 = vld [vmem:[%s3 + $0x78] sm:$0xf]
      %v672 = vld [vmem:[%s3 + $0x7c] sm:$0xf]
      %v673 = vld [vmem:[%s3 + $0x80] sm:$0xf]
      %v674 = vld [vmem:[%s3 + $0x84] sm:$0xf]
      %v675 = vld [vmem:[%s3 + $0x88] sm:$0xf]
      %v676 = vld [vmem:[%s3 + $0x8c] sm:$0xf]
      %v677 = vld [vmem:[%s3 + $0x90] sm:$0xf]
      %v678 = vld [vmem:[%s3 + $0x94] sm:$0xf]
      %v679 = vld [vmem:[%s3 + $0x98] sm:$0xf]
      %v680 = vld [vmem:[%s3 + $0x9c] sm:$0xf]
      %v681 = vld [vmem:[%s3 + $0xa0] sm:$0xf]
      %v682 = vld [vmem:[%s3 + $0xa4] sm:$0xf]
      %v683 = vld [vmem:[%s3 + $0xa8] sm:$0xf]
      %v684 = vld [vmem:[%s3 + $0xac] sm:$0xf]
      %v685 = vld [vmem:[%s3 + $0xb0] sm:$0xf]
      %v686 = vld [vmem:[%s3 + $0xb4] sm:$0xf]
      %v687 = vld [vmem:[%s3 + $0xb8] sm:$0xf]
      %v688 = vld [vmem:[%s3 + $0xbc] sm:$0xf]
      %s689 = scalar_lea.vmem %s3, 192
      %v690 = vld [vmem:[%s689] sm:$0xf]
      %v691 = vld [vmem:[%s689 + $0x4] sm:$0xf]
      %v692 = vld [vmem:[%s689 + $0x8] sm:$0xf]
      %v693 = vld [vmem:[%s689 + $0xc] sm:$0xf]
      %v694 = vld [vmem:[%s689 + $0x10] sm:$0xf]
      %v695 = vld [vmem:[%s689 + $0x14] sm:$0xf]
      %v696 = vld [vmem:[%s689 + $0x18] sm:$0xf]
      %v697 = vld [vmem:[%s689 + $0x1c] sm:$0xf]
      %v698 = vld [vmem:[%s689 + $0x20] sm:$0xf]
      %v699 = vld [vmem:[%s689 + $0x24] sm:$0xf]
      %v700 = vld [vmem:[%s689 + $0x28] sm:$0xf]
      %v701 = vld [vmem:[%s689 + $0x2c] sm:$0xf]
      %v702 = vld [vmem:[%s689 + $0x30] sm:$0xf]
      %v703 = vld [vmem:[%s689 + $0x34] sm:$0xf]
      %v704 = vld [vmem:[%s689 + $0x38] sm:$0xf]
      %v705 = vld [vmem:[%s689 + $0x3c] sm:$0xf]
      %v706 = vld [vmem:[%s689 + $0x40] sm:$0xf]
      %v707 = vld [vmem:[%s689 + $0x44] sm:$0xf]
      %v708 = vld [vmem:[%s689 + $0x48] sm:$0xf]
      %v709 = vld [vmem:[%s689 + $0x4c] sm:$0xf]
      %v710 = vld [vmem:[%s689 + $0x50] sm:$0xf]
      %v711 = vld [vmem:[%s689 + $0x54] sm:$0xf]
      %v712 = vld [vmem:[%s689 + $0x58] sm:$0xf]
      %v713 = vld [vmem:[%s689 + $0x5c] sm:$0xf]
      %v714 = vld [vmem:[%s689 + $0x60] sm:$0xf]
      %v715 = vld [vmem:[%s689 + $0x64] sm:$0xf]
      %v716 = vld [vmem:[%s689 + $0x68] sm:$0xf]
      %v717 = vld [vmem:[%s689 + $0x6c] sm:$0xf]
      %v718 = vld [vmem:[%s689 + $0x70] sm:$0xf]
      %v719 = vld [vmem:[%s689 + $0x74] sm:$0xf]
      %v720 = vld [vmem:[%s689 + $0x78] sm:$0xf]
      %v721 = vld [vmem:[%s689 + $0x7c] sm:$0xf]
      %v722 = vld [vmem:[%s689 + $0x80] sm:$0xf]
      %v723 = vld [vmem:[%s689 + $0x84] sm:$0xf]
      %v724 = vld [vmem:[%s689 + $0x88] sm:$0xf]
      %v725 = vld [vmem:[%s689 + $0x8c] sm:$0xf]
      %v726 = vld [vmem:[%s689 + $0x90] sm:$0xf]
      %v727 = vld [vmem:[%s689 + $0x94] sm:$0xf]
      %v728 = vld [vmem:[%s689 + $0x98] sm:$0xf]
      %v729 = vld [vmem:[%s689 + $0x9c] sm:$0xf]
      %v730 = vld [vmem:[%s689 + $0xa0] sm:$0xf]
      %v731 = vld [vmem:[%s689 + $0xa4] sm:$0xf]
      %v732 = vld [vmem:[%s689 + $0xa8] sm:$0xf]
      %v733 = vld [vmem:[%s689 + $0xac] sm:$0xf]
      %v734 = vld [vmem:[%s689 + $0xb0] sm:$0xf]
      %v735 = vld [vmem:[%s689 + $0xb4] sm:$0xf]
      %v736 = vld [vmem:[%s689 + $0xb8] sm:$0xf]
      %v737 = vld [vmem:[%s689 + $0xbc] sm:$0xf]
      %v786 = vunpack.c.l.b16 %v690
      %v787 = vunpack.c.l.b16 %v691
      %v788 = vunpack.c.l.b16 %v692
      %v789 = vunpack.c.l.b16 %v693
      %v790 = vunpack.c.l.b16 %v694
      %v791 = vunpack.c.l.b16 %v695
      %v792 = vunpack.c.l.b16 %v696
      %v793 = vunpack.c.l.b16 %v697
      %v794 = vunpack.c.l.b16 %v698
      %v795 = vunpack.c.l.b16 %v699
      %v796 = vunpack.c.l.b16 %v700
      %v797 = vunpack.c.l.b16 %v701
      %v798 = vunpack.c.l.b16 %v702
      %v799 = vunpack.c.l.b16 %v703
      %v800 = vunpack.c.l.b16 %v704
      %v801 = vunpack.c.l.b16 %v705
      %v802 = vunpack.c.l.b16 %v706
      %v803 = vunpack.c.l.b16 %v707
      %v804 = vunpack.c.l.b16 %v708
      %v805 = vunpack.c.l.b16 %v709
      %v806 = vunpack.c.l.b16 %v710
      %v807 = vunpack.c.l.b16 %v711
      %v808 = vunpack.c.l.b16 %v712
      %v809 = vunpack.c.l.b16 %v713
      %v810 = vunpack.c.l.b16 %v714
      %v811 = vunpack.c.l.b16 %v715
      %v812 = vunpack.c.l.b16 %v716
      %v813 = vunpack.c.l.b16 %v717
      %v814 = vunpack.c.l.b16 %v718
      %v815 = vunpack.c.l.b16 %v719
      %v816 = vunpack.c.l.b16 %v720
      %v817 = vunpack.c.l.b16 %v721
      %v818 = vunpack.c.l.b16 %v722
      %v819 = vunpack.c.l.b16 %v723
      %v820 = vunpack.c.l.b16 %v724
      %v821 = vunpack.c.l.b16 %v725
      %v822 = vunpack.c.l.b16 %v726
      %v823 = vunpack.c.l.b16 %v727
      %v824 = vunpack.c.l.b16 %v728
      %v825 = vunpack.c.l.b16 %v729
      %v826 = vunpack.c.l.b16 %v730
      %v827 = vunpack.c.l.b16 %v731
      %v828 = vunpack.c.l.b16 %v732
      %v829 = vunpack.c.l.b16 %v733
      %v830 = vunpack.c.l.b16 %v734
      %v831 = vunpack.c.l.b16 %v735
      %v832 = vunpack.c.l.b16 %v736
      %v833 = vunpack.c.l.b16 %v737
      %v834 = vpack.c.b16 %v787, %v786
      %v835 = vpack.c.b16 %v789, %v788
      %v836 = vpack.c.b16 %v791, %v790
      %v837 = vpack.c.b16 %v793, %v792
      %v838 = vpack.c.b16 %v795, %v794
      %v839 = vpack.c.b16 %v797, %v796
      %v840 = vpack.c.b16 %v799, %v798
      %v841 = vpack.c.b16 %v801, %v800
      %v842 = vpack.c.b16 %v803, %v802
      %v843 = vpack.c.b16 %v805, %v804
      %v844 = vpack.c.b16 %v807, %v806
      %v845 = vpack.c.b16 %v809, %v808
      %v846 = vpack.c.b16 %v811, %v810
      %v847 = vpack.c.b16 %v813, %v812
      %v848 = vpack.c.b16 %v815, %v814
      %v849 = vpack.c.b16 %v817, %v816
      %v850 = vpack.c.b16 %v819, %v818
      %v851 = vpack.c.b16 %v821, %v820
      %v852 = vpack.c.b16 %v823, %v822
      %v853 = vpack.c.b16 %v825, %v824
      %v854 = vpack.c.b16 %v827, %v826
      %v855 = vpack.c.b16 %v829, %v828
      %v856 = vpack.c.b16 %v831, %v830
      %v857 = vpack.c.b16 %v833, %v832
      %882 = vmatprep.subr.bf16.mxu0 0
      %883 = vmatpush1.bf16.msra.mxu0 %v834
      %884 = vmatprep.subr.bf16.mxu0 0
      %885 = vmatpush1.bf16.msra.mxu0 %v835
      %886 = vmatprep.subr.bf16.mxu0 0
      %887 = vmatpush1.bf16.msra.mxu0 %v836
      %888 = vmatprep.subr.bf16.mxu0 0
      %889 = vmatpush1.bf16.msra.mxu0 %v837
      %890 = vmatprep.subr.bf16.mxu0 0
      %891 = vmatpush1.bf16.msra.mxu0 %v838
      %892 = vmatprep.subr.bf16.mxu0 0
      %893 = vmatpush1.bf16.msra.mxu0 %v839
      %894 = vmatprep.subr.bf16.mxu0 0
      %895 = vmatpush1.bf16.msra.mxu0 %v840
      %896 = vmatprep.subr.bf16.mxu0 0
      %897 = vmatpush1.bf16.msra.mxu0 %v841
      %898 = vmatprep.subr.bf16.mxu0 0
      %899 = vmatpush1.bf16.msra.mxu0 %v842
      %900 = vmatprep.subr.bf16.mxu0 0
      %901 = vmatpush1.bf16.msra.mxu0 %v843
      %902 = vmatprep.subr.bf16.mxu0 0
      %903 = vmatpush1.bf16.msra.mxu0 %v844
      %904 = vmatprep.subr.bf16.mxu0 0
      %905 = vmatpush1.bf16.msra.mxu0 %v845
      %906 = vmatprep.subr.bf16.mxu0 0
      %907 = vmatpush1.bf16.msra.mxu0 %v846
      %908 = vmatprep.subr.bf16.mxu0 0
      %909 = vmatpush1.bf16.msra.mxu0 %v847
      %910 = vmatprep.subr.bf16.mxu0 0
      %911 = vmatpush1.bf16.msra.mxu0 %v848
      %912 = vmatprep.subr.bf16.mxu0 0
      %913 = vmatpush1.bf16.msra.mxu0 %v849
      %914 = vmatprep.mubr.bf16.mxu0 %v411
      %915 = vmatmul.mubr.bf16.gmra.mrb[0].mxu0 %v558
      %v916 = vpop.f32.mrb[0].mxu0
      %v917 = vadd.f32 0.0, %v916
      %v918 = vpop.f32.mrb[0].mxu0
      %v919 = vpop.f32.mrb[0].mxu0
      %v920 = vadd.f32 0.0, %v919
      %v921 = vpop.f32.mrb[0].mxu0
      %922 = vmatprep.mubr.bf16.mxu0 %v412
      %923 = vmatmul.mubr.bf16.gmra.mrb[0].mxu0 %v559
      %v924 = vpop.f32.mrb[0].mxu0
      %v925 = vadd.f32 0.0, %v924
      %v926 = vpop.f32.mrb[0].mxu0
      %v927 = vpop.f32.mrb[0].mxu0
      %v928 = vadd.f32 0.0, %v927
      %v929 = vpop.f32.mrb[0].mxu0
      %930 = vmatprep.mubr.bf16.mxu0 %v413
      %931 = vmatmul.mubr.bf16.gmra.mrb[0].mxu0 %v560
      %v932 = vpop.f32.mrb[0].mxu0
      %v933 = vadd.f32 0.0, %v932
      %v934 = vpop.f32.mrb[0].mxu0
      %v935 = vpop.f32.mrb[0].mxu0
      %v936 = vadd.f32 0.0, %v935
      %v937 = vpop.f32.mrb[0].mxu0
      %938 = vmatprep.mubr.bf16.mxu0 %v414
      %939 = vmatmul.mubr.bf16.gmra.mrb[0].mxu0 %v561
      %v940 = vpop.f32.mrb[0].mxu0
      %v941 = vadd.f32 0.0, %v940
      %v942 = vpop.f32.mrb[0].mxu0
      %v943 = vpop.f32.mrb[0].mxu0
      %v944 = vadd.f32 0.0, %v943
      %v945 = vpop.f32.mrb[0].mxu0
      %946 = vmatprep.mubr.bf16.mxu0 %v415
      %947 = vmatmul.mubr.bf16.gmra.mrb[0].mxu0 %v562
      %v948 = vpop.f32.mrb[0].mxu0
      %v949 = vadd.f32 0.0, %v948
      %v950 = vpop.f32.mrb[0].mxu0
      %v951 = vpop.f32.mrb[0].mxu0
      %v952 = vadd.f32 0.0, %v951
      %v953 = vpop.f32.mrb[0].mxu0
      %954 = vmatprep.mubr.bf16.mxu0 %v416
      %955 = vmatmul.mubr.bf16.gmra.mrb[0].mxu0 %v563
      %v956 = vpop.f32.mrb[0].mxu0
      %v957 = vadd.f32 0.0, %v956
      %v958 = vpop.f32.mrb[0].mxu0
      %v959 = vpop.f32.mrb[0].mxu0
      %v960 = vadd.f32 0.0, %v959
      %v961 = vpop.f32.mrb[0].mxu0
      %962 = vmatprep.mubr.bf16.mxu0 %v417
      %963 = vmatmul.mubr.bf16.gmra.mrb[0].mxu0 %v564
      %v964 = vpop.f32.mrb[0].mxu0
      %v965 = vadd.f32 0.0, %v964
      %v966 = vpop.f32.mrb[0].mxu0
      %v967 = vpop.f32.mrb[0].mxu0
      %v968 = vadd.f32 0.0, %v967
      %v969 = vpop.f32.mrb[0].mxu0
      %970 = vmatprep.mubr.bf16.mxu0 %v418
      %971 = vmatmul.mubr.bf16.gmra.mrb[0].mxu0 %v565
      %v972 = vpop.f32.mrb[0].mxu0
      %v973 = vadd.f32 0.0, %v972
      %v974 = vpop.f32.mrb[0].mxu0
      %v975 = vpop.f32.mrb[0].mxu0
      %v976 = vadd.f32 0.0, %v975
      %v977 = vpop.f32.mrb[0].mxu0
      %978 = vmatprep.mubr.bf16.mxu0 %v419
      %979 = vmatmul.mubr.bf16.gmra.mrb[0].mxu0 %v566
      %v980 = vpop.f32.mrb[0].mxu0
      %v981 = vadd.f32 0.0, %v980
      %v982 = vpop.f32.mrb[0].mxu0
      %v983 = vpop.f32.mrb[0].mxu0
      %v984 = vadd.f32 0.0, %v983
      %v985 = vpop.f32.mrb[0].mxu0
      %986 = vmatprep.mubr.bf16.mxu0 %v420
      %987 = vmatmul.mubr.bf16.gmra.mrb[0].mxu0 %v567
      %v988 = vpop.f32.mrb[0].mxu0
      %v989 = vadd.f32 0.0, %v988
      %v990 = vpop.f32.mrb[0].mxu0
      %v991 = vpop.f32.mrb[0].mxu0
      %v992 = vadd.f32 0.0, %v991
      %v993 = vpop.f32.mrb[0].mxu0
      %994 = vmatprep.mubr.bf16.mxu0 %v421
      %995 = vmatmul.mubr.bf16.gmra.mrb[0].mxu0 %v568
      %v996 = vpop.f32.mrb[0].mxu0
      %v997 = vadd.f32 0.0, %v996
      %v998 = vpop.f32.mrb[0].mxu0
      %v999 = vpop.f32.mrb[0].mxu0
      %v1000 = vadd.f32 0.0, %v999
      %v1001 = vpop.f32.mrb[0].mxu0
      %1002 = vmatprep.mubr.bf16.mxu0 %v422
      %1003 = vmatmul.mubr.bf16.gmra.mrb[0].mxu0 %v569
      %v1004 = vpop.f32.mrb[0].mxu0
      %v1005 = vadd.f32 0.0, %v1004
      %v1006 = vpop.f32.mrb[0].mxu0
      %v1007 = vpop.f32.mrb[0].mxu0
      %v1008 = vadd.f32 0.0, %v1007
      %v1009 = vpop.f32.mrb[0].mxu0
      %1010 = vmatprep.mubr.bf16.mxu0 %v423
      %1011 = vmatmul.mubr.bf16.gmra.mrb[0].mxu0 %v570
      %v1012 = vpop.f32.mrb[0].mxu0
      %v1013 = vadd.f32 0.0, %v1012
      %v1014 = vpop.f32.mrb[0].mxu0
      %v1015 = vpop.f32.mrb[0].mxu0
      %v1016 = vadd.f32 0.0, %v1015
      %v1017 = vpop.f32.mrb[0].mxu0
      %1018 = vmatprep.mubr.bf16.mxu0 %v424
      %1019 = vmatmul.mubr.bf16.gmra.mrb[0].mxu0 %v571
      %v1020 = vpop.f32.mrb[0].mxu0
      %v1021 = vadd.f32 0.0, %v1020
      %v1022 = vpop.f32.mrb[0].mxu0
      %v1023 = vpop.f32.mrb[0].mxu0
      %v1024 = vadd.f32 0.0, %v1023
      %v1025 = vpop.f32.mrb[0].mxu0
      %1026 = vmatprep.mubr.bf16.mxu0 %v425
      %1027 = vmatmul.mubr.bf16.gmra.mrb[0].mxu0 %v572
      %v1028 = vpop.f32.mrb[0].mxu0
      %v1029 = vadd.f32 0.0, %v1028
      %v1030 = vpop.f32.mrb[0].mxu0
      %v1031 = vpop.f32.mrb[0].mxu0
      %v1032 = vadd.f32 0.0, %v1031
      %v1033 = vpop.f32.mrb[0].mxu0
      %1034 = vmatprep.mubr.bf16.mxu0 %v426
      %1035 = vmatmul.mubr.bf16.gmra.mrb[0].mxu0 %v573
      %v1036 = vpop.f32.mrb[0].mxu0
      %v1037 = vadd.f32 0.0, %v1036
      %v1038 = vpop.f32.mrb[0].mxu0
      %v1039 = vpop.f32.mrb[0].mxu0
      %v1040 = vadd.f32 0.0, %v1039
      %v1041 = vpop.f32.mrb[0].mxu0
      %1042 = vdwg.mxu0
      %1043 = vmatprep.subr.bf16.mxu0 0
      %1044 = vmatpush1.bf16.msra.mxu0 %v850
      %1045 = vmatprep.subr.bf16.mxu0 0
      %1046 = vmatpush1.bf16.msra.mxu0 %v851
      %1047 = vmatprep.subr.bf16.mxu0 0
      %1048 = vmatpush1.bf16.msra.mxu0 %v852
      %1049 = vmatprep.subr.bf16.mxu0 0
      %1050 = vmatpush1.bf16.msra.mxu0 %v853
      %1051 = vmatprep.subr.bf16.mxu0 0
      %1052 = vmatpush1.bf16.msra.mxu0 %v854
      %1053 = vmatprep.subr.bf16.mxu0 0
      %1054 = vmatpush1.bf16.msra.mxu0 %v855
      %1055 = vmatprep.subr.bf16.mxu0 0
      %1056 = vmatpush1.bf16.msra.mxu0 %v856
      %1057 = vmatprep.subr.bf16.mxu0 0
      %1058 = vmatpush1.bf16.msra.mxu0 %v857
      %1059 = vmatprep.subr.bf16.mxu0 0
      %1060 = vmatpush1.bf16.msra.mxu0 0
      %1061 = vmatprep.subr.bf16.mxu0 0
      %1062 = vmatpush1.bf16.msra.mxu0 0
      %1063 = vmatprep.subr.bf16.mxu0 0
      %1064 = vmatpush1.bf16.msra.mxu0 0
      %1065 = vmatprep.subr.bf16.mxu0 0
      %1066 = vmatpush1.bf16.msra.mxu0 0
      %1067 = vmatprep.subr.bf16.mxu0 0
      %1068 = vmatpush1.bf16.msra.mxu0 0
      %1069 = vmatprep.subr.bf16.mxu0 0
      %1070 = vmatpush1.bf16.msra.mxu0 0
      %1071 = vmatprep.subr.bf16.mxu0 0
      %1072 = vmatpush1.bf16.msra.mxu0 0
      %1073 = vmatprep.subr.bf16.mxu0 0
      %1074 = vmatpush1.bf16.msra.mxu0 0
      %1075 = vmatprep.mubr.bf16.mxu0 0
      %1076 = vmatmul.mubr.bf16.gmra.mrb[0].mxu0 %v625
      %v1077 = vpop.f32.mrb[0].mxu0
      %v1078 = vadd.f32 %v917, %v1077
      %v1079 = vpop.f32.mrb[0].mxu0
      %v1080 = vpop.f32.mrb[0].mxu0
      %v1081 = vadd.f32 %v920, %v1080
      %v1082 = vpop.f32.mrb[0].mxu0
      %1083 = vmatprep.mubr.bf16.mxu0 0
      %1084 = vmatmul.mubr.bf16.gmra.mrb[0].mxu0 %v626
      %v1085 = vpop.f32.mrb[0].mxu0
      %v1086 = vadd.f32 %v925, %v1085
      %v1087 = vpop.f32.mrb[0].mxu0
      %v1088 = vpop.f32.mrb[0].mxu0
      %v1089 = vadd.f32 %v928, %v1088
      %v1090 = vpop.f32.mrb[0].mxu0
      %1091 = vmatprep.mubr.bf16.mxu0 0
      %1092 = vmatmul.mubr.bf16.gmra.mrb[0].mxu0 %v627
      %v1093 = vpop.f32.mrb[0].mxu0
      %v1094 = vadd.f32 %v933, %v1093
      %v1095 = vpop.f32.mrb[0].mxu0
      %v1096 = vpop.f32.mrb[0].mxu0
      %v1097 = vadd.f32 %v936, %v1096
      %v1098 = vpop.f32.mrb[0].mxu0
      %1099 = vmatprep.mubr.bf16.mxu0 0
      %1100 = vmatmul.mubr.bf16.gmra.mrb[0].mxu0 %v628
      %v1101 = vpop.f32.mrb[0].mxu0
      %v1102 = vadd.f32 %v941, %v1101
      %v1103 = vpop.f32.mrb[0].mxu0
      %v1104 = vpop.f32.mrb[0].mxu0
      %v1105 = vadd.f32 %v944, %v1104
      %v1106 = vpop.f32.mrb[0].mxu0
      %1107 = vmatprep.mubr.bf16.mxu0 0
      %1108 = vmatmul.mubr.bf16.gmra.mrb[0].mxu0 %v629
      %v1109 = vpop.f32.mrb[0].mxu0
      %v1110 = vadd.f32 %v949, %v1109
      %v1111 = vpop.f32.mrb[0].mxu0
      %v1112 = vpop.f32.mrb[0].mxu0
      %v1113 = vadd.f32 %v952, %v1112
      %v1114 = vpop.f32.mrb[0].mxu0
      %1115 = vmatprep.mubr.bf16.mxu0 0
      %1116 = vmatmul.mubr.bf16.gmra.mrb[0].mxu0 %v630
      %v1117 = vpop.f32.mrb[0].mxu0
      %v1118 = vadd.f32 %v957, %v1117
      %v1119 = vpop.f32.mrb[0].mxu0
      %v1120 = vpop.f32.mrb[0].mxu0
      %v1121 = vadd.f32 %v960, %v1120
      %v1122 = vpop.f32.mrb[0].mxu0
      %1123 = vmatprep.mubr.bf16.mxu0 0
      %1124 = vmatmul.mubr.bf16.gmra.mrb[0].mxu0 %v631
      %v1125 = vpop.f32.mrb[0].mxu0
      %v1126 = vadd.f32 %v965, %v1125
      %v1127 = vpop.f32.mrb[0].mxu0
      %v1128 = vpop.f32.mrb[0].mxu0
      %v1129 = vadd.f32 %v968, %v1128
      %v1130 = vpop.f32.mrb[0].mxu0
      %1131 = vmatprep.mubr.bf16.mxu0 0
      %1132 = vmatmul.mubr.bf16.gmra.mrb[0].mxu0 %v632
      %v1133 = vpop.f32.mrb[0].mxu0
      %v1134 = vadd.f32 %v973, %v1133
      %v1135 = vpop.f32.mrb[0].mxu0
      %v1136 = vpop.f32.mrb[0].mxu0
      %v1137 = vadd.f32 %v976, %v1136
      %v1138 = vpop.f32.mrb[0].mxu0
      %1139 = vmatprep.mubr.bf16.mxu0 0
      %1140 = vmatmul.mubr.bf16.gmra.mrb[0].mxu0 %v633
      %v1141 = vpop.f32.mrb[0].mxu0
      %v1142 = vadd.f32 %v981, %v1141
      %v1143 = vpop.f32.mrb[0].mxu0
      %v1144 = vpop.f32.mrb[0].mxu0
      %v1145 = vadd.f32 %v984, %v1144
      %v1146 = vpop.f32.mrb[0].mxu0
      %1147 = vmatprep.mubr.bf16.mxu0 0
      %1148 = vmatmul.mubr.bf16.gmra.mrb[0].mxu0 %v634
      %v1149 = vpop.f32.mrb[0].mxu0
      %v1150 = vadd.f32 %v989, %v1149
      %v1151 = vpop.f32.mrb[0].mxu0
      %v1152 = vpop.f32.mrb[0].mxu0
      %v1153 = vadd.f32 %v992, %v1152
      %v1154 = vpop.f32.mrb[0].mxu0
      %1155 = vmatprep.mubr.bf16.mxu0 0
      %1156 = vmatmul.mubr.bf16.gmra.mrb[0].mxu0 %v635
      %v1157 = vpop.f32.mrb[0].mxu0
      %v1158 = vadd.f32 %v997, %v1157
      %v1159 = vpop.f32.mrb[0].mxu0
      %v1160 = vpop.f32.mrb[0].mxu0
      %v1161 = vadd.f32 %v1000, %v1160
      %v1162 = vpop.f32.mrb[0].mxu0
      %1163 = vmatprep.mubr.bf16.mxu0 0
      %1164 = vmatmul.mubr.bf16.gmra.mrb[0].mxu0 %v636
      %v1165 = vpop.f32.mrb[0].mxu0
      %v1166 = vadd.f32 %v1005, %v1165
      %v1167 = vpop.f32.mrb[0].mxu0
      %v1168 = vpop.f32.mrb[0].mxu0
      %v1169 = vadd.f32 %v1008, %v1168
      %v1170 = vpop.f32.mrb[0].mxu0
      %1171 = vmatprep.mubr.bf16.mxu0 0
      %1172 = vmatmul.mubr.bf16.gmra.mrb[0].mxu0 %v637
      %v1173 = vpop.f32.mrb[0].mxu0
      %v1174 = vadd.f32 %v1013, %v1173
      %v1175 = vpop.f32.mrb[0].mxu0
      %v1176 = vpop.f32.mrb[0].mxu0
      %v1177 = vadd.f32 %v1016, %v1176
      %v1178 = vpop.f32.mrb[0].mxu0
      %1179 = vmatprep.mubr.bf16.mxu0 0
      %1180 = vmatmul.mubr.bf16.gmra.mrb[0].mxu0 %v638
      %v1181 = vpop.f32.mrb[0].mxu0
      %v1182 = vadd.f32 %v1021, %v1181
      %v1183 = vpop.f32.mrb[0].mxu0
      %v1184 = vpop.f32.mrb[0].mxu0
      %v1185 = vadd.f32 %v1024, %v1184
      %v1186 = vpop.f32.mrb[0].mxu0
      %1187 = vmatprep.mubr.bf16.mxu0 0
      %1188 = vmatmul.mubr.bf16.gmra.mrb[0].mxu0 %v639
      %v1189 = vpop.f32.mrb[0].mxu0
      %v1190 = vadd.f32 %v1029, %v1189
      %v1191 = vpop.f32.mrb[0].mxu0
      %v1192 = vpop.f32.mrb[0].mxu0
      %v1193 = vadd.f32 %v1032, %v1192
      %v1194 = vpop.f32.mrb[0].mxu0
      %1195 = vmatprep.mubr.bf16.mxu0 0
      %1196 = vmatmul.mubr.bf16.gmra.mrb[0].mxu0 %v640
      %v1197 = vpop.f32.mrb[0].mxu0
      %v1198 = vadd.f32 %v1037, %v1197
      %v1199 = vpop.f32.mrb[0].mxu0
      %v1200 = vpop.f32.mrb[0].mxu0
      %v1201 = vadd.f32 %v1040, %v1200
      %v1202 = vpop.f32.mrb[0].mxu0
      %1203 = vdwg.mxu0
      %v1252 = vunpack.c.l.b16 %v641
      %v1253 = vunpack.c.l.b16 %v642
      %v1254 = vunpack.c.l.b16 %v643
      %v1255 = vunpack.c.l.b16 %v644
      %v1256 = vunpack.c.l.b16 %v645
      %v1257 = vunpack.c.l.b16 %v646
      %v1258 = vunpack.c.l.b16 %v647
      %v1259 = vunpack.c.l.b16 %v648
      %v1260 = vunpack.c.l.b16 %v649
      %v1261 = vunpack.c.l.b16 %v650
      %v1262 = vunpack.c.l.b16 %v651
      %v1263 = vunpack.c.l.b16 %v652
      %v1264 = vunpack.c.l.b16 %v653
      %v1265 = vunpack.c.l.b16 %v654
      %v1266 = vunpack.c.l.b16 %v655
      %v1267 = vunpack.c.l.b16 %v656
      %v1268 = vunpack.c.l.b16 %v657
      %v1269 = vunpack.c.l.b16 %v658
      %v1270 = vunpack.c.l.b16 %v659
      %v1271 = vunpack.c.l.b16 %v660
      %v1272 = vunpack.c.l.b16 %v661
      %v1273 = vunpack.c.l.b16 %v662
      %v1274 = vunpack.c.l.b16 %v663
      %v1275 = vunpack.c.l.b16 %v664
      %v1276 = vunpack.c.l.b16 %v665
      %v1277 = vunpack.c.l.b16 %v666
      %v1278 = vunpack.c.l.b16 %v667
      %v1279 = vunpack.c.l.b16 %v668
      %v1280 = vunpack.c.l.b16 %v669
      %v1281 = vunpack.c.l.b16 %v670
      %v1282 = vunpack.c.l.b16 %v671
      %v1283 = vunpack.c.l.b16 %v672
      %v1284 = vunpack.c.l.b16 %v673
      %v1285 = vunpack.c.l.b16 %v674
      %v1286 = vunpack.c.l.b16 %v675
      %v1287 = vunpack.c.l.b16 %v676
      %v1288 = vunpack.c.l.b16 %v677
      %v1289 = vunpack.c.l.b16 %v678
      %v1290 = vunpack.c.l.b16 %v679
      %v1291 = vunpack.c.l.b16 %v680
      %v1292 = vunpack.c.l.b16 %v681
      %v1293 = vunpack.c.l.b16 %v682
      %v1294 = vunpack.c.l.b16 %v683
      %v1295 = vunpack.c.l.b16 %v684
      %v1296 = vunpack.c.l.b16 %v685
      %v1297 = vunpack.c.l.b16 %v686
      %v1298 = vunpack.c.l.b16 %v687
      %v1299 = vunpack.c.l.b16 %v688
      %v1300 = vpack.c.b16 %v1253, %v1252
      %v1301 = vpack.c.b16 %v1255, %v1254
      %v1302 = vpack.c.b16 %v1257, %v1256
      %v1303 = vpack.c.b16 %v1259, %v1258
      %v1304 = vpack.c.b16 %v1261, %v1260
      %v1305 = vpack.c.b16 %v1263, %v1262
      %v1306 = vpack.c.b16 %v1265, %v1264
      %v1307 = vpack.c.b16 %v1267, %v1266
      %v1308 = vpack.c.b16 %v1269, %v1268
      %v1309 = vpack.c.b16 %v1271, %v1270
      %v1310 = vpack.c.b16 %v1273, %v1272
      %v1311 = vpack.c.b16 %v1275, %v1274
      %v1312 = vpack.c.b16 %v1277, %v1276
      %v1313 = vpack.c.b16 %v1279, %v1278
      %v1314 = vpack.c.b16 %v1281, %v1280
      %v1315 = vpack.c.b16 %v1283, %v1282
      %v1316 = vpack.c.b16 %v1285, %v1284
      %v1317 = vpack.c.b16 %v1287, %v1286
      %v1318 = vpack.c.b16 %v1289, %v1288
      %v1319 = vpack.c.b16 %v1291, %v1290
      %v1320 = vpack.c.b16 %v1293, %v1292
      %v1321 = vpack.c.b16 %v1295, %v1294
      %v1322 = vpack.c.b16 %v1297, %v1296
      %v1323 = vpack.c.b16 %v1299, %v1298
      %1348 = vmatprep.subr.bf16.mxu0 0
      %1349 = vmatpush1.bf16.msra.mxu0 %v1300
      %1350 = vmatprep.subr.bf16.mxu0 0
      %1351 = vmatpush1.bf16.msra.mxu0 %v1301
      %1352 = vmatprep.subr.bf16.mxu0 0
      %1353 = vmatpush1.bf16.msra.mxu0 %v1302
      %1354 = vmatprep.subr.bf16.mxu0 0
      %1355 = vmatpush1.bf16.msra.mxu0 %v1303
      %1356 = vmatprep.subr.bf16.mxu0 0
      %1357 = vmatpush1.bf16.msra.mxu0 %v1304
      %1358 = vmatprep.subr.bf16.mxu0 0
      %1359 = vmatpush1.bf16.msra.mxu0 %v1305
      %1360 = vmatprep.subr.bf16.mxu0 0
      %1361 = vmatpush1.bf16.msra.mxu0 %v1306
      %1362 = vmatprep.subr.bf16.mxu0 0
      %1363 = vmatpush1.bf16.msra.mxu0 %v1307
      %1364 = vmatprep.subr.bf16.mxu0 0
      %1365 = vmatpush1.bf16.msra.mxu0 %v1308
      %1366 = vmatprep.subr.bf16.mxu0 0
      %1367 = vmatpush1.bf16.msra.mxu0 %v1309
      %1368 = vmatprep.subr.bf16.mxu0 0
      %1369 = vmatpush1.bf16.msra.mxu0 %v1310
      %1370 = vmatprep.subr.bf16.mxu0 0
      %1371 = vmatpush1.bf16.msra.mxu0 %v1311
      %1372 = vmatprep.subr.bf16.mxu0 0
      %1373 = vmatpush1.bf16.msra.mxu0 %v1312
      %1374 = vmatprep.subr.bf16.mxu0 0
      %1375 = vmatpush1.bf16.msra.mxu0 %v1313
      %1376 = vmatprep.subr.bf16.mxu0 0
      %1377 = vmatpush1.bf16.msra.mxu0 %v1314
      %1378 = vmatprep.subr.bf16.mxu0 0
      %1379 = vmatpush1.bf16.msra.mxu0 %v1315
      %1380 = vmatprep.mubr.bf16.mxu0 0
      %1381 = vmatmul.mubr.bf16.gmra.mrb[0].mxu0 0
      %v1382 = vpop.f32.mrb[0].mxu0
      %v1383 = vadd.f32 %v1078, %v1382
      %v1384 = vpop.f32.mrb[0].mxu0
      %v1385 = vpop.f32.mrb[0].mxu0
      %v1386 = vadd.f32 %v1081, %v1385
      %v1387 = vpop.f32.mrb[0].mxu0
      %1388 = vmatprep.mubr.bf16.mxu0 %v411
      %1389 = vmatmul.mubr.bf16.gmra.mrb[0].mxu0 %v558
      %v1390 = vpop.f32.mrb[0].mxu0
      %v1391 = vadd.f32 %v1086, %v1390
      %v1392 = vpop.f32.mrb[0].mxu0
      %v1393 = vpop.f32.mrb[0].mxu0
      %v1394 = vadd.f32 %v1089, %v1393
      %v1395 = vpop.f32.mrb[0].mxu0
      %1396 = vmatprep.mubr.bf16.mxu0 %v412
      %1397 = vmatmul.mubr.bf16.gmra.mrb[0].mxu0 %v559
      %v1398 = vpop.f32.mrb[0].mxu0
      %v1399 = vadd.f32 %v1094, %v1398
      %v1400 = vpop.f32.mrb[0].mxu0
      %v1401 = vpop.f32.mrb[0].mxu0
      %v1402 = vadd.f32 %v1097, %v1401
      %v1403 = vpop.f32.mrb[0].mxu0
      %1404 = vmatprep.mubr.bf16.mxu0 %v413
      %1405 = vmatmul.mubr.bf16.gmra.mrb[0].mxu0 %v560
      %v1406 = vpop.f32.mrb[0].mxu0
      %v1407 = vadd.f32 %v1102, %v1406
      %v1408 = vpop.f32.mrb[0].mxu0
      %v1409 = vpop.f32.mrb[0].mxu0
      %v1410 = vadd.f32 %v1105, %v1409
      %v1411 = vpop.f32.mrb[0].mxu0
      %1412 = vmatprep.mubr.bf16.mxu0 %v414
      %1413 = vmatmul.mubr.bf16.gmra.mrb[0].mxu0 %v561
      %v1414 = vpop.f32.mrb[0].mxu0
      %v1415 = vadd.f32 %v1110, %v1414
      %v1416 = vpop.f32.mrb[0].mxu0
      %v1417 = vpop.f32.mrb[0].mxu0
      %v1418 = vadd.f32 %v1113, %v1417
      %v1419 = vpop.f32.mrb[0].mxu0
      %1420 = vmatprep.mubr.bf16.mxu0 %v415
      %1421 = vmatmul.mubr.bf16.gmra.mrb[0].mxu0 %v562
      %v1422 = vpop.f32.mrb[0].mxu0
      %v1423 = vadd.f32 %v1118, %v1422
      %v1424 = vpop.f32.mrb[0].mxu0
      %v1425 = vpop.f32.mrb[0].mxu0
      %v1426 = vadd.f32 %v1121, %v1425
      %v1427 = vpop.f32.mrb[0].mxu0
      %1428 = vmatprep.mubr.bf16.mxu0 %v416
      %1429 = vmatmul.mubr.bf16.gmra.mrb[0].mxu0 %v563
      %v1430 = vpop.f32.mrb[0].mxu0
      %v1431 = vadd.f32 %v1126, %v1430
      %v1432 = vpop.f32.mrb[0].mxu0
      %v1433 = vpop.f32.mrb[0].mxu0
      %v1434 = vadd.f32 %v1129, %v1433
      %v1435 = vpop.f32.mrb[0].mxu0
      %1436 = vmatprep.mubr.bf16.mxu0 %v417
      %1437 = vmatmul.mubr.bf16.gmra.mrb[0].mxu0 %v564
      %v1438 = vpop.f32.mrb[0].mxu0
      %v1439 = vadd.f32 %v1134, %v1438
      %v1440 = vpop.f32.mrb[0].mxu0
      %v1441 = vpop.f32.mrb[0].mxu0
      %v1442 = vadd.f32 %v1137, %v1441
      %v1443 = vpop.f32.mrb[0].mxu0
      %1444 = vmatprep.mubr.bf16.mxu0 %v418
      %1445 = vmatmul.mubr.bf16.gmra.mrb[0].mxu0 %v565
      %v1446 = vpop.f32.mrb[0].mxu0
      %v1447 = vadd.f32 %v1142, %v1446
      %v1448 = vpop.f32.mrb[0].mxu0
      %v1449 = vpop.f32.mrb[0].mxu0
      %v1450 = vadd.f32 %v1145, %v1449
      %v1451 = vpop.f32.mrb[0].mxu0
      %1452 = vmatprep.mubr.bf16.mxu0 %v419
      %1453 = vmatmul.mubr.bf16.gmra.mrb[0].mxu0 %v566
      %v1454 = vpop.f32.mrb[0].mxu0
      %v1455 = vadd.f32 %v1150, %v1454
      %v1456 = vpop.f32.mrb[0].mxu0
      %v1457 = vpop.f32.mrb[0].mxu0
      %v1458 = vadd.f32 %v1153, %v1457
      %v1459 = vpop.f32.mrb[0].mxu0
      %1460 = vmatprep.mubr.bf16.mxu0 %v420
      %1461 = vmatmul.mubr.bf16.gmra.mrb[0].mxu0 %v567
      %v1462 = vpop.f32.mrb[0].mxu0
      %v1463 = vadd.f32 %v1158, %v1462
      %v1464 = vpop.f32.mrb[0].mxu0
      %v1465 = vpop.f32.mrb[0].mxu0
      %v1466 = vadd.f32 %v1161, %v1465
      %v1467 = vpop.f32.mrb[0].mxu0
      %1468 = vmatprep.mubr.bf16.mxu0 %v421
      %1469 = vmatmul.mubr.bf16.gmra.mrb[0].mxu0 %v568
      %v1470 = vpop.f32.mrb[0].mxu0
      %v1471 = vadd.f32 %v1166, %v1470
      %v1472 = vpop.f32.mrb[0].mxu0
      %v1473 = vpop.f32.mrb[0].mxu0
      %v1474 = vadd.f32 %v1169, %v1473
      %v1475 = vpop.f32.mrb[0].mxu0
      %1476 = vmatprep.mubr.bf16.mxu0 %v422
      %1477 = vmatmul.mubr.bf16.gmra.mrb[0].mxu0 %v569
      %v1478 = vpop.f32.mrb[0].mxu0
      %v1479 = vadd.f32 %v1174, %v1478
      %v1480 = vpop.f32.mrb[0].mxu0
      %v1481 = vpop.f32.mrb[0].mxu0
      %v1482 = vadd.f32 %v1177, %v1481
      %v1483 = vpop.f32.mrb[0].mxu0
      %1484 = vmatprep.mubr.bf16.mxu0 %v423
      %1485 = vmatmul.mubr.bf16.gmra.mrb[0].mxu0 %v570
      %v1486 = vpop.f32.mrb[0].mxu0
      %v1487 = vadd.f32 %v1182, %v1486
      %v1488 = vpop.f32.mrb[0].mxu0
      %v1489 = vpop.f32.mrb[0].mxu0
      %v1490 = vadd.f32 %v1185, %v1489
      %v1491 = vpop.f32.mrb[0].mxu0
      %1492 = vmatprep.mubr.bf16.mxu0 %v424
      %1493 = vmatmul.mubr.bf16.gmra.mrb[0].mxu0 %v571
      %v1494 = vpop.f32.mrb[0].mxu0
      %v1495 = vadd.f32 %v1190, %v1494
      %v1496 = vpop.f32.mrb[0].mxu0
      %v1497 = vpop.f32.mrb[0].mxu0
      %v1498 = vadd.f32 %v1193, %v1497
      %v1499 = vpop.f32.mrb[0].mxu0
      %1500 = vmatprep.mubr.bf16.mxu0 %v425
      %1501 = vmatmul.mubr.bf16.gmra.mrb[0].mxu0 %v572
      %v1502 = vpop.f32.mrb[0].mxu0
      %v1503 = vadd.f32 %v1198, %v1502
      %v1504 = vpop.f32.mrb[0].mxu0
      %v1505 = vpop.f32.mrb[0].mxu0
      %v1506 = vadd.f32 %v1201, %v1505
      %v1507 = vpop.f32.mrb[0].mxu0
      %1508 = vdwg.mxu0
      %1509 = vmatprep.subr.bf16.mxu0 0
      %1510 = vmatpush1.bf16.msra.mxu0 %v1316
      %1511 = vmatprep.subr.bf16.mxu0 0
      %1512 = vmatpush1.bf16.msra.mxu0 %v1317
      %1513 = vmatprep.subr.bf16.mxu0 0
      %1514 = vmatpush1.bf16.msra.mxu0 %v1318
      %1515 = vmatprep.subr.bf16.mxu0 0
      %1516 = vmatpush1.bf16.msra.mxu0 %v1319
      %1517 = vmatprep.subr.bf16.mxu0 0
      %1518 = vmatpush1.bf16.msra.mxu0 %v1320
      %1519 = vmatprep.subr.bf16.mxu0 0
      %1520 = vmatpush1.bf16.msra.mxu0 %v1321
      %1521 = vmatprep.subr.bf16.mxu0 0
      %1522 = vmatpush1.bf16.msra.mxu0 %v1322
      %1523 = vmatprep.subr.bf16.mxu0 0
      %1524 = vmatpush1.bf16.msra.mxu0 %v1323
      %1525 = vmatprep.subr.bf16.mxu0 0
      %1526 = vmatpush1.bf16.msra.mxu0 0
      %1527 = vmatprep.subr.bf16.mxu0 0
      %1528 = vmatpush1.bf16.msra.mxu0 0
      %1529 = vmatprep.subr.bf16.mxu0 0
      %1530 = vmatpush1.bf16.msra.mxu0 0
      %1531 = vmatprep.subr.bf16.mxu0 0
      %1532 = vmatpush1.bf16.msra.mxu0 0
      %1533 = vmatprep.subr.bf16.mxu0 0
      %1534 = vmatpush1.bf16.msra.mxu0 0
      %1535 = vmatprep.subr.bf16.mxu0 0
      %1536 = vmatpush1.bf16.msra.mxu0 0
      %1537 = vmatprep.subr.bf16.mxu0 0
      %1538 = vmatpush1.bf16.msra.mxu0 0
      %1539 = vmatprep.subr.bf16.mxu0 0
      %1540 = vmatpush1.bf16.msra.mxu0 0
      %1541 = vmatprep.mubr.bf16.mxu0 0
      %1542 = vmatmul.mubr.bf16.gmra.mrb[0].mxu0 0
      %v1543 = vpop.f32.mrb[0].mxu0
      %v1544 = vadd.f32 %v1383, %v1543
      %v1545 = vpop.f32.mrb[0].mxu0
      %v1546 = vpop.f32.mrb[0].mxu0
      %v1547 = vadd.f32 %v1386, %v1546
      %v1548 = vpop.f32.mrb[0].mxu0
      %1549 = vmatprep.mubr.bf16.mxu0 0
      %1550 = vmatmul.mubr.bf16.gmra.mrb[0].mxu0 %v625
      %v1551 = vpop.f32.mrb[0].mxu0
      %v1552 = vadd.f32 %v1391, %v1551
      %v1553 = vpop.f32.mrb[0].mxu0
      %v1554 = vpop.f32.mrb[0].mxu0
      %v1555 = vadd.f32 %v1394, %v1554
      %v1556 = vpop.f32.mrb[0].mxu0
      %1557 = vmatprep.mubr.bf16.mxu0 0
      %1558 = vmatmul.mubr.bf16.gmra.mrb[0].mxu0 %v626
      %v1559 = vpop.f32.mrb[0].mxu0
      %v1560 = vadd.f32 %v1399, %v1559
      %v1561 = vpop.f32.mrb[0].mxu0
      %v1562 = vpop.f32.mrb[0].mxu0
      %v1563 = vadd.f32 %v1402, %v1562
      %v1564 = vpop.f32.mrb[0].mxu0
      %1565 = vmatprep.mubr.bf16.mxu0 0
      %1566 = vmatmul.mubr.bf16.gmra.mrb[0].mxu0 %v627
      %v1567 = vpop.f32.mrb[0].mxu0
      %v1568 = vadd.f32 %v1407, %v1567
      %v1569 = vpop.f32.mrb[0].mxu0
      %v1570 = vpop.f32.mrb[0].mxu0
      %v1571 = vadd.f32 %v1410, %v1570
      %v1572 = vpop.f32.mrb[0].mxu0
      %1573 = vmatprep.mubr.bf16.mxu0 0
      %1574 = vmatmul.mubr.bf16.gmra.mrb[0].mxu0 %v628
      %v1575 = vpop.f32.mrb[0].mxu0
      %v1576 = vadd.f32 %v1415, %v1575
      %v1577 = vpop.f32.mrb[0].mxu0
      %v1578 = vpop.f32.mrb[0].mxu0
      %v1579 = vadd.f32 %v1418, %v1578
      %v1580 = vpop.f32.mrb[0].mxu0
      %1581 = vmatprep.mubr.bf16.mxu0 0
      %1582 = vmatmul.mubr.bf16.gmra.mrb[0].mxu0 %v629
      %v1583 = vpop.f32.mrb[0].mxu0
      %v1584 = vadd.f32 %v1423, %v1583
      %v1585 = vpop.f32.mrb[0].mxu0
      %v1586 = vpop.f32.mrb[0].mxu0
      %v1587 = vadd.f32 %v1426, %v1586
      %v1588 = vpop.f32.mrb[0].mxu0
      %1589 = vmatprep.mubr.bf16.mxu0 0
      %1590 = vmatmul.mubr.bf16.gmra.mrb[0].mxu0 %v630
      %v1591 = vpop.f32.mrb[0].mxu0
      %v1592 = vadd.f32 %v1431, %v1591
      %v1593 = vpop.f32.mrb[0].mxu0
      %v1594 = vpop.f32.mrb[0].mxu0
      %v1595 = vadd.f32 %v1434, %v1594
      %v1596 = vpop.f32.mrb[0].mxu0
      %1597 = vmatprep.mubr.bf16.mxu0 0
      %1598 = vmatmul.mubr.bf16.gmra.mrb[0].mxu0 %v631
      %v1599 = vpop.f32.mrb[0].mxu0
      %v1600 = vadd.f32 %v1439, %v1599
      %v1601 = vpop.f32.mrb[0].mxu0
      %v1602 = vpop.f32.mrb[0].mxu0
      %v1603 = vadd.f32 %v1442, %v1602
      %v1604 = vpop.f32.mrb[0].mxu0
      %1605 = vmatprep.mubr.bf16.mxu0 0
      %1606 = vmatmul.mubr.bf16.gmra.mrb[0].mxu0 %v632
      %v1607 = vpop.f32.mrb[0].mxu0
      %v1608 = vadd.f32 %v1447, %v1607
      %v1609 = vpop.f32.mrb[0].mxu0
      %v1610 = vpop.f32.mrb[0].mxu0
      %v1611 = vadd.f32 %v1450, %v1610
      %v1612 = vpop.f32.mrb[0].mxu0
      %1613 = vmatprep.mubr.bf16.mxu0 0
      %1614 = vmatmul.mubr.bf16.gmra.mrb[0].mxu0 %v633
      %v1615 = vpop.f32.mrb[0].mxu0
      %v1616 = vadd.f32 %v1455, %v1615
      %v1617 = vpop.f32.mrb[0].mxu0
      %v1618 = vpop.f32.mrb[0].mxu0
      %v1619 = vadd.f32 %v1458, %v1618
      %v1620 = vpop.f32.mrb[0].mxu0
      %1621 = vmatprep.mubr.bf16.mxu0 0
      %1622 = vmatmul.mubr.bf16.gmra.mrb[0].mxu0 %v634
      %v1623 = vpop.f32.mrb[0].mxu0
      %v1624 = vadd.f32 %v1463, %v1623
      %v1625 = vpop.f32.mrb[0].mxu0
      %v1626 = vpop.f32.mrb[0].mxu0
      %v1627 = vadd.f32 %v1466, %v1626
      %v1628 = vpop.f32.mrb[0].mxu0
      %1629 = vmatprep.mubr.bf16.mxu0 0
      %1630 = vmatmul.mubr.bf16.gmra.mrb[0].mxu0 %v635
      %v1631 = vpop.f32.mrb[0].mxu0
      %v1632 = vadd.f32 %v1471, %v1631
      %v1633 = vpop.f32.mrb[0].mxu0
      %v1634 = vpop.f32.mrb[0].mxu0
      %v1635 = vadd.f32 %v1474, %v1634
      %v1636 = vpop.f32.mrb[0].mxu0
      %1637 = vmatprep.mubr.bf16.mxu0 0
      %1638 = vmatmul.mubr.bf16.gmra.mrb[0].mxu0 %v636
      %v1639 = vpop.f32.mrb[0].mxu0
      %v1640 = vadd.f32 %v1479, %v1639
      %v1641 = vpop.f32.mrb[0].mxu0
      %v1642 = vpop.f32.mrb[0].mxu0
      %v1643 = vadd.f32 %v1482, %v1642
      %v1644 = vpop.f32.mrb[0].mxu0
      %1645 = vmatprep.mubr.bf16.mxu0 0
      %1646 = vmatmul.mubr.bf16.gmra.mrb[0].mxu0 %v637
      %v1647 = vpop.f32.mrb[0].mxu0
      %v1648 = vadd.f32 %v1487, %v1647
      %v1649 = vpop.f32.mrb[0].mxu0
      %v1650 = vpop.f32.mrb[0].mxu0
      %v1651 = vadd.f32 %v1490, %v1650
      %v1652 = vpop.f32.mrb[0].mxu0
      %1653 = vmatprep.mubr.bf16.mxu0 0
      %1654 = vmatmul.mubr.bf16.gmra.mrb[0].mxu0 %v638
      %v1655 = vpop.f32.mrb[0].mxu0
      %v1656 = vadd.f32 %v1495, %v1655
      %v1657 = vpop.f32.mrb[0].mxu0
      %v1658 = vpop.f32.mrb[0].mxu0
      %v1659 = vadd.f32 %v1498, %v1658
      %v1660 = vpop.f32.mrb[0].mxu0
      %1661 = vmatprep.mubr.bf16.mxu0 0
      %1662 = vmatmul.mubr.bf16.gmra.mrb[0].mxu0 %v639
      %v1663 = vpop.f32.mrb[0].mxu0
      %v1664 = vadd.f32 %v1503, %v1663
      %v1665 = vpop.f32.mrb[0].mxu0
      %v1666 = vpop.f32.mrb[0].mxu0
      %v1667 = vadd.f32 %v1506, %v1666
      %v1668 = vpop.f32.mrb[0].mxu0
      %1669 = vdwg.mxu0
      %s1670 = scalar_lea.vmem %s3, 384
      %v1671 = vld [vmem:[%s1670] sm:$0xf]
      %v1672 = vld [vmem:[%s1670 + $0x4] sm:$0xf]
      %v1673 = vld [vmem:[%s1670 + $0x8] sm:$0xf]
      %v1674 = vld [vmem:[%s1670 + $0xc] sm:$0xf]
      %v1675 = vld [vmem:[%s1670 + $0x10] sm:$0xf]
      %v1676 = vld [vmem:[%s1670 + $0x14] sm:$0xf]
      %v1677 = vld [vmem:[%s1670 + $0x18] sm:$0xf]
      %v1678 = vld [vmem:[%s1670 + $0x1c] sm:$0xf]
      %v1679 = vld [vmem:[%s1670 + $0x20] sm:$0xf]
      %v1680 = vld [vmem:[%s1670 + $0x24] sm:$0xf]
      %v1681 = vld [vmem:[%s1670 + $0x28] sm:$0xf]
      %v1682 = vld [vmem:[%s1670 + $0x2c] sm:$0xf]
      %v1683 = vld [vmem:[%s1670 + $0x30] sm:$0xf]
      %v1684 = vld [vmem:[%s1670 + $0x34] sm:$0xf]
      %v1685 = vld [vmem:[%s1670 + $0x38] sm:$0xf]
      %v1686 = vld [vmem:[%s1670 + $0x3c] sm:$0xf]
      %v1687 = vld [vmem:[%s1670 + $0x40] sm:$0xf]
      %v1688 = vld [vmem:[%s1670 + $0x44] sm:$0xf]
      %v1689 = vld [vmem:[%s1670 + $0x48] sm:$0xf]
      %v1690 = vld [vmem:[%s1670 + $0x4c] sm:$0xf]
      %v1691 = vld [vmem:[%s1670 + $0x50] sm:$0xf]
      %v1692 = vld [vmem:[%s1670 + $0x54] sm:$0xf]
      %v1693 = vld [vmem:[%s1670 + $0x58] sm:$0xf]
      %v1694 = vld [vmem:[%s1670 + $0x5c] sm:$0xf]
      %v1695 = vld [vmem:[%s1670 + $0x60] sm:$0xf]
      %v1696 = vld [vmem:[%s1670 + $0x64] sm:$0xf]
      %v1697 = vld [vmem:[%s1670 + $0x68] sm:$0xf]
      %v1698 = vld [vmem:[%s1670 + $0x6c] sm:$0xf]
      %v1699 = vld [vmem:[%s1670 + $0x70] sm:$0xf]
      %v1700 = vld [vmem:[%s1670 + $0x74] sm:$0xf]
      %v1701 = vld [vmem:[%s1670 + $0x78] sm:$0xf]
      %v1702 = vld [vmem:[%s1670 + $0x7c] sm:$0xf]
      %v1703 = vld [vmem:[%s1670 + $0x80] sm:$0xf]
      %v1704 = vld [vmem:[%s1670 + $0x84] sm:$0xf]
      %v1705 = vld [vmem:[%s1670 + $0x88] sm:$0xf]
      %v1706 = vld [vmem:[%s1670 + $0x8c] sm:$0xf]
      %v1707 = vld [vmem:[%s1670 + $0x90] sm:$0xf]
      %v1708 = vld [vmem:[%s1670 + $0x94] sm:$0xf]
      %v1709 = vld [vmem:[%s1670 + $0x98] sm:$0xf]
      %v1710 = vld [vmem:[%s1670 + $0x9c] sm:$0xf]
      %v1711 = vld [vmem:[%s1670 + $0xa0] sm:$0xf]
      %v1712 = vld [vmem:[%s1670 + $0xa4] sm:$0xf]
      %v1713 = vld [vmem:[%s1670 + $0xa8] sm:$0xf]
      %v1714 = vld [vmem:[%s1670 + $0xac] sm:$0xf]
      %v1715 = vld [vmem:[%s1670 + $0xb0] sm:$0xf]
      %v1716 = vld [vmem:[%s1670 + $0xb4] sm:$0xf]
      %v1717 = vld [vmem:[%s1670 + $0xb8] sm:$0xf]
      %v1718 = vld [vmem:[%s1670 + $0xbc] sm:$0xf]
      %v1767 = vunpack.c.l.b16 %v1671
      %v1768 = vunpack.c.l.b16 %v1672
      %v1769 = vunpack.c.l.b16 %v1673
      %v1770 = vunpack.c.l.b16 %v1674
      %v1771 = vunpack.c.l.b16 %v1675
      %v1772 = vunpack.c.l.b16 %v1676
      %v1773 = vunpack.c.l.b16 %v1677
      %v1774 = vunpack.c.l.b16 %v1678
      %v1775 = vunpack.c.l.b16 %v1679
      %v1776 = vunpack.c.l.b16 %v1680
      %v1777 = vunpack.c.l.b16 %v1681
      %v1778 = vunpack.c.l.b16 %v1682
      %v1779 = vunpack.c.l.b16 %v1683
      %v1780 = vunpack.c.l.b16 %v1684
      %v1781 = vunpack.c.l.b16 %v1685
      %v1782 = vunpack.c.l.b16 %v1686
      %v1783 = vunpack.c.l.b16 %v1687
      %v1784 = vunpack.c.l.b16 %v1688
      %v1785 = vunpack.c.l.b16 %v1689
      %v1786 = vunpack.c.l.b16 %v1690
      %v1787 = vunpack.c.l.b16 %v1691
      %v1788 = vunpack.c.l.b16 %v1692
      %v1789 = vunpack.c.l.b16 %v1693
      %v1790 = vunpack.c.l.b16 %v1694
      %v1791 = vunpack.c.l.b16 %v1695
      %v1792 = vunpack.c.l.b16 %v1696
      %v1793 = vunpack.c.l.b16 %v1697
      %v1794 = vunpack.c.l.b16 %v1698
      %v1795 = vunpack.c.l.b16 %v1699
      %v1796 = vunpack.c.l.b16 %v1700
      %v1797 = vunpack.c.l.b16 %v1701
      %v1798 = vunpack.c.l.b16 %v1702
      %v1799 = vunpack.c.l.b16 %v1703
      %v1800 = vunpack.c.l.b16 %v1704
      %v1801 = vunpack.c.l.b16 %v1705
      %v1802 = vunpack.c.l.b16 %v1706
      %v1803 = vunpack.c.l.b16 %v1707
      %v1804 = vunpack.c.l.b16 %v1708
      %v1805 = vunpack.c.l.b16 %v1709
      %v1806 = vunpack.c.l.b16 %v1710
      %v1807 = vunpack.c.l.b16 %v1711
      %v1808 = vunpack.c.l.b16 %v1712
      %v1809 = vunpack.c.l.b16 %v1713
      %v1810 = vunpack.c.l.b16 %v1714
      %v1811 = vunpack.c.l.b16 %v1715
      %v1812 = vunpack.c.l.b16 %v1716
      %v1813 = vunpack.c.l.b16 %v1717
      %v1814 = vunpack.c.l.b16 %v1718
      %v1815 = vpack.c.b16 %v1768, %v1767
      %v1816 = vpack.c.b16 %v1770, %v1769
      %v1817 = vpack.c.b16 %v1772, %v1771
      %v1818 = vpack.c.b16 %v1774, %v1773
      %v1819 = vpack.c.b16 %v1776, %v1775
      %v1820 = vpack.c.b16 %v1778, %v1777
      %v1821 = vpack.c.b16 %v1780, %v1779
      %v1822 = vpack.c.b16 %v1782, %v1781
      %v1823 = vpack.c.b16 %v1784, %v1783
      %v1824 = vpack.c.b16 %v1786, %v1785
      %v1825 = vpack.c.b16 %v1788, %v1787
      %v1826 = vpack.c.b16 %v1790, %v1789
      %v1827 = vpack.c.b16 %v1792, %v1791
      %v1828 = vpack.c.b16 %v1794, %v1793
      %v1829 = vpack.c.b16 %v1796, %v1795
      %v1830 = vpack.c.b16 %v1798, %v1797
      %v1831 = vpack.c.b16 %v1800, %v1799
      %v1832 = vpack.c.b16 %v1802, %v1801
      %v1833 = vpack.c.b16 %v1804, %v1803
      %v1834 = vpack.c.b16 %v1806, %v1805
      %v1835 = vpack.c.b16 %v1808, %v1807
      %v1836 = vpack.c.b16 %v1810, %v1809
      %v1837 = vpack.c.b16 %v1812, %v1811
      %v1838 = vpack.c.b16 %v1814, %v1813
      %1863 = vmatprep.subr.bf16.mxu0 0
      %1864 = vmatpush1.bf16.msra.mxu0 %v1815
      %1865 = vmatprep.subr.bf16.mxu0 0
      %1866 = vmatpush1.bf16.msra.mxu0 %v1816
      %1867 = vmatprep.subr.bf16.mxu0 0
      %1868 = vmatpush1.bf16.msra.mxu0 %v1817
      %1869 = vmatprep.subr.bf16.mxu0 0
      %1870 = vmatpush1.bf16.msra.mxu0 %v1818
      %1871 = vmatprep.subr.bf16.mxu0 0
      %1872 = vmatpush1.bf16.msra.mxu0 %v1819
      %1873 = vmatprep.subr.bf16.mxu0 0
      %1874 = vmatpush1.bf16.msra.mxu0 %v1820
      %1875 = vmatprep.subr.bf16.mxu0 0
      %1876 = vmatpush1.bf16.msra.mxu0 %v1821
      %1877 = vmatprep.subr.bf16.mxu0 0
      %1878 = vmatpush1.bf16.msra.mxu0 %v1822
      %1879 = vmatprep.subr.bf16.mxu0 0
      %1880 = vmatpush1.bf16.msra.mxu0 %v1823
      %1881 = vmatprep.subr.bf16.mxu0 0
      %1882 = vmatpush1.bf16.msra.mxu0 %v1824
      %1883 = vmatprep.subr.bf16.mxu0 0
      %1884 = vmatpush1.bf16.msra.mxu0 %v1825
      %1885 = vmatprep.subr.bf16.mxu0 0
      %1886 = vmatpush1.bf16.msra.mxu0 %v1826
      %1887 = vmatprep.subr.bf16.mxu0 0
      %1888 = vmatpush1.bf16.msra.mxu0 %v1827
      %1889 = vmatprep.subr.bf16.mxu0 0
      %1890 = vmatpush1.bf16.msra.mxu0 %v1828
      %1891 = vmatprep.subr.bf16.mxu0 0
      %1892 = vmatpush1.bf16.msra.mxu0 %v1829
      %1893 = vmatprep.subr.bf16.mxu0 0
      %1894 = vmatpush1.bf16.msra.mxu0 %v1830
      %1895 = vmatprep.mubr.bf16.mxu0 %v412
      %1896 = vmatmul.mubr.bf16.gmra.mrb[0].mxu0 %v559
      %v1897 = vpop.f32.mrb[0].mxu0
      %v1898 = vadd.f32 0.0, %v1897
      %v1899 = vpop.f32.mrb[0].mxu0
      %v1900 = vpop.f32.mrb[0].mxu0
      %v1901 = vadd.f32 0.0, %v1900
      %v1902 = vpop.f32.mrb[0].mxu0
      %1903 = vmatprep.mubr.bf16.mxu0 %v413
      %1904 = vmatmul.mubr.bf16.gmra.mrb[0].mxu0 %v560
      %v1905 = vpop.f32.mrb[0].mxu0
      %v1906 = vadd.f32 0.0, %v1905
      %v1907 = vpop.f32.mrb[0].mxu0
      %v1908 = vpop.f32.mrb[0].mxu0
      %v1909 = vadd.f32 0.0, %v1908
      %v1910 = vpop.f32.mrb[0].mxu0
      %1911 = vmatprep.mubr.bf16.mxu0 %v414
      %1912 = vmatmul.mubr.bf16.gmra.mrb[0].mxu0 %v561
      %v1913 = vpop.f32.mrb[0].mxu0
      %v1914 = vadd.f32 0.0, %v1913
      %v1915 = vpop.f32.mrb[0].mxu0
      %v1916 = vpop.f32.mrb[0].mxu0
      %v1917 = vadd.f32 0.0, %v1916
      %v1918 = vpop.f32.mrb[0].mxu0
      %1919 = vmatprep.mubr.bf16.mxu0 %v415
      %1920 = vmatmul.mubr.bf16.gmra.mrb[0].mxu0 %v562
      %v1921 = vpop.f32.mrb[0].mxu0
      %v1922 = vadd.f32 0.0, %v1921
      %v1923 = vpop.f32.mrb[0].mxu0
      %v1924 = vpop.f32.mrb[0].mxu0
      %v1925 = vadd.f32 0.0, %v1924
      %v1926 = vpop.f32.mrb[0].mxu0
      %1927 = vmatprep.mubr.bf16.mxu0 %v416
      %1928 = vmatmul.mubr.bf16.gmra.mrb[0].mxu0 %v563
      %v1929 = vpop.f32.mrb[0].mxu0
      %v1930 = vadd.f32 0.0, %v1929
      %v1931 = vpop.f32.mrb[0].mxu0
      %v1932 = vpop.f32.mrb[0].mxu0
      %v1933 = vadd.f32 0.0, %v1932
      %v1934 = vpop.f32.mrb[0].mxu0
      %1935 = vmatprep.mubr.bf16.mxu0 %v417
      %1936 = vmatmul.mubr.bf16.gmra.mrb[0].mxu0 %v564
      %v1937 = vpop.f32.mrb[0].mxu0
      %v1938 = vadd.f32 0.0, %v1937
      %v1939 = vpop.f32.mrb[0].mxu0
      %v1940 = vpop.f32.mrb[0].mxu0
      %v1941 = vadd.f32 0.0, %v1940
      %v1942 = vpop.f32.mrb[0].mxu0
      %1943 = vmatprep.mubr.bf16.mxu0 %v418
      %1944 = vmatmul.mubr.bf16.gmra.mrb[0].mxu0 %v565
      %v1945 = vpop.f32.mrb[0].mxu0
      %v1946 = vadd.f32 0.0, %v1945
      %v1947 = vpop.f32.mrb[0].mxu0
      %v1948 = vpop.f32.mrb[0].mxu0
      %v1949 = vadd.f32 0.0, %v1948
      %v1950 = vpop.f32.mrb[0].mxu0
      %1951 = vmatprep.mubr.bf16.mxu0 %v419
      %1952 = vmatmul.mubr.bf16.gmra.mrb[0].mxu0 %v566
      %v1953 = vpop.f32.mrb[0].mxu0
      %v1954 = vadd.f32 0.0, %v1953
      %v1955 = vpop.f32.mrb[0].mxu0
      %v1956 = vpop.f32.mrb[0].mxu0
      %v1957 = vadd.f32 0.0, %v1956
      %v1958 = vpop.f32.mrb[0].mxu0
      %1959 = vmatprep.mubr.bf16.mxu0 %v420
      %1960 = vmatmul.mubr.bf16.gmra.mrb[0].mxu0 %v567
      %v1961 = vpop.f32.mrb[0].mxu0
      %v1962 = vadd.f32 0.0, %v1961
      %v1963 = vpop.f32.mrb[0].mxu0
      %v1964 = vpop.f32.mrb[0].mxu0
      %v1965 = vadd.f32 0.0, %v1964
      %v1966 = vpop.f32.mrb[0].mxu0
      %1967 = vmatprep.mubr.bf16.mxu0 %v421
      %1968 = vmatmul.mubr.bf16.gmra.mrb[0].mxu0 %v568
      %v1969 = vpop.f32.mrb[0].mxu0
      %v1970 = vadd.f32 0.0, %v1969
      %v1971 = vpop.f32.mrb[0].mxu0
      %v1972 = vpop.f32.mrb[0].mxu0
      %v1973 = vadd.f32 0.0, %v1972
      %v1974 = vpop.f32.mrb[0].mxu0
      %1975 = vmatprep.mubr.bf16.mxu0 %v422
      %1976 = vmatmul.mubr.bf16.gmra.mrb[0].mxu0 %v569
      %v1977 = vpop.f32.mrb[0].mxu0
      %v1978 = vadd.f32 0.0, %v1977
      %v1979 = vpop.f32.mrb[0].mxu0
      %v1980 = vpop.f32.mrb[0].mxu0
      %v1981 = vadd.f32 0.0, %v1980
      %v1982 = vpop.f32.mrb[0].mxu0
      %1983 = vmatprep.mubr.bf16.mxu0 %v423
      %1984 = vmatmul.mubr.bf16.gmra.mrb[0].mxu0 %v570
      %v1985 = vpop.f32.mrb[0].mxu0
      %v1986 = vadd.f32 0.0, %v1985
      %v1987 = vpop.f32.mrb[0].mxu0
      %v1988 = vpop.f32.mrb[0].mxu0
      %v1989 = vadd.f32 0.0, %v1988
      %v1990 = vpop.f32.mrb[0].mxu0
      %1991 = vmatprep.mubr.bf16.mxu0 %v424
      %1992 = vmatmul.mubr.bf16.gmra.mrb[0].mxu0 %v571
      %v1993 = vpop.f32.mrb[0].mxu0
      %v1994 = vadd.f32 0.0, %v1993
      %v1995 = vpop.f32.mrb[0].mxu0
      %v1996 = vpop.f32.mrb[0].mxu0
      %v1997 = vadd.f32 0.0, %v1996
      %v1998 = vpop.f32.mrb[0].mxu0
      %1999 = vmatprep.mubr.bf16.mxu0 %v425
      %2000 = vmatmul.mubr.bf16.gmra.mrb[0].mxu0 %v572
      %v2001 = vpop.f32.mrb[0].mxu0
      %v2002 = vadd.f32 0.0, %v2001
      %v2003 = vpop.f32.mrb[0].mxu0
      %v2004 = vpop.f32.mrb[0].mxu0
      %v2005 = vadd.f32 0.0, %v2004
      %v2006 = vpop.f32.mrb[0].mxu0
      %2007 = vmatprep.mubr.bf16.mxu0 %v426
      %2008 = vmatmul.mubr.bf16.gmra.mrb[0].mxu0 %v573
      %v2009 = vpop.f32.mrb[0].mxu0
      %v2010 = vadd.f32 0.0, %v2009
      %v2011 = vpop.f32.mrb[0].mxu0
      %v2012 = vpop.f32.mrb[0].mxu0
      %v2013 = vadd.f32 0.0, %v2012
      %v2014 = vpop.f32.mrb[0].mxu0
      %2015 = vmatprep.mubr.bf16.mxu0 0
      %2016 = vmatmul.mubr.bf16.gmra.mrb[0].mxu0 0
      %v2017 = vpop.f32.mrb[0].mxu0
      %v2018 = vadd.f32 0.0, %v2017
      %v2019 = vpop.f32.mrb[0].mxu0
      %v2020 = vpop.f32.mrb[0].mxu0
      %v2021 = vadd.f32 0.0, %v2020
      %v2022 = vpop.f32.mrb[0].mxu0
      %2023 = vdwg.mxu0
      %2024 = vmatprep.subr.bf16.mxu0 0
      %2025 = vmatpush1.bf16.msra.mxu0 %v1831
      %2026 = vmatprep.subr.bf16.mxu0 0
      %2027 = vmatpush1.bf16.msra.mxu0 %v1832
      %2028 = vmatprep.subr.bf16.mxu0 0
      %2029 = vmatpush1.bf16.msra.mxu0 %v1833
      %2030 = vmatprep.subr.bf16.mxu0 0
      %2031 = vmatpush1.bf16.msra.mxu0 %v1834
      %2032 = vmatprep.subr.bf16.mxu0 0
      %2033 = vmatpush1.bf16.msra.mxu0 %v1835
      %2034 = vmatprep.subr.bf16.mxu0 0
      %2035 = vmatpush1.bf16.msra.mxu0 %v1836
      %2036 = vmatprep.subr.bf16.mxu0 0
      %2037 = vmatpush1.bf16.msra.mxu0 %v1837
      %2038 = vmatprep.subr.bf16.mxu0 0
      %2039 = vmatpush1.bf16.msra.mxu0 %v1838
      %2040 = vmatprep.subr.bf16.mxu0 0
      %2041 = vmatpush1.bf16.msra.mxu0 0
      %2042 = vmatprep.subr.bf16.mxu0 0
      %2043 = vmatpush1.bf16.msra.mxu0 0
      %2044 = vmatprep.subr.bf16.mxu0 0
      %2045 = vmatpush1.bf16.msra.mxu0 0
      %2046 = vmatprep.subr.bf16.mxu0 0
      %2047 = vmatpush1.bf16.msra.mxu0 0
      %2048 = vmatprep.subr.bf16.mxu0 0
      %2049 = vmatpush1.bf16.msra.mxu0 0
      %2050 = vmatprep.subr.bf16.mxu0 0
      %2051 = vmatpush1.bf16.msra.mxu0 0
      %2052 = vmatprep.subr.bf16.mxu0 0
      %2053 = vmatpush1.bf16.msra.mxu0 0
      %2054 = vmatprep.subr.bf16.mxu0 0
      %2055 = vmatpush1.bf16.msra.mxu0 0
      %2056 = vmatprep.mubr.bf16.mxu0 0
      %2057 = vmatmul.mubr.bf16.gmra.mrb[0].mxu0 %v626
      %v2058 = vpop.f32.mrb[0].mxu0
      %v2059 = vadd.f32 %v1898, %v2058
      %v2060 = vpop.f32.mrb[0].mxu0
      %v2061 = vpop.f32.mrb[0].mxu0
      %v2062 = vadd.f32 %v1901, %v2061
      %v2063 = vpop.f32.mrb[0].mxu0
      %2064 = vmatprep.mubr.bf16.mxu0 0
      %2065 = vmatmul.mubr.bf16.gmra.mrb[0].mxu0 %v627
      %v2066 = vpop.f32.mrb[0].mxu0
      %v2067 = vadd.f32 %v1906, %v2066
      %v2068 = vpop.f32.mrb[0].mxu0
      %v2069 = vpop.f32.mrb[0].mxu0
      %v2070 = vadd.f32 %v1909, %v2069
      %v2071 = vpop.f32.mrb[0].mxu0
      %2072 = vmatprep.mubr.bf16.mxu0 0
      %2073 = vmatmul.mubr.bf16.gmra.mrb[0].mxu0 %v628
      %v2074 = vpop.f32.mrb[0].mxu0
      %v2075 = vadd.f32 %v1914, %v2074
      %v2076 = vpop.f32.mrb[0].mxu0
      %v2077 = vpop.f32.mrb[0].mxu0
      %v2078 = vadd.f32 %v1917, %v2077
      %v2079 = vpop.f32.mrb[0].mxu0
      %2080 = vmatprep.mubr.bf16.mxu0 0
      %2081 = vmatmul.mubr.bf16.gmra.mrb[0].mxu0 %v629
      %v2082 = vpop.f32.mrb[0].mxu0
      %v2083 = vadd.f32 %v1922, %v2082
      %v2084 = vpop.f32.mrb[0].mxu0
      %v2085 = vpop.f32.mrb[0].mxu0
      %v2086 = vadd.f32 %v1925, %v2085
      %v2087 = vpop.f32.mrb[0].mxu0
      %2088 = vmatprep.mubr.bf16.mxu0 0
      %2089 = vmatmul.mubr.bf16.gmra.mrb[0].mxu0 %v630
      %v2090 = vpop.f32.mrb[0].mxu0
      %v2091 = vadd.f32 %v1930, %v2090
      %v2092 = vpop.f32.mrb[0].mxu0
      %v2093 = vpop.f32.mrb[0].mxu0
      %v2094 = vadd.f32 %v1933, %v2093
      %v2095 = vpop.f32.mrb[0].mxu0
      %2096 = vmatprep.mubr.bf16.mxu0 0
      %2097 = vmatmul.mubr.bf16.gmra.mrb[0].mxu0 %v631
      %v2098 = vpop.f32.mrb[0].mxu0
      %v2099 = vadd.f32 %v1938, %v2098
      %v2100 = vpop.f32.mrb[0].mxu0
      %v2101 = vpop.f32.mrb[0].mxu0
      %v2102 = vadd.f32 %v1941, %v2101
      %v2103 = vpop.f32.mrb[0].mxu0
      %2104 = vmatprep.mubr.bf16.mxu0 0
      %2105 = vmatmul.mubr.bf16.gmra.mrb[0].mxu0 %v632
      %v2106 = vpop.f32.mrb[0].mxu0
      %v2107 = vadd.f32 %v1946, %v2106
      %v2108 = vpop.f32.mrb[0].mxu0
      %v2109 = vpop.f32.mrb[0].mxu0
      %v2110 = vadd.f32 %v1949, %v2109
      %v2111 = vpop.f32.mrb[0].mxu0
      %2112 = vmatprep.mubr.bf16.mxu0 0
      %2113 = vmatmul.mubr.bf16.gmra.mrb[0].mxu0 %v633
      %v2114 = vpop.f32.mrb[0].mxu0
      %v2115 = vadd.f32 %v1954, %v2114
      %v2116 = vpop.f32.mrb[0].mxu0
      %v2117 = vpop.f32.mrb[0].mxu0
      %v2118 = vadd.f32 %v1957, %v2117
      %v2119 = vpop.f32.mrb[0].mxu0
      %2120 = vmatprep.mubr.bf16.mxu0 0
      %2121 = vmatmul.mubr.bf16.gmra.mrb[0].mxu0 %v634
      %v2122 = vpop.f32.mrb[0].mxu0
      %v2123 = vadd.f32 %v1962, %v2122
      %v2124 = vpop.f32.mrb[0].mxu0
      %v2125 = vpop.f32.mrb[0].mxu0
      %v2126 = vadd.f32 %v1965, %v2125
      %v2127 = vpop.f32.mrb[0].mxu0
      %2128 = vmatprep.mubr.bf16.mxu0 0
      %2129 = vmatmul.mubr.bf16.gmra.mrb[0].mxu0 %v635
      %v2130 = vpop.f32.mrb[0].mxu0
      %v2131 = vadd.f32 %v1970, %v2130
      %v2132 = vpop.f32.mrb[0].mxu0
      %v2133 = vpop.f32.mrb[0].mxu0
      %v2134 = vadd.f32 %v1973, %v2133
      %v2135 = vpop.f32.mrb[0].mxu0
      %2136 = vmatprep.mubr.bf16.mxu0 0
      %2137 = vmatmul.mubr.bf16.gmra.mrb[0].mxu0 %v636
      %v2138 = vpop.f32.mrb[0].mxu0
      %v2139 = vadd.f32 %v1978, %v2138
      %v2140 = vpop.f32.mrb[0].mxu0
      %v2141 = vpop.f32.mrb[0].mxu0
      %v2142 = vadd.f32 %v1981, %v2141
      %v2143 = vpop.f32.mrb[0].mxu0
      %2144 = vmatprep.mubr.bf16.mxu0 0
      %2145 = vmatmul.mubr.bf16.gmra.mrb[0].mxu0 %v637
      %v2146 = vpop.f32.mrb[0].mxu0
      %v2147 = vadd.f32 %v1986, %v2146
      %v2148 = vpop.f32.mrb[0].mxu0
      %v2149 = vpop.f32.mrb[0].mxu0
      %v2150 = vadd.f32 %v1989, %v2149
      %v2151 = vpop.f32.mrb[0].mxu0
      %2152 = vmatprep.mubr.bf16.mxu0 0
      %2153 = vmatmul.mubr.bf16.gmra.mrb[0].mxu0 %v638
      %v2154 = vpop.f32.mrb[0].mxu0
      %v2155 = vadd.f32 %v1994, %v2154
      %v2156 = vpop.f32.mrb[0].mxu0
      %v2157 = vpop.f32.mrb[0].mxu0
      %v2158 = vadd.f32 %v1997, %v2157
      %v2159 = vpop.f32.mrb[0].mxu0
      %2160 = vmatprep.mubr.bf16.mxu0 0
      %2161 = vmatmul.mubr.bf16.gmra.mrb[0].mxu0 %v639
      %v2162 = vpop.f32.mrb[0].mxu0
      %v2163 = vadd.f32 %v2002, %v2162
      %v2164 = vpop.f32.mrb[0].mxu0
      %v2165 = vpop.f32.mrb[0].mxu0
      %v2166 = vadd.f32 %v2005, %v2165
      %v2167 = vpop.f32.mrb[0].mxu0
      %2168 = vmatprep.mubr.bf16.mxu0 0
      %2169 = vmatmul.mubr.bf16.gmra.mrb[0].mxu0 %v640
      %v2170 = vpop.f32.mrb[0].mxu0
      %v2171 = vadd.f32 %v2010, %v2170
      %v2172 = vpop.f32.mrb[0].mxu0
      %v2173 = vpop.f32.mrb[0].mxu0
      %v2174 = vadd.f32 %v2013, %v2173
      %v2175 = vpop.f32.mrb[0].mxu0
      %2176 = vmatprep.mubr.bf16.mxu0 0
      %2177 = vmatmul.mubr.bf16.gmra.mrb[0].mxu0 0
      %v2178 = vpop.f32.mrb[0].mxu0
      %v2179 = vadd.f32 %v2018, %v2178
      %v2180 = vpop.f32.mrb[0].mxu0
      %v2181 = vpop.f32.mrb[0].mxu0
      %v2182 = vadd.f32 %v2021, %v2181
      %v2183 = vpop.f32.mrb[0].mxu0
      %2184 = vdwg.mxu0
      %v2185 = vadd.f32 %v1544, %v2059
      %v2186 = vadd.f32 %v1547, %v2062
      %v2187 = vadd.f32 %v1552, %v2067
      %v2188 = vadd.f32 %v1555, %v2070
      %v2189 = vadd.f32 %v1560, %v2075
      %v2190 = vadd.f32 %v1563, %v2078
      %v2191 = vadd.f32 %v1568, %v2083
      %v2192 = vadd.f32 %v1571, %v2086
      %v2193 = vadd.f32 %v1576, %v2091
      %v2194 = vadd.f32 %v1579, %v2094
      %v2195 = vadd.f32 %v1584, %v2099
      %v2196 = vadd.f32 %v1587, %v2102
      %v2197 = vadd.f32 %v1592, %v2107
      %v2198 = vadd.f32 %v1595, %v2110
      %v2199 = vadd.f32 %v1600, %v2115
      %v2200 = vadd.f32 %v1603, %v2118
      %v2201 = vadd.f32 %v1608, %v2123
      %v2202 = vadd.f32 %v1611, %v2126
      %v2203 = vadd.f32 %v1616, %v2131
      %v2204 = vadd.f32 %v1619, %v2134
      %v2205 = vadd.f32 %v1624, %v2139
      %v2206 = vadd.f32 %v1627, %v2142
      %v2207 = vadd.f32 %v1632, %v2147
      %v2208 = vadd.f32 %v1635, %v2150
      %v2209 = vadd.f32 %v1640, %v2155
      %v2210 = vadd.f32 %v1643, %v2158
      %v2211 = vadd.f32 %v1648, %v2163
      %v2212 = vadd.f32 %v1651, %v2166
      %v2213 = vadd.f32 %v1656, %v2171
      %v2214 = vadd.f32 %v1659, %v2174
      %v2215 = vadd.f32 %v1664, %v2179
      %v2216 = vadd.f32 %v1667, %v2182
      %v2217 = vpack.c.bf16 %v2186, %v2185
      %v2218 = vpack.c.bf16 %v2188, %v2187
      %v2219 = vpack.c.bf16 %v2190, %v2189
      %v2220 = vpack.c.bf16 %v2192, %v2191
      %v2221 = vpack.c.bf16 %v2194, %v2193
      %v2222 = vpack.c.bf16 %v2196, %v2195
      %v2223 = vpack.c.bf16 %v2198, %v2197
      %v2224 = vpack.c.bf16 %v2200, %v2199
      %v2225 = vpack.c.bf16 %v2202, %v2201
      %v2226 = vpack.c.bf16 %v2204, %v2203
      %v2227 = vpack.c.bf16 %v2206, %v2205
      %v2228 = vpack.c.bf16 %v2208, %v2207
      %v2229 = vpack.c.bf16 %v2210, %v2209
      %v2230 = vpack.c.bf16 %v2212, %v2211
      %v2231 = vpack.c.bf16 %v2214, %v2213
      %v2232 = vpack.c.bf16 %v2216, %v2215
      %v2249 = vunpack.c.l.b16 %v2217
      %v2250 = vunpack.c.h.b16 %v2217
      %v2251 = vunpack.c.l.b16 %v2218
      %v2252 = vunpack.c.h.b16 %v2218
      %v2253 = vunpack.c.l.b16 %v2219
      %v2254 = vunpack.c.h.b16 %v2219
      %v2255 = vunpack.c.l.b16 %v2220
      %v2256 = vunpack.c.h.b16 %v2220
      %v2257 = vunpack.c.l.b16 %v2221
      %v2258 = vunpack.c.h.b16 %v2221
      %v2259 = vunpack.c.l.b16 %v2222
      %v2260 = vunpack.c.h.b16 %v2222
      %v2261 = vunpack.c.l.b16 %v2223
      %v2262 = vunpack.c.h.b16 %v2223
      %v2263 = vunpack.c.l.b16 %v2224
      %v2264 = vunpack.c.h.b16 %v2224
      %v2265 = vunpack.c.l.b16 %v2225
      %v2266 = vunpack.c.h.b16 %v2225
      %v2267 = vunpack.c.l.b16 %v2226
      %v2268 = vunpack.c.h.b16 %v2226
      %v2269 = vunpack.c.l.b16 %v2227
      %v2270 = vunpack.c.h.b16 %v2227
      %v2271 = vunpack.c.l.b16 %v2228
      %v2272 = vunpack.c.h.b16 %v2228
      %v2273 = vunpack.c.l.b16 %v2229
      %v2274 = vunpack.c.h.b16 %v2229
      %v2275 = vunpack.c.l.b16 %v2230
      %v2276 = vunpack.c.h.b16 %v2230
      %v2277 = vunpack.c.l.b16 %v2231
      %v2278 = vunpack.c.h.b16 %v2231
      %v2279 = vunpack.c.l.b16 %v2232
      %v2280 = vunpack.c.h.b16 %v2232
      %v2281 = vpack.c.b16 %v2249, %v2249
      %v2282 = vpack.c.b16 %v2250, %v2250
      %v2283 = vpack.c.b16 %v2251, %v2251
      %v2284 = vpack.c.b16 %v2252, %v2252
      %v2285 = vpack.c.b16 %v2253, %v2253
      %v2286 = vpack.c.b16 %v2254, %v2254
      %v2287 = vpack.c.b16 %v2255, %v2255
      %v2288 = vpack.c.b16 %v2256, %v2256
      %v2289 = vpack.c.b16 %v2257, %v2257
      %v2290 = vpack.c.b16 %v2258, %v2258
      %v2291 = vpack.c.b16 %v2259, %v2259
      %v2292 = vpack.c.b16 %v2260, %v2260
      %v2293 = vpack.c.b16 %v2261, %v2261
      %v2294 = vpack.c.b16 %v2262, %v2262
      %v2295 = vpack.c.b16 %v2263, %v2263
      %v2296 = vpack.c.b16 %v2264, %v2264
      %v2297 = vpack.c.b16 %v2265, %v2265
      %v2298 = vpack.c.b16 %v2266, %v2266
      %v2299 = vpack.c.b16 %v2267, %v2267
      %v2300 = vpack.c.b16 %v2268, %v2268
      %v2301 = vpack.c.b16 %v2269, %v2269
      %v2302 = vpack.c.b16 %v2270, %v2270
      %v2303 = vpack.c.b16 %v2271, %v2271
      %v2304 = vpack.c.b16 %v2272, %v2272
      %v2305 = vpack.c.b16 %v2273, %v2273
      %v2306 = vpack.c.b16 %v2274, %v2274
      %v2307 = vpack.c.b16 %v2275, %v2275
      %v2308 = vpack.c.b16 %v2276, %v2276
      %v2309 = vpack.c.b16 %v2277, %v2277
      %v2310 = vpack.c.b16 %v2278, %v2278
      %v2311 = vpack.c.b16 %v2279, %v2279
      %v2312 = vpack.c.b16 %v2280, %v2280
      %2345 = vst [vmem:[%s231] sm:$0xf] %v2281
      %2346 = vst [vmem:[%s231 + $0x4] sm:$0xf] %v2282
      %2347 = vst [vmem:[%s231 + $0x8] sm:$0xf] %v2283
      %2348 = vst [vmem:[%s231 + $0xc] sm:$0xf] %v2284
      %2349 = vst [vmem:[%s231 + $0x10] sm:$0xf] %v2285
      %2350 = vst [vmem:[%s231 + $0x14] sm:$0xf] %v2286
      %2351 = vst [vmem:[%s231 + $0x18] sm:$0xf] %v2287
      %2352 = vst [vmem:[%s231 + $0x1c] sm:$0xf] %v2288
      %2353 = vst [vmem:[%s231 + $0x20] sm:$0xf] %v2289
      %2354 = vst [vmem:[%s231 + $0x24] sm:$0xf] %v2290
      %2355 = vst [vmem:[%s231 + $0x28] sm:$0xf] %v2291
      %2356 = vst [vmem:[%s231 + $0x2c] sm:$0xf] %v2292
      %2357 = vst [vmem:[%s231 + $0x30] sm:$0xf] %v2293
      %2358 = vst [vmem:[%s231 + $0x34] sm:$0xf] %v2294
      %2359 = vst [vmem:[%s231 + $0x38] sm:$0xf] %v2295
      %2360 = vst [vmem:[%s231 + $0x3c] sm:$0xf] %v2296
      %2361 = vst [vmem:[%s231 + $0x40] sm:$0xf] %v2297
      %2362 = vst [vmem:[%s231 + $0x44] sm:$0xf] %v2298
      %2363 = vst [vmem:[%s231 + $0x48] sm:$0xf] %v2299
      %2364 = vst [vmem:[%s231 + $0x4c] sm:$0xf] %v2300
      %2365 = vst [vmem:[%s231 + $0x50] sm:$0xf] %v2301
      %2366 = vst [vmem:[%s231 + $0x54] sm:$0xf] %v2302
      %2367 = vst [vmem:[%s231 + $0x58] sm:$0xf] %v2303
      %2368 = vst [vmem:[%s231 + $0x5c] sm:$0xf] %v2304
      %2369 = vst [vmem:[%s231 + $0x60] sm:$0xf] %v2305
      %2370 = vst [vmem:[%s231 + $0x64] sm:$0xf] %v2306
      %2371 = vst [vmem:[%s231 + $0x68] sm:$0xf] %v2307
      %2372 = vst [vmem:[%s231 + $0x6c] sm:$0xf] %v2308
      %2373 = vst [vmem:[%s231 + $0x70] sm:$0xf] %v2309
      %2374 = vst [vmem:[%s231 + $0x74] sm:$0xf] %v2310
      %2375 = vst [vmem:[%s231 + $0x78] sm:$0xf] %v2311
      %2376 = vst [vmem:[%s231 + $0x7c] sm:$0xf] %v2312
      %v2377 = vadd.f32 %v2185, %v2186
      %v2378 = vadd.f32 %v2377, %v2187
      %v2379 = vadd.f32 %v2378, %v2188
      %v2380 = vadd.f32 %v2379, %v2189
      %v2381 = vadd.f32 %v2380, %v2190
      %v2382 = vadd.f32 %v2381, %v2191
      %v2383 = vadd.f32 %v2382, %v2192
      %v2384 = vadd.f32 %v2383, %v2193
      %v2385 = vadd.f32 %v2384, %v2194
      %v2386 = vadd.f32 %v2385, %v2195
      %v2387 = vadd.f32 %v2386, %v2196
      %v2388 = vadd.f32 %v2387, %v2197
      %v2389 = vadd.f32 %v2388, %v2198
      %v2390 = vadd.f32 %v2389, %v2199
      %v2391 = vadd.f32 %v2390, %v2200
      %v2392 = vadd.f32 %v2391, %v2201
      %v2393 = vadd.f32 %v2392, %v2202
      %v2394 = vadd.f32 %v2393, %v2203
      %v2395 = vadd.f32 %v2394, %v2204
      %v2396 = vadd.f32 %v2395, %v2205
      %v2397 = vadd.f32 %v2396, %v2206
      %v2398 = vadd.f32 %v2397, %v2207
      %v2399 = vadd.f32 %v2398, %v2208
      %v2400 = vadd.f32 %v2399, %v2209
      %v2401 = vadd.f32 %v2400, %v2210
      %v2402 = vadd.f32 %v2401, %v2211
      %v2403 = vadd.f32 %v2402, %v2212
      %v2404 = vadd.f32 %v2403, %v2213
      %v2405 = vadd.f32 %v2404, %v2214
      %v2406 = vadd.f32 %v2405, %v2215
      %v2407 = vadd.f32 %v2406, %v2216
      %v2408 = vrot.slane %v2407, 4
      %v2409 = vadd.f32 %v2407, %v2408
      %v2410 = vrot.slane %v2409, 2
      %v2411 = vadd.f32 %v2409, %v2410
      %v2412 = vrot.slane %v2411, 1
      %v2413 = vadd.f32 %v2411, %v2412
      %v2414 = vmul.f32 %v2185, %v2185
      %v2415 = vmul.f32 %v2186, %v2186
      %v2416 = vmul.f32 %v2187, %v2187
      %v2417 = vmul.f32 %v2188, %v2188
      %v2418 = vmul.f32 %v2189, %v2189
      %v2419 = vmul.f32 %v2190, %v2190
      %v2420 = vmul.f32 %v2191, %v2191
      %v2421 = vmul.f32 %v2192, %v2192
      %v2422 = vmul.f32 %v2193, %v2193
      %v2423 = vmul.f32 %v2194, %v2194
      %v2424 = vmul.f32 %v2195, %v2195
      %v2425 = vmul.f32 %v2196, %v2196
      %v2426 = vmul.f32 %v2197, %v2197
      %v2427 = vmul.f32 %v2198, %v2198
      %v2428 = vmul.f32 %v2199, %v2199
      %v2429 = vmul.f32 %v2200, %v2200
      %v2430 = vmul.f32 %v2201, %v2201
      %v2431 = vmul.f32 %v2202, %v2202
      %v2432 = vmul.f32 %v2203, %v2203
      %v2433 = vmul.f32 %v2204, %v2204
      %v2434 = vmul.f32 %v2205, %v2205
      %v2435 = vmul.f32 %v2206, %v2206
      %v2436 = vmul.f32 %v2207, %v2207
      %v2437 = vmul.f32 %v2208, %v2208
      %v2438 = vmul.f32 %v2209, %v2209
      %v2439 = vmul.f32 %v2210, %v2210
      %v2440 = vmul.f32 %v2211, %v2211
      %v2441 = vmul.f32 %v2212, %v2212
      %v2442 = vmul.f32 %v2213, %v2213
      %v2443 = vmul.f32 %v2214, %v2214
      %v2444 = vmul.f32 %v2215, %v2215
      %v2445 = vmul.f32 %v2216, %v2216
      %v2446 = vadd.f32 %v2414, %v2415
      %v2447 = vadd.f32 %v2446, %v2416
      %v2448 = vadd.f32 %v2447, %v2417
      %v2449 = vadd.f32 %v2448, %v2418
      %v2450 = vadd.f32 %v2449, %v2419
      %v2451 = vadd.f32 %v2450, %v2420
      %v2452 = vadd.f32 %v2451, %v2421
      %v2453 = vadd.f32 %v2452, %v2422
      %v2454 = vadd.f32 %v2453, %v2423
      %v2455 = vadd.f32 %v2454, %v2424
      %v2456 = vadd.f32 %v2455, %v2425
      %v2457 = vadd.f32 %v2456, %v2426
      %v2458 = vadd.f32 %v2457, %v2427
      %v2459 = vadd.f32 %v2458, %v2428
      %v2460 = vadd.f32 %v2459, %v2429
      %v2461 = vadd.f32 %v2460, %v2430
      %v2462 = vadd.f32 %v2461, %v2431
      %v2463 = vadd.f32 %v2462, %v2432
      %v2464 = vadd.f32 %v2463, %v2433
      %v2465 = vadd.f32 %v2464, %v2434
      %v2466 = vadd.f32 %v2465, %v2435
      %v2467 = vadd.f32 %v2466, %v2436
      %v2468 = vadd.f32 %v2467, %v2437
      %v2469 = vadd.f32 %v2468, %v2438
      %v2470 = vadd.f32 %v2469, %v2439
      %v2471 = vadd.f32 %v2470, %v2440
      %v2472 = vadd.f32 %v2471, %v2441
      %v2473 = vadd.f32 %v2472, %v2442
      %v2474 = vadd.f32 %v2473, %v2443
      %v2475 = vadd.f32 %v2474, %v2444
      %v2476 = vadd.f32 %v2475, %v2445
      %v2477 = vrot.slane %v2476, 4
      %v2478 = vadd.f32 %v2476, %v2477
      %v2479 = vrot.slane %v2478, 2
      %v2480 = vadd.f32 %v2478, %v2479
      %v2481 = vrot.slane %v2480, 1
      %v2482 = vadd.f32 %v2480, %v2481
      %vm2483 = vcmask 1040384
      %v2484 = vsel %vm2483, %v2413, %v2482
      %2485 = vst [vmem:[%s235] sm:$0x3] %v2484
      %p2486 = scmp.lt.s32.totalorder %s17, 1
      %s2487 = scalar_select %p2486, %s17, 1
      %s2488 = smul.addr %s2487, 32
      %s2489 = smul.addr %s2488, 4
      %s2490 = scalar_lea.vmem %s4, %s2489
      %p2491 = scmp.lt.s32.totalorder %s17, 1
      %s2492 = scalar_select %p2491, %s17, 1
      %s2493 = smul.addr %s2492, 2
      %s2494 = scalar_lea.vmem %s5, %s2493
      // Predicated region
      $region37: #{first_res_block.4} parent=35 // pred_check
        %p2495 = pneg %p124
      $region38: #{first_res_block.4} parent=35 // pred_check_branch
        %2497 = sbr.rel (%p2495) target = $region40
      $region39: #{first_res_block.4} parent=35 // pred_region
        _
      $region40: #{first_res_block.4} parent=35 // pred_fallthru
        _
      // Predicated region
      $region41: #{first_res_block.4} parent=35 // pred_check
        %p2498 = pneg %p150
      $region42: #{first_res_block.4} parent=35 // pred_check_branch
        %2500 = sbr.rel (%p2498) target = $region44
      $region43: #{first_res_block.4} parent=35 // pred_region
        _
      $region44: #{first_res_block.4} parent=35 // pred_fallthru
        _
    $region36: #{first_res_block.4} parent=5 // pred_fallthru
      _
    %p2501 = scmp.le.s32.totalorder 2, %s12
    // Predicated region
    $region45: #{first_res_block.4} parent=5 // pred_check
      %p2502 = pneg %p2501
    $region46: #{first_res_block.4} parent=5 // pred_check_branch
      %2504 = sbr.rel (%p2502) target = $region48
    $region47: #{first_res_block.4} parent=5 // pred_region
      %s2505 = ssub.s32 %s12, 2
      // Predicated region
      $region49: #{first_res_block.4} parent=47 // pred_check
        %p2506 = pneg %p130
      $region50: #{first_res_block.4} parent=47 // pred_check_branch
        %2508 = sbr.rel (%p2506) target = $region52
      $region51: #{first_res_block.4} parent=47 // pred_region
        %p2509 = scmp.lt.s32.totalorder %s18, 1
        %s2510 = scalar_select %p2509, %s18, 1
        %s2511 = smul.addr %s2510, 32
        %s2512 = smul.addr %s2511, 4
        %s2513 = scalar_lea.vmem %s4, %s2512
      $region52: #{first_res_block.4} parent=47 // pred_fallthru
        _
      // Predicated region
      $region53: #{first_res_block.4} parent=47 // pred_check
        %p2514 = pneg %p156
      $region54: #{first_res_block.4} parent=47 // pred_check_branch
        %2516 = sbr.rel (%p2514) target = $region56
      $region55: #{first_res_block.4} parent=47 // pred_region
        %p2517 = scmp.lt.s32.totalorder %s18, 1
        %s2518 = scalar_select %p2517, %s18, 1
        %s2519 = smul.addr %s2518, 2
        %s2520 = scalar_lea.vmem %s5, %s2519
      $region56: #{first_res_block.4} parent=47 // pred_fallthru
        _
    $region48: #{first_res_block.4} parent=5 // pred_fallthru
      _
  $region6: #{first_res_block.4} parent=0 // loop_footer
    %s16 = sadd.s32 1, %s12
  $region7: #{first_res_block.4} parent=0 // loop_footer_branch
    %11 = sbr.rel target = $region3
  $region8: #{first_res_block.4} parent=0 // loop_exit
    _

</llo_original>
